<compile_context>
chip_gen: v6e
topology: v6e:2x2x1
jax: 0.10.0
libtpu: 0.0.40
codegen_flags: <defaults>
</compile_context>

<pallas_src>
import functools

import numpy as np
import jax
import jax.numpy as jnp
from jax.experimental import pallas as pl
from jax.experimental.pallas import tpu as pltpu

KSIZE = 6     # Conv2d(kernel_size=6, stride=3, padding=0) for all 4 layers
STRIDE = 3


# ---------------------------------------------------------------------------
# Pallas kernels
# ---------------------------------------------------------------------------
def _gemm_bias_relu_kernel(p_ref, w_ref, b_ref, o_ref):
    """out[Cout, M] = relu(W[Cout, K] @ P[K, M] + b[Cout, 1]); M is lane-dense."""
    acc = jnp.dot(w_ref[...], p_ref[...], preferred_element_type=jnp.float32)
    acc = acc + b_ref[...]                      # (Cout, 1) broadcasts over lanes
    o_ref[...] = jnp.maximum(acc, 0.0).astype(o_ref.dtype)


def _conv3_conv4_kernel(p_ref, w3_ref, b3_ref, w4_ref, b4_ref, o_ref, *, scale):
    """Fused layers 3+4: relu(conv3) stays in VMEM; conv4 is a full-frame dot."""
    g3 = jnp.dot(w3_ref[...], p_ref[...], preferred_element_type=jnp.float32)
    g3 = jnp.maximum(g3 + b3_ref[...], 0.0)          # (Cout3, 6*6) = (2, 36)
    # The single layer-4 patch is the whole (Cout3, 6, 6) layer-3 activation,
    # already in (c, kh*6+kw) order == g3's (row, column) order.
    z4 = jnp.sum(w4_ref[...] * g3, keepdims=True) + b4_ref[...]   # (1, 1)
    o_ref[...] = (jax.nn.sigmoid(z4) * scale).astype(o_ref.dtype)


# ---------------------------------------------------------------------------
# XLA-side glue: NCHW im2col producing (N, K, OH*OW), K ordered (c, kh, kw)
# ---------------------------------------------------------------------------
def _im2col_nck(x_nchw, k, s):
    n, c, h, w = x_nchw.shape
    oh = (h - k) // s + 1
    ow = (w - k) // s + 1
    cols = []
    for kh in range(k):
        for kw in range(k):
            sl = jax.lax.slice(
                x_nchw,
                (0, 0, kh, kw),
                (n, c, kh + s * (oh - 1) + 1, kw + s * (ow - 1) + 1),
                (1, 1, s, s))                    # (N, C, OH, OW)
            cols.append(sl)
    patches = jnp.stack(cols, axis=2)            # (N, C, k*k, OH, OW)
    return patches.reshape(n, c * k * k, oh * ow), (oh, ow)


# ---------------------------------------------------------------------------
# Layer wrappers
# ---------------------------------------------------------------------------
def _conv_relu(x_nchw, weight, bias):
    """One Conv2d(k=6, s=3) + ReLU as a lane-dense transposed GEMM."""
    cout, cin, k, _ = weight.shape
    patches, (oh, ow) = _im2col_nck(x_nchw, k, STRIDE)
    n, K, M = patches.shape
    w_mat = weight.reshape(cout, K)              # (c, kh, kw) order matches patches
    b_col = bias.reshape(cout, 1)

    out = pl.pallas_call(
        _gemm_bias_relu_kernel,
        out_shape=jax.ShapeDtypeStruct((n, cout, M), jnp.float32),
        grid=(n,),
        in_specs=[
            pl.BlockSpec((None, K, M), lambda i: (i, 0, 0)),   # per-batch patches
            pl.BlockSpec((cout, K), lambda i: (0, 0)),         # full weight matrix
            pl.BlockSpec((cout, 1), lambda i: (0, 0)),         # bias column
        ],
        out_specs=pl.BlockSpec((None, cout, M), lambda i: (i, 0, 0)),
        compiler_params=pltpu.CompilerParams(
            dimension_semantics=("parallel",)),
    )(patches, w_mat, b_col)
    return out.reshape(n, cout, oh, ow)


def _conv34_fused(x_nchw, w3, b3, w4, b4, scale):
    """relu(conv3(x)) then sigmoid(conv4(.)) * scale, fused in one kernel."""
    cout3, cin3, k, _ = w3.shape
    cout4, cin4 = w4.shape[0], w4.shape[1]
    patches, (oh3, ow3) = _im2col_nck(x_nchw, k, STRIDE)
    n, K3, M3 = patches.shape
    # Canonical EV_Imgs geometry: conv3 output is exactly 6x6, so conv4 has a
    # single output position whose patch is the whole conv3 activation.
    assert cout4 == 1 and cin4 == cout3 and (oh3, ow3) == (KSIZE, KSIZE)
    w3_mat = w3.reshape(cout3, K3)
    w4_mat = w4.reshape(cin4, KSIZE * KSIZE)     # rows=c, cols=kh*6+kw

    out = pl.pallas_call(
        functools.partial(_conv3_conv4_kernel, scale=scale),
        out_shape=jax.ShapeDtypeStruct((n, 1, 1), jnp.float32),
        grid=(n,),
        in_specs=[
            pl.BlockSpec((None, K3, M3), lambda i: (i, 0, 0)),
            pl.BlockSpec((cout3, K3), lambda i: (0, 0)),
            pl.BlockSpec((cout3, 1), lambda i: (0, 0)),
            pl.BlockSpec((cin4, M3), lambda i: (0, 0)),
            pl.BlockSpec((1, 1), lambda i: (0, 0)),
        ],
        out_specs=pl.BlockSpec((None, 1, 1), lambda i: (i, 0, 0)),
        compiler_params=pltpu.CompilerParams(
            dimension_semantics=("parallel",)),
    )(patches, w3_mat, b3.reshape(cout3, 1), w4_mat, b4.reshape(1, 1))
    return out.reshape(n, 1, 1, 1)


def ev_imgs_forward(x_nchw, params):
    """EV_Imgs.forward: sigmoid(c4(relu(c3(relu(c2(relu(c1(x)))))))) * 400000."""
    (w1, b1), (w2, b2), (w3, b3), (w4, b4) = params
    h = _conv_relu(x_nchw, w1, b1)
    h = _conv_relu(h, w2, b2)
    # TODO(synk): fusing all 4 layers into one pallas_call needs an in-kernel
    # stride-3 (lane-strided) im2col gather, which has no clean Pallas lowering;
    # layers 3+4 are fused instead and layer-2/3 glue data is tiny (<1 MB).
    return _conv34_fused(h, w3, b3, w4, b4, 400000.0)


# ---------------------------------------------------------------------------
# Deterministic parameter init (PyTorch Conv2d default: U(-1/sqrt(fan_in), .))
# ---------------------------------------------------------------------------
def init_conv_params(key, cin, cout, k):
    fan_in = cin * k * k
    bound = 1.0 / float(np.sqrt(fan_in))
    kw_, kb = jax.random.split(key)
    w = jax.random.uniform(kw_, (cout, cin, k, k), jnp.float32, -bound, bound)
    b = jax.random.uniform(kb, (cout,), jnp.float32, -bound, bound)
    return w, b


# ---------------------------------------------------------------------------
# Pure-JAX reference (correctness check only)
# ---------------------------------------------------------------------------
def reference_forward(x_nchw, params):
    def conv(x, w, b):
        y = jax.lax.conv_general_dilated(
            x, w, window_strides=(STRIDE, STRIDE), padding="VALID",
            dimension_numbers=("NCHW", "OIHW", "NCHW"))
        return y + b.reshape(1, -1, 1, 1)

    (w1, b1), (w2, b2), (w3, b3), (w4, b4) = params
    h = jax.nn.relu(conv(x_nchw, w1, b1))
    h = jax.nn.relu(conv(h, w2, b2))
    h = jax.nn.relu(conv(h, w3, b3))
    return jax.nn.sigmoid(conv(h, w4, b4)) * 400000.0


if __name__ == "__main__":
    num_imgs = 4           # EV_Imgs(num_imgs=4), small channel count
    batch = 2
    spatial = 201          # 201 -> 66 -> 21 -> 6 -> 1 through the 4 stride-3 convs

    key = jax.random.PRNGKey(0)
    k_x, k1, k2, k3, k4 = jax.random.split(key, 5)
    x = jax.random.normal(k_x, (batch, num_imgs, spatial, spatial), jnp.float32)

    params = [
        init_conv_params(k1, num_imgs, 8, KSIZE),
        init_conv_params(k2, 8, 4, KSIZE),
        init_conv_params(k3, 4, 2, KSIZE),
        init_conv_params(k4, 2, 1, KSIZE),
    ]

    out = jax.jit(ev_imgs_forward)(x, params)
    out = jax.block_until_ready(out)
    assert out.shape == (batch, 1, 1, 1), out.shape

    ref = reference_forward(x, params)
    np.testing.assert_allclose(np.asarray(out), np.asarray(ref),
                               rtol=1e-4, atol=1.0)
    print("KERNEL_OK")
</pallas_src>

<mosaic_0001>
module attributes {stable_mosaic.version = 11 : i64} {
  func.func @_gemm_bias_relu_kernel(%arg0: i32, %arg1: memref<1x144x4356xf32, #tpu.memory_space<vmem>>, %arg2: memref<8x144xf32, #tpu.memory_space<vmem>>, %arg3: memref<8x1xf32, #tpu.memory_space<vmem>>, %arg4: memref<1x8x4356xf32, #tpu.memory_space<vmem>>) attributes {dimension_semantics = [#tpu.dimension_semantics<parallel>], iteration_bounds = array<i64: 2>, scalar_prefetch = 0 : i64, scratch_operands = 0 : i64, tpu.core_type = #tpu.core_type<tc>, window_params = [{transform_indices = @transform_0, window_bounds = array<i64: 1, 144, 4356>}, {pipeline_mode = #tpu.pipeline_mode<synchronous>, transform_indices = @transform_1, window_bounds = array<i64: 8, 144>}, {pipeline_mode = #tpu.pipeline_mode<synchronous>, transform_indices = @transform_2, window_bounds = array<i64: 8, 1>}, {transform_indices = @transform_3, window_bounds = array<i64: 1, 8, 4356>}]} {
    %c0 = arith.constant 0 : index
    %c0_0 = arith.constant 0 : index
    %0 = vector.load %arg2[%c0, %c0_0] : memref<8x144xf32, #tpu.memory_space<vmem>>, vector<8x144xf32>
    %c0_1 = arith.constant 0 : index
    %c0_2 = arith.constant 0 : index
    %c0_3 = arith.constant 0 : index
    %1 = vector.load %arg1[%c0_1, %c0_2, %c0_3] : memref<1x144x4356xf32, #tpu.memory_space<vmem>>, vector<1x144x4356xf32>
    %2 = vector.shape_cast %1 : vector<1x144x4356xf32> to vector<144x4356xf32>
    %cst = arith.constant dense<0.000000e+00> : vector<8x4356xf32>
    %3 = tpu.matmul %0, %2, %cst {dimension_numbers = #tpu.dot_dimension_numbers<[1], [0], [0], [1], [0, 0, 1, 1], [], []>} : vector<8x144xf32>, vector<144x4356xf32>, vector<8x4356xf32> -> vector<8x4356xf32>
    %c0_4 = arith.constant 0 : index
    %c0_5 = arith.constant 0 : index
    %4 = vector.load %arg3[%c0_4, %c0_5] : memref<8x1xf32, #tpu.memory_space<vmem>>, vector<8x1xf32>
    %5 = vector.broadcast %4 : vector<8x1xf32> to vector<8x4356xf32>
    %6 = arith.addf %3, %5 : vector<8x4356xf32>
    %cst_6 = arith.constant 0.000000e+00 : f32
    %7 = vector.broadcast %cst_6 : f32 to vector<8x4356xf32>
    %8 = arith.maximumf %6, %7 : vector<8x4356xf32>
    %c0_7 = arith.constant 0 : index
    %c0_8 = arith.constant 0 : index
    %c0_9 = arith.constant 0 : index
    %9 = vector.load %arg4[%c0_7, %c0_8, %c0_9] : memref<1x8x4356xf32, #tpu.memory_space<vmem>>, vector<1x8x4356xf32>
    %10 = vector.shape_cast %9 : vector<1x8x4356xf32> to vector<8x4356xf32>
    %11 = vector.shape_cast %8 : vector<8x4356xf32> to vector<1x8x4356xf32>
    tpu.vector_store %arg4[%c0_7, %c0_8, %c0_9], %11 {strides = array<i32>} : memref<1x8x4356xf32, #tpu.memory_space<vmem>>, vector<1x8x4356xf32>,
    return
  }
  func.func @transform_0(%arg0: i32) -> (i32, i32, i32) {
    %c0_i32 = arith.constant 0 : i32
    %c0_i32_0 = arith.constant 0 : i32
    %c0_i32_1 = arith.constant 0 : i32
    return %arg0, %c0_i32, %c0_i32_0 : i32, i32, i32
  }
  func.func @transform_1(%arg0: i32) -> (i32, i32) {
    %c0_i32 = arith.constant 0 : i32
    %c0_i32_0 = arith.constant 0 : i32
    %c0_i32_1 = arith.constant 0 : i32
    return %c0_i32, %c0_i32_0 : i32, i32
  }
  func.func @transform_2(%arg0: i32) -> (i32, i32) {
    %c0_i32 = arith.constant 0 : i32
    %c0_i32_0 = arith.constant 0 : i32
    %c0_i32_1 = arith.constant 0 : i32
    return %c0_i32, %c0_i32_0 : i32, i32
  }
  func.func @transform_3(%arg0: i32) -> (i32, i32, i32) {
    %c0_i32 = arith.constant 0 : i32
    %c0_i32_0 = arith.constant 0 : i32
    %c0_i32_1 = arith.constant 0 : i32
    return %arg0, %c0_i32, %c0_i32_0 : i32, i32, i32
  }
}

module attributes {stable_mosaic.version = 11 : i64} {
  func.func @_gemm_bias_relu_kernel(%arg0: i32, %arg1: memref<1x288x441xf32, #tpu.memory_space<vmem>>, %arg2: memref<4x288xf32, #tpu.memory_space<vmem>>, %arg3: memref<4x1xf32, #tpu.memory_space<vmem>>, %arg4: memref<1x4x441xf32, #tpu.memory_space<vmem>>) attributes {dimension_semantics = [#tpu.dimension_semantics<parallel>], iteration_bounds = array<i64: 2>, scalar_prefetch = 0 : i64, scratch_operands = 0 : i64, tpu.core_type = #tpu.core_type<tc>, window_params = [{transform_indices = @transform_0, window_bounds = array<i64: 1, 288, 441>}, {pipeline_mode = #tpu.pipeline_mode<synchronous>, transform_indices = @transform_1, window_bounds = array<i64: 4, 288>}, {pipeline_mode = #tpu.pipeline_mode<synchronous>, transform_indices = @transform_2, window_bounds = array<i64: 4, 1>}, {transform_indices = @transform_3, window_bounds = array<i64: 1, 4, 441>}]} {
    %c0 = arith.constant 0 : index
    %c0_0 = arith.constant 0 : index
    %0 = vector.load %arg2[%c0, %c0_0] : memref<4x288xf32, #tpu.memory_space<vmem>>, vector<4x288xf32>
    %c0_1 = arith.constant 0 : index
    %c0_2 = arith.constant 0 : index
    %c0_3 = arith.constant 0 : index
    %1 = vector.load %arg1[%c0_1, %c0_2, %c0_3] : memref<1x288x441xf32, #tpu.memory_space<vmem>>, vector<1x288x441xf32>
    %2 = vector.shape_cast %1 : vector<1x288x441xf32> to vector<288x441xf32>
    %cst = arith.constant dense<0.000000e+00> : vector<4x441xf32>
    %3 = tpu.matmul %0, %2, %cst {dimension_numbers = #tpu.dot_dimension_numbers<[1], [0], [0], [1], [0, 0, 1, 1], [], []>} : vector<4x288xf32>, vector<288x441xf32>, vector<4x441xf32> -> vector<4x441xf32>
    %c0_4 = arith.constant 0 : index
    %c0_5 = arith.constant 0 : index
    %4 = vector.load %arg3[%c0_4, %c0_5] : memref<4x1xf32, #tpu.memory_space<vmem>>, vector<4x1xf32>
    %5 = vector.broadcast %4 : vector<4x1xf32> to vector<4x441xf32>
    %6 = arith.addf %3, %5 : vector<4x441xf32>
    %cst_6 = arith.constant 0.000000e+00 : f32
    %7 = vector.broadcast %cst_6 : f32 to vector<4x441xf32>
    %8 = arith.maximumf %6, %7 : vector<4x441xf32>
    %c0_7 = arith.constant 0 : index
    %c0_8 = arith.constant 0 : index
    %c0_9 = arith.constant 0 : index
    %9 = vector.load %arg4[%c0_7, %c0_8, %c0_9] : memref<1x4x441xf32, #tpu.memory_space<vmem>>, vector<1x4x441xf32>
    %10 = vector.shape_cast %9 : vector<1x4x441xf32> to vector<4x441xf32>
    %11 = vector.shape_cast %8 : vector<4x441xf32> to vector<1x4x441xf32>
    tpu.vector_store %arg4[%c0_7, %c0_8, %c0_9], %11 {strides = array<i32>} : memref<1x4x441xf32, #tpu.memory_space<vmem>>, vector<1x4x441xf32>,
    return
  }
  func.func @transform_0(%arg0: i32) -> (i32, i32, i32) {
    %c0_i32 = arith.constant 0 : i32
    %c0_i32_0 = arith.constant 0 : i32
    %c0_i32_1 = arith.constant 0 : i32
    return %arg0, %c0_i32, %c0_i32_0 : i32, i32, i32
  }
  func.func @transform_1(%arg0: i32) -> (i32, i32) {
    %c0_i32 = arith.constant 0 : i32
    %c0_i32_0 = arith.constant 0 : i32
    %c0_i32_1 = arith.constant 0 : i32
    return %c0_i32, %c0_i32_0 : i32, i32
  }
  func.func @transform_2(%arg0: i32) -> (i32, i32) {
    %c0_i32 = arith.constant 0 : i32
    %c0_i32_0 = arith.constant 0 : i32
    %c0_i32_1 = arith.constant 0 : i32
    return %c0_i32, %c0_i32_0 : i32, i32
  }
  func.func @transform_3(%arg0: i32) -> (i32, i32, i32) {
    %c0_i32 = arith.constant 0 : i32
    %c0_i32_0 = arith.constant 0 : i32
    %c0_i32_1 = arith.constant 0 : i32
    return %arg0, %c0_i32, %c0_i32_0 : i32, i32, i32
  }
}

module attributes {stable_mosaic.version = 11 : i64} {
  func.func @_conv3_conv4_kernel(%arg0: i32, %arg1: memref<1x144x36xf32, #tpu.memory_space<vmem>>, %arg2: memref<2x144xf32, #tpu.memory_space<vmem>>, %arg3: memref<2x1xf32, #tpu.memory_space<vmem>>, %arg4: memref<2x36xf32, #tpu.memory_space<vmem>>, %arg5: memref<1x1xf32, #tpu.memory_space<vmem>>, %arg6: memref<1x1x1xf32, #tpu.memory_space<vmem>>) attributes {dimension_semantics = [#tpu.dimension_semantics<parallel>], iteration_bounds = array<i64: 2>, scalar_prefetch = 0 : i64, scratch_operands = 0 : i64, tpu.core_type = #tpu.core_type<tc>, window_params = [{transform_indices = @transform_0, window_bounds = array<i64: 1, 144, 36>}, {pipeline_mode = #tpu.pipeline_mode<synchronous>, transform_indices = @transform_1, window_bounds = array<i64: 2, 144>}, {pipeline_mode = #tpu.pipeline_mode<synchronous>, transform_indices = @transform_2, window_bounds = array<i64: 2, 1>}, {pipeline_mode = #tpu.pipeline_mode<synchronous>, transform_indices = @transform_3, window_bounds = array<i64: 2, 36>}, {pipeline_mode = #tpu.pipeline_mode<synchronous>, transform_indices = @transform_4, window_bounds = array<i64: 1, 1>}, {transform_indices = @transform_5, window_bounds = array<i64: 1, 1, 1>}]} {
    %c0 = arith.constant 0 : index
    %c0_0 = arith.constant 0 : index
    %0 = vector.load %arg2[%c0, %c0_0] : memref<2x144xf32, #tpu.memory_space<vmem>>, vector<2x144xf32>
    %c0_1 = arith.constant 0 : index
    %c0_2 = arith.constant 0 : index
    %c0_3 = arith.constant 0 : index
    %1 = vector.load %arg1[%c0_1, %c0_2, %c0_3] : memref<1x144x36xf32, #tpu.memory_space<vmem>>, vector<1x144x36xf32>
    %2 = vector.shape_cast %1 : vector<1x144x36xf32> to vector<144x36xf32>
    %cst = arith.constant dense<0.000000e+00> : vector<2x36xf32>
    %3 = tpu.matmul %0, %2, %cst {dimension_numbers = #tpu.dot_dimension_numbers<[1], [0], [0], [1], [0, 0, 1, 1], [], []>} : vector<2x144xf32>, vector<144x36xf32>, vector<2x36xf32> -> vector<2x36xf32>
    %c0_4 = arith.constant 0 : index
    %c0_5 = arith.constant 0 : index
    %4 = vector.load %arg3[%c0_4, %c0_5] : memref<2x1xf32, #tpu.memory_space<vmem>>, vector<2x1xf32>
    %5 = vector.broadcast %4 : vector<2x1xf32> to vector<2x36xf32>
    %6 = arith.addf %3, %5 : vector<2x36xf32>
    %cst_6 = arith.constant 0.000000e+00 : f32
    %7 = vector.broadcast %cst_6 : f32 to vector<2x36xf32>
    %8 = arith.maximumf %6, %7 : vector<2x36xf32>
    %c0_7 = arith.constant 0 : index
    %c0_8 = arith.constant 0 : index
    %9 = vector.load %arg4[%c0_7, %c0_8] : memref<2x36xf32, #tpu.memory_space<vmem>>, vector<2x36xf32>
    %10 = arith.mulf %9, %8 : vector<2x36xf32>
    %11 = vector.shape_cast %10 : vector<2x36xf32> to vector<1x2x36xf32>
    %cst_9 = arith.constant dense<0.000000e+00> : vector<1xf32>
    %12 = vector.multi_reduction <add>, %11, %cst_9 [1, 2] : vector<1x2x36xf32> to vector<1xf32>
    %13 = vector.shape_cast %12 : vector<1xf32> to vector<1x1x1xf32>
    %14 = vector.extract %13[0, 0, 0] : f32 from vector<1x1x1xf32>
    %15 = vector.broadcast %14 : f32 to vector<1x1xf32>
    %c0_10 = arith.constant 0 : index
    %c0_11 = arith.constant 0 : index
    %16 = vector.load %arg5[%c0_10, %c0_11] : memref<1x1xf32, #tpu.memory_space<vmem>>, vector<1x1xf32>
    %17 = arith.addf %15, %16 : vector<1x1xf32>
    %18 = arith.negf %17 : vector<1x1xf32>
    %19 = math.exp %18 : vector<1x1xf32>
    %cst_12 = arith.constant 1.000000e+00 : f32
    %20 = vector.broadcast %cst_12 : f32 to vector<1x1xf32>
    %21 = arith.addf %20, %19 : vector<1x1xf32>
    %22 = arith.divf %20, %21 : vector<1x1xf32>
    %cst_13 = arith.constant 4.000000e+05 : f32
    %23 = vector.broadcast %cst_13 : f32 to vector<1x1xf32>
    %24 = arith.mulf %22, %23 : vector<1x1xf32>
    %c0_14 = arith.constant 0 : index
    %c0_15 = arith.constant 0 : index
    %c0_16 = arith.constant 0 : index
    %25 = vector.load %arg6[%c0_14, %c0_15, %c0_16] : memref<1x1x1xf32, #tpu.memory_space<vmem>>, vector<1x1x1xf32>
    %26 = vector.shape_cast %25 : vector<1x1x1xf32> to vector<1x1xf32>
    %27 = vector.shape_cast %24 : vector<1x1xf32> to vector<1x1x1xf32>
    tpu.vector_store %arg6[%c0_14, %c0_15, %c0_16], %27 {strides = array<i32>} : memref<1x1x1xf32, #tpu.memory_space<vmem>>, vector<1x1x1xf32>,
    return
  }
  func.func @transform_0(%arg0: i32) -> (i32, i32, i32) {
    %c0_i32 = arith.constant 0 : i32
    %c0_i32_0 = arith.constant 0 : i32
    %c0_i32_1 = arith.constant 0 : i32
    return %arg0, %c0_i32, %c0_i32_0 : i32, i32, i32
  }
  func.func @transform_1(%arg0: i32) -> (i32, i32) {
    %c0_i32 = arith.constant 0 : i32
    %c0_i32_0 = arith.constant 0 : i32
    %c0_i32_1 = arith.constant 0 : i32
    return %c0_i32, %c0_i32_0 : i32, i32
  }
  func.func @transform_2(%arg0: i32) -> (i32, i32) {
    %c0_i32 = arith.constant 0 : i32
    %c0_i32_0 = arith.constant 0 : i32
    %c0_i32_1 = arith.constant 0 : i32
    return %c0_i32, %c0_i32_0 : i32, i32
  }
  func.func @transform_3(%arg0: i32) -> (i32, i32) {
    %c0_i32 = arith.constant 0 : i32
    %c0_i32_0 = arith.constant 0 : i32
    %c0_i32_1 = arith.constant 0 : i32
    return %c0_i32, %c0_i32_0 : i32, i32
  }
  func.func @transform_4(%arg0: i32) -> (i32, i32) {
    %c0_i32 = arith.constant 0 : i32
    %c0_i32_0 = arith.constant 0 : i32
    %c0_i32_1 = arith.constant 0 : i32
    return %c0_i32, %c0_i32_0 : i32, i32
  }
  func.func @transform_5(%arg0: i32) -> (i32, i32, i32) {
    %c0_i32 = arith.constant 0 : i32
    %c0_i32_0 = arith.constant 0 : i32
    %c0_i32_1 = arith.constant 0 : i32
    return %arg0, %c0_i32, %c0_i32_0 : i32, i32, i32
  }
}

</mosaic_0001>

<llo_original>
// kernel: ev_imgs_forward.3
$region0: #{ev_imgs_forward.3}
  #allocation0 [shape = 'u32[]', space=smem, size = 0x4, offset = 0x4, fixed_abs, tag = 'smem constant byte address 0x4 - core index']
  #allocation1 [shape = 'u32[144,128]{1,0:T(1,128)}', space=vmem, size = 0x12000, scoped, tag = 'internal scratch']
  %s0 = inlined_call_operand.vmem [shape: f32[2,144,4356], index: 0, kind: input, shape index: {}]
  %s1 = inlined_call_operand.vmem [shape: f32[8,144], index: 1, kind: input, shape index: {}]
  %s2 = inlined_call_operand.vmem [shape: f32[8,1], index: 2, kind: input, shape index: {}]
  %s3 = inlined_call_operand.vmem [shape: f32[2,8,4356], index: 3, kind: output, shape index: {}]
  %s4 = sld [smem:[#allocation0]]
  $region45: #{ev_imgs_forward.3} parent=0
    _
  %s6 = ssub.s32 1, %s4
  %s7 = scalar_select 0, %s6, %s4
  loop: start=0, step=1, limit=4
  $region2: #{ev_imgs_forward.3} parent=0 // loop_pre_header
    _
  $region3: #{ev_imgs_forward.3} parent=0 // loop_header
    %s9 = sphi 0, %s13
    %p10 = scmp.ge.s32.totalorder %s9, 4
    %s19 = sphi 0, %s21
    %s22 = sphi 0, %s19
    %s23 = sphi 0, %s22
    %s39 = sphi 0, %s23
    %s43 = sphi 0, %s43
    %s45 = sphi 0, %s43
    %s46 = sphi 0, %s45
    %s60 = sphi 0, %s46
    %s64 = sphi 0, %s64
    %s66 = sphi 0, %s64
    %s67 = sphi 0, %s66
    %s81 = sphi 0, %s67
    %s87 = sphi 0, %s89
    %s90 = sphi 0, %s87
    %s91 = sphi 0, %s90
    %s107 = sphi 0, %s91
  $region4: #{ev_imgs_forward.3} parent=0 // loop_header_branch
    %12 = sbr.rel (%p10) target = $region8
  $region5: #{ev_imgs_forward.3} parent=0 // loop_body
    %s14 = ssub.s32 %s9, 1
    %s15 = ssub.s32 %s9, 2
    %s16 = sadd.s32 %s9, 1
    %s17 = ssub.s32 %s9, %s16
    %p18 = scmp.eq.s32.totalorder %s17, 0
    %s20 = sadd.s32 %s19, 1
    %s21 = scalar_select %p18, %s19, %s20
    %p24 = pneg %p18
    %p25 = scmp.eq.s32.totalorder %s9, 1
    %p26 = por %p24, %p25
    %p27 = scmp.ne.s32.totalorder %s19, %s22
    %p28 = scmp.eq.s32.totalorder %s9, 0
    %p29 = por %p27, %p28
    %p30 = scmp.ne.s32.totalorder %s19, %s22
    %p31 = scmp.eq.s32.totalorder %s14, 1
    %p32 = por %p30, %p31
    %p33 = scmp.ne.s32.totalorder %s22, %s23
    %p34 = scmp.eq.s32.totalorder %s14, 0
    %p35 = por %p33, %p34
    %p36 = scmp.ne.s32.totalorder %s22, %s23
    %p37 = scmp.eq.s32.totalorder %s15, 1
    %p38 = por %p36, %p37
    %p40 = scmp.ne.s32.totalorder %s23, %s39
    %p41 = scmp.eq.s32.totalorder %s15, 0
    %p42 = por %p40, %p41
    %s44 = sadd.s32 %s43, 1
    %p47 = scmp.eq.s32.totalorder %s9, 1
    %p48 = scmp.ne.s32.totalorder %s43, %s45
    %p49 = scmp.eq.s32.totalorder %s9, 0
    %p50 = por %p48, %p49
    %p51 = scmp.ne.s32.totalorder %s43, %s45
    %p52 = scmp.eq.s32.totalorder %s14, 1
    %p53 = por %p51, %p52
    %p54 = scmp.ne.s32.totalorder %s45, %s46
    %p55 = scmp.eq.s32.totalorder %s14, 0
    %p56 = por %p54, %p55
    %p57 = scmp.ne.s32.totalorder %s45, %s46
    %p58 = scmp.eq.s32.totalorder %s15, 1
    %p59 = por %p57, %p58
    %p61 = scmp.ne.s32.totalorder %s46, %s60
    %p62 = scmp.eq.s32.totalorder %s15, 0
    %p63 = por %p61, %p62
    %s65 = sadd.s32 %s64, 1
    %p68 = scmp.eq.s32.totalorder %s9, 1
    %p69 = scmp.ne.s32.totalorder %s64, %s66
    %p70 = scmp.eq.s32.totalorder %s9, 0
    %p71 = por %p69, %p70
    %p72 = scmp.ne.s32.totalorder %s64, %s66
    %p73 = scmp.eq.s32.totalorder %s14, 1
    %p74 = por %p72, %p73
    %p75 = scmp.ne.s32.totalorder %s66, %s67
    %p76 = scmp.eq.s32.totalorder %s14, 0
    %p77 = por %p75, %p76
    %p78 = scmp.ne.s32.totalorder %s66, %s67
    %p79 = scmp.eq.s32.totalorder %s15, 1
    %p80 = por %p78, %p79
    %p82 = scmp.ne.s32.totalorder %s67, %s81
    %p83 = scmp.eq.s32.totalorder %s15, 0
    %p84 = por %p82, %p83
    %s85 = ssub.s32 %s9, %s16
    %p86 = scmp.eq.s32.totalorder %s85, 0
    %s88 = sadd.s32 %s87, 1
    %s89 = scalar_select %p86, %s87, %s88
    %p92 = pneg %p86
    %p93 = scmp.eq.s32.totalorder %s9, 1
    %p94 = por %p92, %p93
    %p95 = scmp.ne.s32.totalorder %s87, %s90
    %p96 = scmp.eq.s32.totalorder %s9, 0
    %p97 = por %p95, %p96
    %p98 = scmp.ne.s32.totalorder %s87, %s90
    %p99 = scmp.eq.s32.totalorder %s14, 1
    %p100 = por %p98, %p99
    %p101 = scmp.ne.s32.totalorder %s90, %s91
    %p102 = scmp.eq.s32.totalorder %s14, 0
    %p103 = por %p101, %p102
    %p104 = scmp.ne.s32.totalorder %s90, %s91
    %p105 = scmp.eq.s32.totalorder %s15, 1
    %p106 = por %p104, %p105
    %p108 = scmp.ne.s32.totalorder %s91, %s107
    %p109 = scmp.eq.s32.totalorder %s15, 0
    %p110 = por %p108, %p109
    %p111 = scmp.le.s32.totalorder 1, %s9
    %p112 = scmp.lt.s32.totalorder %s9, 3
    %p113 = pnand %p111, %p112
    %p114 = pneg %p113
    // Predicated region
    $region9: #{ev_imgs_forward.3} parent=5 // pred_check
      _
    $region10: #{ev_imgs_forward.3} parent=5 // pred_check_branch
      %116 = sbr.rel (%p113) target = $region12
    $region11: #{ev_imgs_forward.3} parent=5 // pred_region
      %s117 = ssub.s32 %s9, 1
      // Predicated region
      $region13: #{ev_imgs_forward.3} parent=11 // pred_check
        %p118 = pneg %p56
      $region14: #{ev_imgs_forward.3} parent=11 // pred_check_branch
        %120 = sbr.rel (%p118) target = $region16
      $region15: #{ev_imgs_forward.3} parent=11 // pred_region
        _
      $region16: #{ev_imgs_forward.3} parent=11 // pred_fallthru
        _
      // Predicated region
      $region17: #{ev_imgs_forward.3} parent=11 // pred_check
        %p121 = pneg %p77
      $region18: #{ev_imgs_forward.3} parent=11 // pred_check_branch
        %123 = sbr.rel (%p121) target = $region20
      $region19: #{ev_imgs_forward.3} parent=11 // pred_region
        _
      $region20: #{ev_imgs_forward.3} parent=11 // pred_fallthru
        _
    $region12: #{ev_imgs_forward.3} parent=5 // pred_fallthru
      _
    %p124 = scmp.lt.s32.totalorder %s9, 2
    // Predicated region
    $region21: #{ev_imgs_forward.3} parent=5 // pred_check
      %p125 = pneg %p124
    $region22: #{ev_imgs_forward.3} parent=5 // pred_check_branch
      %127 = sbr.rel (%p125) target = $region24
    $region23: #{ev_imgs_forward.3} parent=5 // pred_region
      // Predicated region
      $region25: #{ev_imgs_forward.3} parent=23 // pred_check
        %p128 = pneg %p29
      $region26: #{ev_imgs_forward.3} parent=23 // pred_check_branch
        %130 = sbr.rel (%p128) target = $region28
      $region27: #{ev_imgs_forward.3} parent=23 // pred_region
        %p131 = scmp.lt.s32.totalorder %s9, 1
        %s132 = scalar_select %p131, %s9, 1
        %s133 = smul.addr %s132, 630
        %s134 = smul.addr %s133, 8
        %s135 = scalar_lea.vmem %s0, %s134
      $region28: #{ev_imgs_forward.3} parent=23 // pred_fallthru
        _
    $region24: #{ev_imgs_forward.3} parent=5 // pred_fallthru
      _
    %p136 = scmp.le.s32.totalorder 1, %s9
    %p137 = scmp.lt.s32.totalorder %s9, 3
    %p138 = pnand %p136, %p137
    %p139 = pneg %p138
    // Predicated region
    $region29: #{ev_imgs_forward.3} parent=5 // pred_check
      _
    $region30: #{ev_imgs_forward.3} parent=5 // pred_check_branch
      %141 = sbr.rel (%p138) target = $region32
    $region31: #{ev_imgs_forward.3} parent=5 // pred_region
      %s142 = ssub.s32 %s9, 1
      %p143 = scmp.lt.s32.totalorder %s14, 1
      %s144 = scalar_select %p143, %s14, 1
      %s145 = smul.addr %s144, 630
      %s146 = smul.addr %s145, 8
      %s147 = scalar_lea.vmem %s0, %s146
      %p148 = pneg %p35
      %p149 = pneg %p32
      %p150 = pneg %p56
      %p151 = pneg %p53
      %p152 = pneg %p77
      %p153 = pneg %p74
      %p154 = pneg %p103
      %p155 = pneg %p100
      %p156 = scmp.lt.s32.totalorder %s14, 1
      %s157 = scalar_select %p156, %s14, 1
      %s158 = smul.addr %s157, 35
      %s159 = smul.addr %s158, 8
      %s160 = scalar_lea.vmem %s3, %s159
      %p161 = scmp.lt.s32.totalorder %s14, 1
      %s162 = scalar_select %p161, %s14, 1
      %s163 = smul.addr %s162, 630
      %s164 = smul.addr %s163, 8
      %s165 = scalar_lea.vmem %s0, %s164
      %p166 = scmp.lt.s32.totalorder %s14, 1
      %s167 = scalar_select %p166, %s14, 1
      %s168 = smul.addr %s167, 35
      %s169 = smul.addr %s168, 8
      %s170 = scalar_lea.vmem %s3, %s169
      %v171 = vld [vmem:[%s1] sm:$0xff]
      %v172 = vld [vmem:[%s1 + $0x8] sm:$0xff]
      %v173 = vld [vmem:[%s165] sm:$0xff]
      %v174 = vld [vmem:[%s165 + $0x8] sm:$0xff]
      %v175 = vld [vmem:[%s165 + $0x10] sm:$0xff]
      %v176 = vld [vmem:[%s165 + $0x18] sm:$0xff]
      %v177 = vld [vmem:[%s165 + $0x20] sm:$0xff]
      %v178 = vld [vmem:[%s165 + $0x28] sm:$0xff]
      %v179 = vld [vmem:[%s165 + $0x30] sm:$0xff]
      %v180 = vld [vmem:[%s165 + $0x38] sm:$0xff]
      %v181 = vld [vmem:[%s165 + $0x40] sm:$0xff]
      %v182 = vld [vmem:[%s165 + $0x48] sm:$0xff]
      %v183 = vld [vmem:[%s165 + $0x50] sm:$0xff]
      %v184 = vld [vmem:[%s165 + $0x58] sm:$0xff]
      %v185 = vld [vmem:[%s165 + $0x60] sm:$0xff]
      %v186 = vld [vmem:[%s165 + $0x68] sm:$0xff]
      %v187 = vld [vmem:[%s165 + $0x70] sm:$0xff]
      %v188 = vld [vmem:[%s165 + $0x78] sm:$0xff]
      %v189 = vld [vmem:[%s165 + $0x80] sm:$0xff]
      %v190 = vld [vmem:[%s165 + $0x88] sm:$0xff]
      %v191 = vld [vmem:[%s165 + $0x90] sm:$0xff]
      %v192 = vld [vmem:[%s165 + $0x98] sm:$0xff]
      %v193 = vld [vmem:[%s165 + $0xa0] sm:$0xff]
      %v194 = vld [vmem:[%s165 + $0xa8] sm:$0xff]
      %v195 = vld [vmem:[%s165 + $0xb0] sm:$0xff]
      %v196 = vld [vmem:[%s165 + $0xb8] sm:$0xff]
      %v197 = vld [vmem:[%s165 + $0xc0] sm:$0xff]
      %v198 = vld [vmem:[%s165 + $0xc8] sm:$0xff]
      %v199 = vld [vmem:[%s165 + $0xd0] sm:$0xff]
      %v200 = vld [vmem:[%s165 + $0xd8] sm:$0xff]
      %v201 = vld [vmem:[%s165 + $0xe0] sm:$0xff]
      %v202 = vld [vmem:[%s165 + $0xe8] sm:$0xff]
      %v203 = vld [vmem:[%s165 + $0xf0] sm:$0xff]
      %v204 = vld [vmem:[%s165 + $0xf8] sm:$0xff]
      %v205 = vld [vmem:[%s165 + $0x100] sm:$0xff]
      %v206 = vld [vmem:[%s165 + $0x108] sm:$0xff]
      %v207 = vld [vmem:[%s165 + $0x110] sm:$0xff]
      %v208 = vld [vmem:[%s165 + $0x118] sm:$0xff]
      %v209 = vld [vmem:[%s165 + $0x120] sm:$0xff]
      %v210 = vld [vmem:[%s165 + $0x128] sm:$0xff]
      %v211 = vld [vmem:[%s165 + $0x130] sm:$0xff]
      %v212 = vld [vmem:[%s165 + $0x138] sm:$0xff]
      %v213 = vld [vmem:[%s165 + $0x140] sm:$0xff]
      %v214 = vld [vmem:[%s165 + $0x148] sm:$0xff]
      %v215 = vld [vmem:[%s165 + $0x150] sm:$0xff]
      %v216 = vld [vmem:[%s165 + $0x158] sm:$0xff]
      %v217 = vld [vmem:[%s165 + $0x160] sm:$0xff]
      %v218 = vld [vmem:[%s165 + $0x168] sm:$0xff]
      %v219 = vld [vmem:[%s165 + $0x170] sm:$0xff]
      %v220 = vld [vmem:[%s165 + $0x178] sm:$0xff]
      %v221 = vld [vmem:[%s165 + $0x180] sm:$0xff]
      %v222 = vld [vmem:[%s165 + $0x188] sm:$0xff]
      %v223 = vld [vmem:[%s165 + $0x190] sm:$0xff]
      %v224 = vld [vmem:[%s165 + $0x198] sm:$0xff]
      %v225 = vld [vmem:[%s165 + $0x1a0] sm:$0xff]
      %v226 = vld [vmem:[%s165 + $0x1a8] sm:$0xff]
      %v227 = vld [vmem:[%s165 + $0x1b0] sm:$0xff]
      %v228 = vld [vmem:[%s165 + $0x1b8] sm:$0xff]
      %v229 = vld [vmem:[%s165 + $0x1c0] sm:$0xff]
      %v230 = vld [vmem:[%s165 + $0x1c8] sm:$0xff]
      %v231 = vld [vmem:[%s165 + $0x1d0] sm:$0xff]
      %v232 = vld [vmem:[%s165 + $0x1d8] sm:$0xff]
      %v233 = vld [vmem:[%s165 + $0x1e0] sm:$0xff]
      %v234 = vld [vmem:[%s165 + $0x1e8] sm:$0xff]
      %v235 = vld [vmem:[%s165 + $0x1f0] sm:$0xff]
      %v236 = vld [vmem:[%s165 + $0x1f8] sm:$0xff]
      %v237 = vld [vmem:[%s165 + $0x200] sm:$0xff]
      %v238 = vld [vmem:[%s165 + $0x208] sm:$0xff]
      %v239 = vld [vmem:[%s165 + $0x210] sm:$0xff]
      %v240 = vld [vmem:[%s165 + $0x218] sm:$0xff]
      %v241 = vld [vmem:[%s165 + $0x220] sm:$0xff]
      %v242 = vld [vmem:[%s165 + $0x228] sm:$0xff]
      %v243 = vld [vmem:[%s165 + $0x230] sm:$0xff]
      %v244 = vld [vmem:[%s165 + $0x238] sm:$0xff]
      %v245 = vld [vmem:[%s165 + $0x240] sm:$0xff]
      %v246 = vld [vmem:[%s165 + $0x248] sm:$0xff]
      %v247 = vld [vmem:[%s165 + $0x250] sm:$0xff]
      %v248 = vld [vmem:[%s165 + $0x258] sm:$0xff]
      %v249 = vld [vmem:[%s165 + $0x260] sm:$0xff]
      %v250 = vld [vmem:[%s165 + $0x268] sm:$0xff]
      %v251 = vld [vmem:[%s165 + $0x270] sm:$0xff]
      %v252 = vld [vmem:[%s165 + $0x278] sm:$0xff]
      %v253 = vld [vmem:[%s165 + $0x280] sm:$0xff]
      %v254 = vld [vmem:[%s165 + $0x288] sm:$0xff]
      %v255 = vld [vmem:[%s165 + $0x290] sm:$0xff]
      %v256 = vld [vmem:[%s165 + $0x298] sm:$0xff]
      %v257 = vld [vmem:[%s165 + $0x2a0] sm:$0xff]
      %v258 = vld [vmem:[%s165 + $0x2a8] sm:$0xff]
      %v259 = vld [vmem:[%s165 + $0x2b0] sm:$0xff]
      %v260 = vld [vmem:[%s165 + $0x2b8] sm:$0xff]
      %v261 = vld [vmem:[%s165 + $0x2c0] sm:$0xff]
      %v262 = vld [vmem:[%s165 + $0x2c8] sm:$0xff]
      %v263 = vld [vmem:[%s165 + $0x2d0] sm:$0xff]
      %v264 = vld [vmem:[%s165 + $0x2d8] sm:$0xff]
      %v265 = vld [vmem:[%s165 + $0x2e0] sm:$0xff]
      %v266 = vld [vmem:[%s165 + $0x2e8] sm:$0xff]
      %v267 = vld [vmem:[%s165 + $0x2f0] sm:$0xff]
      %v268 = vld [vmem:[%s165 + $0x2f8] sm:$0xff]
      %v269 = vld [vmem:[%s165 + $0x300] sm:$0xff]
      %v270 = vld [vmem:[%s165 + $0x308] sm:$0xff]
      %v271 = vld [vmem:[%s165 + $0x310] sm:$0xff]
      %v272 = vld [vmem:[%s165 + $0x318] sm:$0xff]
      %v273 = vld [vmem:[%s165 + $0x320] sm:$0xff]
      %v274 = vld [vmem:[%s165 + $0x328] sm:$0xff]
      %v275 = vld [vmem:[%s165 + $0x330] sm:$0xff]
      %v276 = vld [vmem:[%s165 + $0x338] sm:$0xff]
      %v277 = vld [vmem:[%s165 + $0x340] sm:$0xff]
      %v278 = vld [vmem:[%s165 + $0x348] sm:$0xff]
      %v279 = vld [vmem:[%s165 + $0x350] sm:$0xff]
      %v280 = vld [vmem:[%s165 + $0x358] sm:$0xff]
      %v281 = vld [vmem:[%s165 + $0x360] sm:$0xff]
      %v282 = vld [vmem:[%s165 + $0x368] sm:$0xff]
      %v283 = vld [vmem:[%s165 + $0x370] sm:$0xff]
      %v284 = vld [vmem:[%s165 + $0x378] sm:$0xff]
      %v285 = vld [vmem:[%s165 + $0x380] sm:$0xff]
      %v286 = vld [vmem:[%s165 + $0x388] sm:$0xff]
      %v287 = vld [vmem:[%s165 + $0x390] sm:$0xff]
      %v288 = vld [vmem:[%s165 + $0x398] sm:$0xff]
      %v289 = vld [vmem:[%s165 + $0x3a0] sm:$0xff]
      %v290 = vld [vmem:[%s165 + $0x3a8] sm:$0xff]
      %v291 = vld [vmem:[%s165 + $0x3b0] sm:$0xff]
      %v292 = vld [vmem:[%s165 + $0x3b8] sm:$0xff]
      %v293 = vld [vmem:[%s165 + $0x3c0] sm:$0xff]
      %v294 = vld [vmem:[%s165 + $0x3c8] sm:$0xff]
      %v295 = vld [vmem:[%s165 + $0x3d0] sm:$0xff]
      %v296 = vld [vmem:[%s165 + $0x3d8] sm:$0xff]
      %v297 = vld [vmem:[%s165 + $0x3e0] sm:$0xff]
      %v298 = vld [vmem:[%s165 + $0x3e8] sm:$0xff]
      %v299 = vld [vmem:[%s165 + $0x3f0] sm:$0xff]
      %v300 = vld [vmem:[%s165 + $0x3f8] sm:$0xff]
      %v301 = vld [vmem:[%s165 + $0x400] sm:$0xff]
      %v302 = vld [vmem:[%s165 + $0x408] sm:$0xff]
      %v303 = vld [vmem:[%s165 + $0x410] sm:$0xff]
      %v304 = vld [vmem:[%s165 + $0x418] sm:$0xff]
      %v305 = vld [vmem:[%s165 + $0x420] sm:$0xff]
      %v306 = vld [vmem:[%s165 + $0x428] sm:$0xff]
      %v307 = vld [vmem:[%s165 + $0x430] sm:$0xff]
      %v308 = vld [vmem:[%s165 + $0x438] sm:$0xff]
      %v309 = vld [vmem:[%s165 + $0x440] sm:$0xff]
      %v310 = vld [vmem:[%s165 + $0x448] sm:$0xff]
      %v311 = vld [vmem:[%s165 + $0x450] sm:$0xff]
      %v312 = vld [vmem:[%s165 + $0x458] sm:$0xff]
      %v313 = vld [vmem:[%s165 + $0x460] sm:$0xff]
      %v314 = vld [vmem:[%s165 + $0x468] sm:$0xff]
      %v315 = vld [vmem:[%s165 + $0x470] sm:$0xff]
      %v316 = vld [vmem:[%s165 + $0x478] sm:$0xff]
      %v317 = vld [vmem:[%s165 + $0x480] sm:$0xff]
      %v318 = vld [vmem:[%s165 + $0x488] sm:$0xff]
      %v319 = vld [vmem:[%s165 + $0x490] sm:$0xff]
      %v320 = vld [vmem:[%s165 + $0x498] sm:$0xff]
      %v321 = vld [vmem:[%s165 + $0x4a0] sm:$0xff]
      %v322 = vld [vmem:[%s165 + $0x4a8] sm:$0xff]
      %v323 = vld [vmem:[%s165 + $0x4b0] sm:$0xff]
      %v324 = vld [vmem:[%s165 + $0x4b8] sm:$0xff]
      %v325 = vld [vmem:[%s165 + $0x4c0] sm:$0xff]
      %v326 = vld [vmem:[%s165 + $0x4c8] sm:$0xff]
      %v327 = vld [vmem:[%s165 + $0x4d0] sm:$0xff]
      %v328 = vld [vmem:[%s165 + $0x4d8] sm:$0xff]
      %v329 = vld [vmem:[%s165 + $0x4e0] sm:$0xff]
      %v330 = vld [vmem:[%s165 + $0x4e8] sm:$0xff]
      %v331 = vld [vmem:[%s165 + $0x4f0] sm:$0xff]
      %v332 = vld [vmem:[%s165 + $0x4f8] sm:$0xff]
      %v333 = vld [vmem:[%s165 + $0x500] sm:$0xff]
      %v334 = vld [vmem:[%s165 + $0x508] sm:$0xff]
      %v335 = vld [vmem:[%s165 + $0x510] sm:$0xff]
      %v336 = vld [vmem:[%s165 + $0x518] sm:$0xff]
      %v337 = vld [vmem:[%s165 + $0x520] sm:$0xff]
      %v338 = vld [vmem:[%s165 + $0x528] sm:$0xff]
      %v339 = vld [vmem:[%s165 + $0x530] sm:$0xff]
      %v340 = vld [vmem:[%s165 + $0x538] sm:$0xff]
      %v341 = vld [vmem:[%s165 + $0x540] sm:$0xff]
      %v342 = vld [vmem:[%s165 + $0x548] sm:$0xff]
      %v343 = vld [vmem:[%s165 + $0x550] sm:$0xff]
      %v344 = vld [vmem:[%s165 + $0x558] sm:$0xff]
      %v345 = vld [vmem:[%s165 + $0x560] sm:$0xff]
      %v346 = vld [vmem:[%s165 + $0x568] sm:$0xff]
      %v347 = vld [vmem:[%s165 + $0x570] sm:$0xff]
      %v348 = vld [vmem:[%s165 + $0x578] sm:$0xff]
      %v349 = vld [vmem:[%s165 + $0x580] sm:$0xff]
      %v350 = vld [vmem:[%s165 + $0x588] sm:$0xff]
      %v351 = vld [vmem:[%s165 + $0x590] sm:$0xff]
      %v352 = vld [vmem:[%s165 + $0x598] sm:$0xff]
      %v353 = vld [vmem:[%s165 + $0x5a0] sm:$0xff]
      %v354 = vld [vmem:[%s165 + $0x5a8] sm:$0xff]
      %v355 = vld [vmem:[%s165 + $0x5b0] sm:$0xff]
      %v356 = vld [vmem:[%s165 + $0x5b8] sm:$0xff]
      %v357 = vld [vmem:[%s165 + $0x5c0] sm:$0xff]
      %v358 = vld [vmem:[%s165 + $0x5c8] sm:$0xff]
      %v359 = vld [vmem:[%s165 + $0x5d0] sm:$0xff]
      %v360 = vld [vmem:[%s165 + $0x5d8] sm:$0xff]
      %v361 = vld [vmem:[%s165 + $0x5e0] sm:$0xff]
      %v362 = vld [vmem:[%s165 + $0x5e8] sm:$0xff]
      %v363 = vld [vmem:[%s165 + $0x5f0] sm:$0xff]
      %v364 = vld [vmem:[%s165 + $0x5f8] sm:$0xff]
      %v365 = vld [vmem:[%s165 + $0x600] sm:$0xff]
      %v366 = vld [vmem:[%s165 + $0x608] sm:$0xff]
      %v367 = vld [vmem:[%s165 + $0x610] sm:$0xff]
      %v368 = vld [vmem:[%s165 + $0x618] sm:$0xff]
      %v369 = vld [vmem:[%s165 + $0x620] sm:$0xff]
      %v370 = vld [vmem:[%s165 + $0x628] sm:$0xff]
      %v371 = vld [vmem:[%s165 + $0x630] sm:$0xff]
      %v372 = vld [vmem:[%s165 + $0x638] sm:$0xff]
      %v373 = vld [vmem:[%s165 + $0x640] sm:$0xff]
      %v374 = vld [vmem:[%s165 + $0x648] sm:$0xff]
      %v375 = vld [vmem:[%s165 + $0x650] sm:$0xff]
      %v376 = vld [vmem:[%s165 + $0x658] sm:$0xff]
      %v377 = vld [vmem:[%s165 + $0x660] sm:$0xff]
      %v378 = vld [vmem:[%s165 + $0x668] sm:$0xff]
      %v379 = vld [vmem:[%s165 + $0x670] sm:$0xff]
      %v380 = vld [vmem:[%s165 + $0x678] sm:$0xff]
      %v381 = vld [vmem:[%s165 + $0x680] sm:$0xff]
      %v382 = vld [vmem:[%s165 + $0x688] sm:$0xff]
      %v383 = vld [vmem:[%s165 + $0x690] sm:$0xff]
      %v384 = vld [vmem:[%s165 + $0x698] sm:$0xff]
      %v385 = vld [vmem:[%s165 + $0x6a0] sm:$0xff]
      %v386 = vld [vmem:[%s165 + $0x6a8] sm:$0xff]
      %v387 = vld [vmem:[%s165 + $0x6b0] sm:$0xff]
      %v388 = vld [vmem:[%s165 + $0x6b8] sm:$0xff]
      %v389 = vld [vmem:[%s165 + $0x6c0] sm:$0xff]
      %v390 = vld [vmem:[%s165 + $0x6c8] sm:$0xff]
      %v391 = vld [vmem:[%s165 + $0x6d0] sm:$0xff]
      %v392 = vld [vmem:[%s165 + $0x6d8] sm:$0xff]
      %v393 = vld [vmem:[%s165 + $0x6e0] sm:$0xff]
      %v394 = vld [vmem:[%s165 + $0x6e8] sm:$0xff]
      %v395 = vld [vmem:[%s165 + $0x6f0] sm:$0xff]
      %v396 = vld [vmem:[%s165 + $0x6f8] sm:$0xff]
      %v397 = vld [vmem:[%s165 + $0x700] sm:$0xff]
      %v398 = vld [vmem:[%s165 + $0x708] sm:$0xff]
      %v399 = vld [vmem:[%s165 + $0x710] sm:$0xff]
      %v400 = vld [vmem:[%s165 + $0x718] sm:$0xff]
      %v401 = vld [vmem:[%s165 + $0x720] sm:$0xff]
      %v402 = vld [vmem:[%s165 + $0x728] sm:$0xff]
      %v403 = vld [vmem:[%s165 + $0x730] sm:$0xff]
      %v404 = vld [vmem:[%s165 + $0x738] sm:$0xff]
      %v405 = vld [vmem:[%s165 + $0x740] sm:$0xff]
      %v406 = vld [vmem:[%s165 + $0x748] sm:$0xff]
      %v407 = vld [vmem:[%s165 + $0x750] sm:$0xff]
      %v408 = vld [vmem:[%s165 + $0x758] sm:$0xff]
      %v409 = vld [vmem:[%s165 + $0x760] sm:$0xff]
      %v410 = vld [vmem:[%s165 + $0x768] sm:$0xff]
      %v411 = vld [vmem:[%s165 + $0x770] sm:$0xff]
      %v412 = vld [vmem:[%s165 + $0x778] sm:$0xff]
      %v413 = vld [vmem:[%s165 + $0x780] sm:$0xff]
      %v414 = vld [vmem:[%s165 + $0x788] sm:$0xff]
      %v415 = vld [vmem:[%s165 + $0x790] sm:$0xff]
      %v416 = vld [vmem:[%s165 + $0x798] sm:$0xff]
      %v417 = vld [vmem:[%s165 + $0x7a0] sm:$0xff]
      %v418 = vld [vmem:[%s165 + $0x7a8] sm:$0xff]
      %v419 = vld [vmem:[%s165 + $0x7b0] sm:$0xff]
      %v420 = vld [vmem:[%s165 + $0x7b8] sm:$0xff]
      %v421 = vld [vmem:[%s165 + $0x7c0] sm:$0xff]
      %v422 = vld [vmem:[%s165 + $0x7c8] sm:$0xff]
      %v423 = vld [vmem:[%s165 + $0x7d0] sm:$0xff]
      %v424 = vld [vmem:[%s165 + $0x7d8] sm:$0xff]
      %v425 = vld [vmem:[%s165 + $0x7e0] sm:$0xff]
      %v426 = vld [vmem:[%s165 + $0x7e8] sm:$0xff]
      %v427 = vld [vmem:[%s165 + $0x7f0] sm:$0xff]
      %v428 = vld [vmem:[%s165 + $0x7f8] sm:$0xff]
      %v429 = vld [vmem:[%s165 + $0x800] sm:$0xff]
      %v430 = vld [vmem:[%s165 + $0x808] sm:$0xff]
      %v431 = vld [vmem:[%s165 + $0x810] sm:$0xff]
      %v432 = vld [vmem:[%s165 + $0x818] sm:$0xff]
      %v433 = vld [vmem:[%s165 + $0x820] sm:$0xff]
      %v434 = vld [vmem:[%s165 + $0x828] sm:$0xff]
      %v435 = vld [vmem:[%s165 + $0x830] sm:$0xff]
      %v436 = vld [vmem:[%s165 + $0x838] sm:$0xff]
      %v437 = vld [vmem:[%s165 + $0x840] sm:$0xff]
      %v438 = vld [vmem:[%s165 + $0x848] sm:$0xff]
      %v439 = vld [vmem:[%s165 + $0x850] sm:$0xff]
      %v440 = vld [vmem:[%s165 + $0x858] sm:$0xff]
      %v441 = vld [vmem:[%s165 + $0x860] sm:$0xff]
      %v442 = vld [vmem:[%s165 + $0x868] sm:$0xff]
      %v443 = vld [vmem:[%s165 + $0x870] sm:$0xff]
      %v444 = vld [vmem:[%s165 + $0x878] sm:$0xff]
      %v445 = vld [vmem:[%s165 + $0x880] sm:$0xff]
      %v446 = vld [vmem:[%s165 + $0x888] sm:$0xff]
      %v447 = vld [vmem:[%s165 + $0x890] sm:$0xff]
      %v448 = vld [vmem:[%s165 + $0x898] sm:$0xff]
      %v449 = vld [vmem:[%s165 + $0x8a0] sm:$0xff]
      %v450 = vld [vmem:[%s165 + $0x8a8] sm:$0xff]
      %v451 = vld [vmem:[%s165 + $0x8b0] sm:$0xff]
      %v452 = vld [vmem:[%s165 + $0x8b8] sm:$0xff]
      %v453 = vld [vmem:[%s165 + $0x8c0] sm:$0xff]
      %v454 = vld [vmem:[%s165 + $0x8c8] sm:$0xff]
      %v455 = vld [vmem:[%s165 + $0x8d0] sm:$0xff]
      %v456 = vld [vmem:[%s165 + $0x8d8] sm:$0xff]
      %v457 = vld [vmem:[%s165 + $0x8e0] sm:$0xff]
      %v458 = vld [vmem:[%s165 + $0x8e8] sm:$0xff]
      %v459 = vld [vmem:[%s165 + $0x8f0] sm:$0xff]
      %v460 = vld [vmem:[%s165 + $0x8f8] sm:$0xff]
      %v461 = vld [vmem:[%s165 + $0x900] sm:$0xff]
      %v462 = vld [vmem:[%s165 + $0x908] sm:$0xff]
      %v463 = vld [vmem:[%s165 + $0x910] sm:$0xff]
      %v464 = vld [vmem:[%s165 + $0x918] sm:$0xff]
      %v465 = vld [vmem:[%s165 + $0x920] sm:$0xff]
      %v466 = vld [vmem:[%s165 + $0x928] sm:$0xff]
      %v467 = vld [vmem:[%s165 + $0x930] sm:$0xff]
      %v468 = vld [vmem:[%s165 + $0x938] sm:$0xff]
      %v469 = vld [vmem:[%s165 + $0x940] sm:$0xff]
      %v470 = vld [vmem:[%s165 + $0x948] sm:$0xff]
      %v471 = vld [vmem:[%s165 + $0x950] sm:$0xff]
      %v472 = vld [vmem:[%s165 + $0x958] sm:$0xff]
      %v473 = vld [vmem:[%s165 + $0x960] sm:$0xff]
      %v474 = vld [vmem:[%s165 + $0x968] sm:$0xff]
      %v475 = vld [vmem:[%s165 + $0x970] sm:$0xff]
      %v476 = vld [vmem:[%s165 + $0x978] sm:$0xff]
      %v477 = vld [vmem:[%s165 + $0x980] sm:$0xff]
      %v478 = vld [vmem:[%s165 + $0x988] sm:$0xff]
      %v479 = vld [vmem:[%s165 + $0x990] sm:$0xff]
      %v480 = vld [vmem:[%s165 + $0x998] sm:$0xff]
      %v481 = vld [vmem:[%s165 + $0x9a0] sm:$0xff]
      %v482 = vld [vmem:[%s165 + $0x9a8] sm:$0xff]
      %v483 = vld [vmem:[%s165 + $0x9b0] sm:$0xff]
      %v484 = vld [vmem:[%s165 + $0x9b8] sm:$0xff]
      %v485 = vld [vmem:[%s165 + $0x9c0] sm:$0xff]
      %v486 = vld [vmem:[%s165 + $0x9c8] sm:$0xff]
      %v487 = vld [vmem:[%s165 + $0x9d0] sm:$0xff]
      %v488 = vld [vmem:[%s165 + $0x9d8] sm:$0xff]
      %v489 = vld [vmem:[%s165 + $0x9e0] sm:$0xff]
      %v490 = vld [vmem:[%s165 + $0x9e8] sm:$0xff]
      %v491 = vld [vmem:[%s165 + $0x9f0] sm:$0xff]
      %v492 = vld [vmem:[%s165 + $0x9f8] sm:$0xff]
      %v493 = vld [vmem:[%s165 + $0xa00] sm:$0xff]
      %v494 = vld [vmem:[%s165 + $0xa08] sm:$0xff]
      %v495 = vld [vmem:[%s165 + $0xa10] sm:$0xff]
      %v496 = vld [vmem:[%s165 + $0xa18] sm:$0xff]
      %v497 = vld [vmem:[%s165 + $0xa20] sm:$0xff]
      %v498 = vld [vmem:[%s165 + $0xa28] sm:$0xff]
      %v499 = vld [vmem:[%s165 + $0xa30] sm:$0xff]
      %v500 = vld [vmem:[%s165 + $0xa38] sm:$0xff]
      %v501 = vld [vmem:[%s165 + $0xa40] sm:$0xff]
      %v502 = vld [vmem:[%s165 + $0xa48] sm:$0xff]
      %v503 = vld [vmem:[%s165 + $0xa50] sm:$0xff]
      %v504 = vld [vmem:[%s165 + $0xa58] sm:$0xff]
      %v505 = vld [vmem:[%s165 + $0xa60] sm:$0xff]
      %v506 = vld [vmem:[%s165 + $0xa68] sm:$0xff]
      %v507 = vld [vmem:[%s165 + $0xa70] sm:$0xff]
      %v508 = vld [vmem:[%s165 + $0xa78] sm:$0xff]
      %v509 = vld [vmem:[%s165 + $0xa80] sm:$0xff]
      %v510 = vld [vmem:[%s165 + $0xa88] sm:$0xff]
      %v511 = vld [vmem:[%s165 + $0xa90] sm:$0xff]
      %v512 = vld [vmem:[%s165 + $0xa98] sm:$0xff]
      %v513 = vld [vmem:[%s165 + $0xaa0] sm:$0xff]
      %v514 = vld [vmem:[%s165 + $0xaa8] sm:$0xff]
      %v515 = vld [vmem:[%s165 + $0xab0] sm:$0xff]
      %v516 = vld [vmem:[%s165 + $0xab8] sm:$0xff]
      %v517 = vld [vmem:[%s165 + $0xac0] sm:$0xff]
      %v518 = vld [vmem:[%s165 + $0xac8] sm:$0xff]
      %v519 = vld [vmem:[%s165 + $0xad0] sm:$0xff]
      %v520 = vld [vmem:[%s165 + $0xad8] sm:$0xff]
      %v521 = vld [vmem:[%s165 + $0xae0] sm:$0xff]
      %v522 = vld [vmem:[%s165 + $0xae8] sm:$0xff]
      %v523 = vld [vmem:[%s165 + $0xaf0] sm:$0xff]
      %v524 = vld [vmem:[%s165 + $0xaf8] sm:$0xff]
      %v525 = vld [vmem:[%s165 + $0xb00] sm:$0xff]
      %v526 = vld [vmem:[%s165 + $0xb08] sm:$0xff]
      %v527 = vld [vmem:[%s165 + $0xb10] sm:$0xff]
      %v528 = vld [vmem:[%s165 + $0xb18] sm:$0xff]
      %v529 = vld [vmem:[%s165 + $0xb20] sm:$0xff]
      %v530 = vld [vmem:[%s165 + $0xb28] sm:$0xff]
      %v531 = vld [vmem:[%s165 + $0xb30] sm:$0xff]
      %v532 = vld [vmem:[%s165 + $0xb38] sm:$0xff]
      %v533 = vld [vmem:[%s165 + $0xb40] sm:$0xff]
      %v534 = vld [vmem:[%s165 + $0xb48] sm:$0xff]
      %v535 = vld [vmem:[%s165 + $0xb50] sm:$0xff]
      %v536 = vld [vmem:[%s165 + $0xb58] sm:$0xff]
      %v537 = vld [vmem:[%s165 + $0xb60] sm:$0xff]
      %v538 = vld [vmem:[%s165 + $0xb68] sm:$0xff]
      %v539 = vld [vmem:[%s165 + $0xb70] sm:$0xff]
      %v540 = vld [vmem:[%s165 + $0xb78] sm:$0xff]
      %v541 = vld [vmem:[%s165 + $0xb80] sm:$0xff]
      %v542 = vld [vmem:[%s165 + $0xb88] sm:$0xff]
      %v543 = vld [vmem:[%s165 + $0xb90] sm:$0xff]
      %v544 = vld [vmem:[%s165 + $0xb98] sm:$0xff]
      %v545 = vld [vmem:[%s165 + $0xba0] sm:$0xff]
      %v546 = vld [vmem:[%s165 + $0xba8] sm:$0xff]
      %v547 = vld [vmem:[%s165 + $0xbb0] sm:$0xff]
      %v548 = vld [vmem:[%s165 + $0xbb8] sm:$0xff]
      %v549 = vld [vmem:[%s165 + $0xbc0] sm:$0xff]
      %v550 = vld [vmem:[%s165 + $0xbc8] sm:$0xff]
      %v551 = vld [vmem:[%s165 + $0xbd0] sm:$0xff]
      %v552 = vld [vmem:[%s165 + $0xbd8] sm:$0xff]
      %v553 = vld [vmem:[%s165 + $0xbe0] sm:$0xff]
      %v554 = vld [vmem:[%s165 + $0xbe8] sm:$0xff]
      %v555 = vld [vmem:[%s165 + $0xbf0] sm:$0xff]
      %v556 = vld [vmem:[%s165 + $0xbf8] sm:$0xff]
      %v557 = vld [vmem:[%s165 + $0xc00] sm:$0xff]
      %v558 = vld [vmem:[%s165 + $0xc08] sm:$0xff]
      %v559 = vld [vmem:[%s165 + $0xc10] sm:$0xff]
      %v560 = vld [vmem:[%s165 + $0xc18] sm:$0xff]
      %v561 = vld [vmem:[%s165 + $0xc20] sm:$0xff]
      %v562 = vld [vmem:[%s165 + $0xc28] sm:$0xff]
      %v563 = vld [vmem:[%s165 + $0xc30] sm:$0xff]
      %v564 = vld [vmem:[%s165 + $0xc38] sm:$0xff]
      %v565 = vld [vmem:[%s165 + $0xc40] sm:$0xff]
      %v566 = vld [vmem:[%s165 + $0xc48] sm:$0xff]
      %v567 = vld [vmem:[%s165 + $0xc50] sm:$0xff]
      %v568 = vld [vmem:[%s165 + $0xc58] sm:$0xff]
      %v569 = vld [vmem:[%s165 + $0xc60] sm:$0xff]
      %v570 = vld [vmem:[%s165 + $0xc68] sm:$0xff]
      %v571 = vld [vmem:[%s165 + $0xc70] sm:$0xff]
      %v572 = vld [vmem:[%s165 + $0xc78] sm:$0xff]
      %v573 = vld [vmem:[%s165 + $0xc80] sm:$0xff]
      %v574 = vld [vmem:[%s165 + $0xc88] sm:$0xff]
      %v575 = vld [vmem:[%s165 + $0xc90] sm:$0xff]
      %v576 = vld [vmem:[%s165 + $0xc98] sm:$0xff]
      %v577 = vld [vmem:[%s165 + $0xca0] sm:$0xff]
      %v578 = vld [vmem:[%s165 + $0xca8] sm:$0xff]
      %v579 = vld [vmem:[%s165 + $0xcb0] sm:$0xff]
      %v580 = vld [vmem:[%s165 + $0xcb8] sm:$0xff]
      %v581 = vld [vmem:[%s165 + $0xcc0] sm:$0xff]
      %v582 = vld [vmem:[%s165 + $0xcc8] sm:$0xff]
      %v583 = vld [vmem:[%s165 + $0xcd0] sm:$0xff]
      %v584 = vld [vmem:[%s165 + $0xcd8] sm:$0xff]
      %v585 = vld [vmem:[%s165 + $0xce0] sm:$0xff]
      %v586 = vld [vmem:[%s165 + $0xce8] sm:$0xff]
      %v587 = vld [vmem:[%s165 + $0xcf0] sm:$0xff]
      %v588 = vld [vmem:[%s165 + $0xcf8] sm:$0xff]
      %v589 = vld [vmem:[%s165 + $0xd00] sm:$0xff]
      %v590 = vld [vmem:[%s165 + $0xd08] sm:$0xff]
      %v591 = vld [vmem:[%s165 + $0xd10] sm:$0xff]
      %v592 = vld [vmem:[%s165 + $0xd18] sm:$0xff]
      %v593 = vld [vmem:[%s165 + $0xd20] sm:$0xff]
      %v594 = vld [vmem:[%s165 + $0xd28] sm:$0xff]
      %v595 = vld [vmem:[%s165 + $0xd30] sm:$0xff]
      %v596 = vld [vmem:[%s165 + $0xd38] sm:$0xff]
      %v597 = vld [vmem:[%s165 + $0xd40] sm:$0xff]
      %v598 = vld [vmem:[%s165 + $0xd48] sm:$0xff]
      %v599 = vld [vmem:[%s165 + $0xd50] sm:$0xff]
      %v600 = vld [vmem:[%s165 + $0xd58] sm:$0xff]
      %v601 = vld [vmem:[%s165 + $0xd60] sm:$0xff]
      %v602 = vld [vmem:[%s165 + $0xd68] sm:$0xff]
      %v603 = vld [vmem:[%s165 + $0xd70] sm:$0xff]
      %v604 = vld [vmem:[%s165 + $0xd78] sm:$0xff]
      %v605 = vld [vmem:[%s165 + $0xd80] sm:$0xff]
      %v606 = vld [vmem:[%s165 + $0xd88] sm:$0xff]
      %v607 = vld [vmem:[%s165 + $0xd90] sm:$0xff]
      %v608 = vld [vmem:[%s165 + $0xd98] sm:$0xff]
      %v609 = vld [vmem:[%s165 + $0xda0] sm:$0xff]
      %v610 = vld [vmem:[%s165 + $0xda8] sm:$0xff]
      %v611 = vld [vmem:[%s165 + $0xdb0] sm:$0xff]
      %v612 = vld [vmem:[%s165 + $0xdb8] sm:$0xff]
      %v613 = vld [vmem:[%s165 + $0xdc0] sm:$0xff]
      %v614 = vld [vmem:[%s165 + $0xdc8] sm:$0xff]
      %v615 = vld [vmem:[%s165 + $0xdd0] sm:$0xff]
      %v616 = vld [vmem:[%s165 + $0xdd8] sm:$0xff]
      %v617 = vld [vmem:[%s165 + $0xde0] sm:$0xff]
      %v618 = vld [vmem:[%s165 + $0xde8] sm:$0xff]
      %v619 = vld [vmem:[%s165 + $0xdf0] sm:$0xff]
      %v620 = vld [vmem:[%s165 + $0xdf8] sm:$0xff]
      %v621 = vld [vmem:[%s165 + $0xe00] sm:$0xff]
      %v622 = vld [vmem:[%s165 + $0xe08] sm:$0xff]
      %v623 = vld [vmem:[%s165 + $0xe10] sm:$0xff]
      %v624 = vld [vmem:[%s165 + $0xe18] sm:$0xff]
      %v625 = vld [vmem:[%s165 + $0xe20] sm:$0xff]
      %v626 = vld [vmem:[%s165 + $0xe28] sm:$0xff]
      %v627 = vld [vmem:[%s165 + $0xe30] sm:$0xff]
      %v628 = vld [vmem:[%s165 + $0xe38] sm:$0xff]
      %v629 = vld [vmem:[%s165 + $0xe40] sm:$0xff]
      %v630 = vld [vmem:[%s165 + $0xe48] sm:$0xff]
      %v631 = vld [vmem:[%s165 + $0xe50] sm:$0xff]
      %v632 = vld [vmem:[%s165 + $0xe58] sm:$0xff]
      %v633 = vld [vmem:[%s165 + $0xe60] sm:$0xff]
      %v634 = vld [vmem:[%s165 + $0xe68] sm:$0xff]
      %v635 = vld [vmem:[%s165 + $0xe70] sm:$0xff]
      %v636 = vld [vmem:[%s165 + $0xe78] sm:$0xff]
      %v637 = vld [vmem:[%s165 + $0xe80] sm:$0xff]
      %v638 = vld [vmem:[%s165 + $0xe88] sm:$0xff]
      %v639 = vld [vmem:[%s165 + $0xe90] sm:$0xff]
      %v640 = vld [vmem:[%s165 + $0xe98] sm:$0xff]
      %v641 = vld [vmem:[%s165 + $0xea0] sm:$0xff]
      %v642 = vld [vmem:[%s165 + $0xea8] sm:$0xff]
      %v643 = vld [vmem:[%s165 + $0xeb0] sm:$0xff]
      %v644 = vld [vmem:[%s165 + $0xeb8] sm:$0xff]
      %v645 = vld [vmem:[%s165 + $0xec0] sm:$0xff]
      %v646 = vld [vmem:[%s165 + $0xec8] sm:$0xff]
      %v647 = vld [vmem:[%s165 + $0xed0] sm:$0xff]
      %v648 = vld [vmem:[%s165 + $0xed8] sm:$0xff]
      %v649 = vld [vmem:[%s165 + $0xee0] sm:$0xff]
      %v650 = vld [vmem:[%s165 + $0xee8] sm:$0xff]
      %v651 = vld [vmem:[%s165 + $0xef0] sm:$0xff]
      %v652 = vld [vmem:[%s165 + $0xef8] sm:$0xff]
      %v653 = vld [vmem:[%s165 + $0xf00] sm:$0xff]
      %v654 = vld [vmem:[%s165 + $0xf08] sm:$0xff]
      %v655 = vld [vmem:[%s165 + $0xf10] sm:$0xff]
      %v656 = vld [vmem:[%s165 + $0xf18] sm:$0xff]
      %v657 = vld [vmem:[%s165 + $0xf20] sm:$0xff]
      %v658 = vld [vmem:[%s165 + $0xf28] sm:$0xff]
      %v659 = vld [vmem:[%s165 + $0xf30] sm:$0xff]
      %v660 = vld [vmem:[%s165 + $0xf38] sm:$0xff]
      %v661 = vld [vmem:[%s165 + $0xf40] sm:$0xff]
      %v662 = vld [vmem:[%s165 + $0xf48] sm:$0xff]
      %v663 = vld [vmem:[%s165 + $0xf50] sm:$0xff]
      %v664 = vld [vmem:[%s165 + $0xf58] sm:$0xff]
      %v665 = vld [vmem:[%s165 + $0xf60] sm:$0xff]
      %v666 = vld [vmem:[%s165 + $0xf68] sm:$0xff]
      %v667 = vld [vmem:[%s165 + $0xf70] sm:$0xff]
      %v668 = vld [vmem:[%s165 + $0xf78] sm:$0xff]
      %v669 = vld [vmem:[%s165 + $0xf80] sm:$0xff]
      %v670 = vld [vmem:[%s165 + $0xf88] sm:$0xff]
      %v671 = vld [vmem:[%s165 + $0xf90] sm:$0xff]
      %v672 = vld [vmem:[%s165 + $0xf98] sm:$0xff]
      %v673 = vld [vmem:[%s165 + $0xfa0] sm:$0xff]
      %v674 = vld [vmem:[%s165 + $0xfa8] sm:$0xff]
      %v675 = vld [vmem:[%s165 + $0xfb0] sm:$0xff]
      %v676 = vld [vmem:[%s165 + $0xfb8] sm:$0xff]
      %v677 = vld [vmem:[%s165 + $0xfc0] sm:$0xff]
      %v678 = vld [vmem:[%s165 + $0xfc8] sm:$0xff]
      %v679 = vld [vmem:[%s165 + $0xfd0] sm:$0xff]
      %v680 = vld [vmem:[%s165 + $0xfd8] sm:$0xff]
      %v681 = vld [vmem:[%s165 + $0xfe0] sm:$0xff]
      %v682 = vld [vmem:[%s165 + $0xfe8] sm:$0xff]
      %v683 = vld [vmem:[%s165 + $0xff0] sm:$0xff]
      %v684 = vld [vmem:[%s165 + $0xff8] sm:$0xff]
      %v685 = vld [vmem:[%s165 + $0x1000] sm:$0xff]
      %v686 = vld [vmem:[%s165 + $0x1008] sm:$0xff]
      %v687 = vld [vmem:[%s165 + $0x1010] sm:$0xff]
      %v688 = vld [vmem:[%s165 + $0x1018] sm:$0xff]
      %v689 = vld [vmem:[%s165 + $0x1020] sm:$0xff]
      %v690 = vld [vmem:[%s165 + $0x1028] sm:$0xff]
      %v691 = vld [vmem:[%s165 + $0x1030] sm:$0xff]
      %v692 = vld [vmem:[%s165 + $0x1038] sm:$0xff]
      %v693 = vld [vmem:[%s165 + $0x1040] sm:$0xff]
      %v694 = vld [vmem:[%s165 + $0x1048] sm:$0xff]
      %v695 = vld [vmem:[%s165 + $0x1050] sm:$0xff]
      %v696 = vld [vmem:[%s165 + $0x1058] sm:$0xff]
      %v697 = vld [vmem:[%s165 + $0x1060] sm:$0xff]
      %v698 = vld [vmem:[%s165 + $0x1068] sm:$0xff]
      %v699 = vld [vmem:[%s165 + $0x1070] sm:$0xff]
      %v700 = vld [vmem:[%s165 + $0x1078] sm:$0xff]
      %v701 = vld [vmem:[%s165 + $0x1080] sm:$0xff]
      %v702 = vld [vmem:[%s165 + $0x1088] sm:$0xff]
      %v703 = vld [vmem:[%s165 + $0x1090] sm:$0xff]
      %v704 = vld [vmem:[%s165 + $0x1098] sm:$0xff]
      %v705 = vld [vmem:[%s165 + $0x10a0] sm:$0xff]
      %v706 = vld [vmem:[%s165 + $0x10a8] sm:$0xff]
      %v707 = vld [vmem:[%s165 + $0x10b0] sm:$0xff]
      %v708 = vld [vmem:[%s165 + $0x10b8] sm:$0xff]
      %v709 = vld [vmem:[%s165 + $0x10c0] sm:$0xff]
      %v710 = vld [vmem:[%s165 + $0x10c8] sm:$0xff]
      %v711 = vld [vmem:[%s165 + $0x10d0] sm:$0xff]
      %v712 = vld [vmem:[%s165 + $0x10d8] sm:$0xff]
      %v713 = vld [vmem:[%s165 + $0x10e0] sm:$0xff]
      %v714 = vld [vmem:[%s165 + $0x10e8] sm:$0xff]
      %v715 = vld [vmem:[%s165 + $0x10f0] sm:$0xff]
      %v716 = vld [vmem:[%s165 + $0x10f8] sm:$0xff]
      %v717 = vld [vmem:[%s165 + $0x1100] sm:$0xff]
      %v718 = vld [vmem:[%s165 + $0x1108] sm:$0xff]
      %v719 = vld [vmem:[%s165 + $0x1110] sm:$0xff]
      %v720 = vld [vmem:[%s165 + $0x1118] sm:$0xff]
      %v721 = vld [vmem:[%s165 + $0x1120] sm:$0xff]
      %v722 = vld [vmem:[%s165 + $0x1128] sm:$0xff]
      %v723 = vld [vmem:[%s165 + $0x1130] sm:$0xff]
      %v724 = vld [vmem:[%s165 + $0x1138] sm:$0xff]
      %v725 = vld [vmem:[%s165 + $0x1140] sm:$0xff]
      %v726 = vld [vmem:[%s165 + $0x1148] sm:$0xff]
      %v727 = vld [vmem:[%s165 + $0x1150] sm:$0xff]
      %v728 = vld [vmem:[%s165 + $0x1158] sm:$0xff]
      %v729 = vld [vmem:[%s165 + $0x1160] sm:$0xff]
      %v730 = vld [vmem:[%s165 + $0x1168] sm:$0xff]
      %v731 = vld [vmem:[%s165 + $0x1170] sm:$0xff]
      %v732 = vld [vmem:[%s165 + $0x1178] sm:$0xff]
      %v733 = vld [vmem:[%s165 + $0x1180] sm:$0xff]
      %v734 = vld [vmem:[%s165 + $0x1188] sm:$0xff]
      %v735 = vld [vmem:[%s165 + $0x1190] sm:$0xff]
      %v736 = vld [vmem:[%s165 + $0x1198] sm:$0xff]
      %v737 = vld [vmem:[%s165 + $0x11a0] sm:$0xff]
      %v738 = vld [vmem:[%s165 + $0x11a8] sm:$0xff]
      %v739 = vld [vmem:[%s165 + $0x11b0] sm:$0xff]
      %v740 = vld [vmem:[%s165 + $0x11b8] sm:$0xff]
      %v741 = vld [vmem:[%s165 + $0x11c0] sm:$0xff]
      %v742 = vld [vmem:[%s165 + $0x11c8] sm:$0xff]
      %v743 = vld [vmem:[%s165 + $0x11d0] sm:$0xff]
      %v744 = vld [vmem:[%s165 + $0x11d8] sm:$0xff]
      %v745 = vld [vmem:[%s165 + $0x11e0] sm:$0xff]
      %v746 = vld [vmem:[%s165 + $0x11e8] sm:$0xff]
      %v747 = vld [vmem:[%s165 + $0x11f0] sm:$0xff]
      %v748 = vld [vmem:[%s165 + $0x11f8] sm:$0xff]
      %v749 = vld [vmem:[%s165 + $0x1200] sm:$0xff]
      %v750 = vld [vmem:[%s165 + $0x1208] sm:$0xff]
      %v751 = vld [vmem:[%s165 + $0x1210] sm:$0xff]
      %v752 = vld [vmem:[%s165 + $0x1218] sm:$0xff]
      %v753 = vld [vmem:[%s165 + $0x1220] sm:$0xff]
      %v754 = vld [vmem:[%s165 + $0x1228] sm:$0xff]
      %v755 = vld [vmem:[%s165 + $0x1230] sm:$0xff]
      %v756 = vld [vmem:[%s165 + $0x1238] sm:$0xff]
      %v757 = vld [vmem:[%s165 + $0x1240] sm:$0xff]
      %v758 = vld [vmem:[%s165 + $0x1248] sm:$0xff]
      %v759 = vld [vmem:[%s165 + $0x1250] sm:$0xff]
      %v760 = vld [vmem:[%s165 + $0x1258] sm:$0xff]
      %v761 = vld [vmem:[%s165 + $0x1260] sm:$0xff]
      %v762 = vld [vmem:[%s165 + $0x1268] sm:$0xff]
      %v763 = vld [vmem:[%s165 + $0x1270] sm:$0xff]
      %v764 = vld [vmem:[%s165 + $0x1278] sm:$0xff]
      %v765 = vld [vmem:[%s165 + $0x1280] sm:$0xff]
      %v766 = vld [vmem:[%s165 + $0x1288] sm:$0xff]
      %v767 = vld [vmem:[%s165 + $0x1290] sm:$0xff]
      %v768 = vld [vmem:[%s165 + $0x1298] sm:$0xff]
      %v769 = vld [vmem:[%s165 + $0x12a0] sm:$0xff]
      %v770 = vld [vmem:[%s165 + $0x12a8] sm:$0xff]
      %v771 = vld [vmem:[%s165 + $0x12b0] sm:$0xff]
      %v772 = vld [vmem:[%s165 + $0x12b8] sm:$0xff]
      %v773 = vld [vmem:[%s165 + $0x12c0] sm:$0xff]
      %v774 = vld [vmem:[%s165 + $0x12c8] sm:$0xff]
      %v775 = vld [vmem:[%s165 + $0x12d0] sm:$0xff]
      %v776 = vld [vmem:[%s165 + $0x12d8] sm:$0xff]
      %v777 = vld [vmem:[%s165 + $0x12e0] sm:$0xff]
      %v778 = vld [vmem:[%s165 + $0x12e8] sm:$0xff]
      %v779 = vld [vmem:[%s165 + $0x12f0] sm:$0xff]
      %v780 = vld [vmem:[%s165 + $0x12f8] sm:$0xff]
      %v781 = vld [vmem:[%s165 + $0x1300] sm:$0xff]
      %v782 = vld [vmem:[%s165 + $0x1308] sm:$0xff]
      %v783 = vld [vmem:[%s165 + $0x1310] sm:$0xff]
      %v784 = vld [vmem:[%s165 + $0x1318] sm:$0xff]
      %v785 = vld [vmem:[%s165 + $0x1320] sm:$0xff]
      %v786 = vld [vmem:[%s165 + $0x1328] sm:$0xff]
      %v787 = vld [vmem:[%s165 + $0x1330] sm:$0xff]
      %v788 = vld [vmem:[%s165 + $0x1338] sm:$0xff]
      %v789 = vld [vmem:[%s165 + $0x1340] sm:$0xff]
      %v790 = vld [vmem:[%s165 + $0x1348] sm:$0xff]
      %v791 = vld [vmem:[%s165 + $0x1350] sm:$0xff]
      %v792 = vld [vmem:[%s165 + $0x1358] sm:$0xff]
      %v793 = vld [vmem:[%s165 + $0x1360] sm:$0xff]
      %v794 = vld [vmem:[%s165 + $0x1368] sm:$0xff]
      %v795 = vld [vmem:[%s165 + $0x1370] sm:$0xff]
      %v796 = vld [vmem:[%s165 + $0x1378] sm:$0xff]
      %v797 = vld [vmem:[%s165 + $0x1380] sm:$0xff]
      %v798 = vld [vmem:[%s165 + $0x1388] sm:$0xff]
      %v799 = vld [vmem:[%s165 + $0x1390] sm:$0xff]
      %v800 = vld [vmem:[%s165 + $0x1398] sm:$0xff]
      %v801 = vld [vmem:[%s165 + $0x13a0] sm:$0xff]
      %v802 = vld [vmem:[%s165 + $0x13a8] sm:$0xff]
      %v803 = vld [vmem:[%s2] sm:$0xff]
      %805 = vset.pattern.permute.xlu0 0
      %806 = vperm.xlu0 %805, %v803
      %v807 = vpop.permute.xlu0 %806
      %vm809 = vcmask 130048
      %v811 = vsel %vm809, %v172, 0
      %813 = vmatprep.subr.mxu0 %v699
      %814 = vmatpush1.msra.mxu0 %v698
      %815 = vmatprep.subr.mxu0 %v664
      %816 = vmatpush1.msra.mxu0 %v663
      %817 = vmatprep.subr.mxu0 %v629
      %818 = vmatpush1.msra.mxu0 %v628
      %819 = vmatprep.subr.mxu0 %v594
      %820 = vmatpush1.msra.mxu0 %v593
      %821 = vmatprep.subr.mxu0 %v559
      %822 = vmatpush1.msra.mxu0 %v558
      %823 = vmatprep.subr.mxu0 %v524
      %824 = vmatpush1.msra.mxu0 %v523
      %825 = vmatprep.subr.mxu0 %v489
      %826 = vmatpush1.msra.mxu0 %v488
      %827 = vmatprep.subr.mxu0 %v454
      %828 = vmatpush1.msra.mxu0 %v453
      %829 = vmatprep.subr.mxu0 %v419
      %830 = vmatpush1.msra.mxu0 %v418
      %831 = vmatprep.subr.mxu0 %v384
      %832 = vmatpush1.msra.mxu0 %v383
      %833 = vmatprep.subr.mxu0 %v349
      %834 = vmatpush1.msra.mxu0 %v348
      %835 = vmatprep.subr.mxu0 %v314
      %836 = vmatpush1.msra.mxu0 %v313
      %837 = vmatprep.subr.mxu0 %v279
      %838 = vmatpush1.msra.mxu0 %v278
      %839 = vmatprep.subr.mxu0 %v244
      %840 = vmatpush1.msra.mxu0 %v243
      %841 = vmatprep.subr.mxu0 %v209
      %842 = vmatpush1.msra.mxu0 %v208
      %843 = vmatprep.subr.mxu0 %v174
      %844 = vmatpush1.msra.mxu0 %v173
      %845 = vmatprep.subr.mxu0 0.0
      %846 = vmatpush2.msra.mxu0 0.0
      %847 = vmatprep.subr.mxu0 0.0
      %848 = vmatpush2.msra.mxu0 0.0
      %849 = vmatprep.subr.mxu0 0.0
      %850 = vmatpush2.msra.mxu0 0.0
      %851 = vmatprep.subr.mxu0 0.0
      %852 = vmatpush2.msra.mxu0 0.0
      %853 = vmatprep.subr.mxu0 0.0
      %854 = vmatpush2.msra.mxu0 0.0
      %855 = vmatprep.subr.mxu0 0.0
      %856 = vmatpush2.msra.mxu0 0.0
      %857 = vmatprep.subr.mxu0 0.0
      %858 = vmatpush2.msra.mxu0 0.0
      %859 = vmatprep.subr.mxu0 0.0
      %860 = vmatpush2.msra.mxu0 0.0
      %861 = vmatprep.subr.mxu0 0.0
      %862 = vmatpush2.msra.mxu0 0.0
      %863 = vmatprep.subr.mxu0 0.0
      %864 = vmatpush2.msra.mxu0 0.0
      %865 = vmatprep.subr.mxu0 0.0
      %866 = vmatpush2.msra.mxu0 0.0
      %867 = vmatprep.subr.mxu0 0.0
      %868 = vmatpush2.msra.mxu0 0.0
      %869 = vmatprep.subr.mxu0 0.0
      %870 = vmatpush2.msra.mxu0 0.0
      %871 = vmatprep.subr.mxu0 0.0
      %872 = vmatpush2.msra.mxu0 0.0
      %873 = vmatprep.subr.mxu0 %v769
      %874 = vmatpush2.msra.mxu0 %v768
      %875 = vmatprep.subr.mxu0 %v734
      %876 = vmatpush2.msra.mxu0 %v733
      %877 = vmatprep.mubr.f32.mxu0 %v811
      %878 = vmatmul.mubr.f32.gmra.mxu0 %v171
      %v879 = vpop.f32.mrf.mxu0
      %v880 = vadd.f32 %v807, %v879
      %v881 = vpop.f32.mrf.mxu0
      %v882 = vadd.f32 %v807, %v881
      %883 = vdwg.mxu0
      %884 = vmatprep.subr.mxu0 %v701
      %885 = vmatpush1.msra.mxu0 %v700
      %886 = vmatprep.subr.mxu0 %v666
      %887 = vmatpush1.msra.mxu0 %v665
      %888 = vmatprep.subr.mxu0 %v631
      %889 = vmatpush1.msra.mxu0 %v630
      %890 = vmatprep.subr.mxu0 %v596
      %891 = vmatpush1.msra.mxu0 %v595
      %892 = vmatprep.subr.mxu0 %v561
      %893 = vmatpush1.msra.mxu0 %v560
      %894 = vmatprep.subr.mxu0 %v526
      %895 = vmatpush1.msra.mxu0 %v525
      %896 = vmatprep.subr.mxu0 %v491
      %897 = vmatpush1.msra.mxu0 %v490
      %898 = vmatprep.subr.mxu0 %v456
      %899 = vmatpush1.msra.mxu0 %v455
      %900 = vmatprep.subr.mxu0 %v421
      %901 = vmatpush1.msra.mxu0 %v420
      %902 = vmatprep.subr.mxu0 %v386
      %903 = vmatpush1.msra.mxu0 %v385
      %904 = vmatprep.subr.mxu0 %v351
      %905 = vmatpush1.msra.mxu0 %v350
      %906 = vmatprep.subr.mxu0 %v316
      %907 = vmatpush1.msra.mxu0 %v315
      %908 = vmatprep.subr.mxu0 %v281
      %909 = vmatpush1.msra.mxu0 %v280
      %910 = vmatprep.subr.mxu0 %v246
      %911 = vmatpush1.msra.mxu0 %v245
      %912 = vmatprep.subr.mxu0 %v211
      %913 = vmatpush1.msra.mxu0 %v210
      %914 = vmatprep.subr.mxu0 %v176
      %915 = vmatpush1.msra.mxu0 %v175
      %916 = vmatprep.subr.mxu0 0.0
      %917 = vmatpush2.msra.mxu0 0.0
      %918 = vmatprep.subr.mxu0 0.0
      %919 = vmatpush2.msra.mxu0 0.0
      %920 = vmatprep.subr.mxu0 0.0
      %921 = vmatpush2.msra.mxu0 0.0
      %922 = vmatprep.subr.mxu0 0.0
      %923 = vmatpush2.msra.mxu0 0.0
      %924 = vmatprep.subr.mxu0 0.0
      %925 = vmatpush2.msra.mxu0 0.0
      %926 = vmatprep.subr.mxu0 0.0
      %927 = vmatpush2.msra.mxu0 0.0
      %928 = vmatprep.subr.mxu0 0.0
      %929 = vmatpush2.msra.mxu0 0.0
      %930 = vmatprep.subr.mxu0 0.0
      %931 = vmatpush2.msra.mxu0 0.0
      %932 = vmatprep.subr.mxu0 0.0
      %933 = vmatpush2.msra.mxu0 0.0
      %934 = vmatprep.subr.mxu0 0.0
      %935 = vmatpush2.msra.mxu0 0.0
      %936 = vmatprep.subr.mxu0 0.0
      %937 = vmatpush2.msra.mxu0 0.0
      %938 = vmatprep.subr.mxu0 0.0
      %939 = vmatpush2.msra.mxu0 0.0
      %940 = vmatprep.subr.mxu0 0.0
      %941 = vmatpush2.msra.mxu0 0.0
      %942 = vmatprep.subr.mxu0 0.0
      %943 = vmatpush2.msra.mxu0 0.0
      %944 = vmatprep.subr.mxu0 %v771
      %945 = vmatpush2.msra.mxu0 %v770
      %946 = vmatprep.subr.mxu0 %v736
      %947 = vmatpush2.msra.mxu0 %v735
      %948 = vmatprep.mubr.f32.mxu0 %v811
      %949 = vmatmul.mubr.f32.gmra.mxu0 %v171
      %v950 = vpop.f32.mrf.mxu0
      %v951 = vadd.f32 %v807, %v950
      %v952 = vpop.f32.mrf.mxu0
      %v953 = vadd.f32 %v807, %v952
      %954 = vdwg.mxu0
      %955 = vmatprep.subr.mxu0 %v703
      %956 = vmatpush1.msra.mxu0 %v702
      %957 = vmatprep.subr.mxu0 %v668
      %958 = vmatpush1.msra.mxu0 %v667
      %959 = vmatprep.subr.mxu0 %v633
      %960 = vmatpush1.msra.mxu0 %v632
      %961 = vmatprep.subr.mxu0 %v598
      %962 = vmatpush1.msra.mxu0 %v597
      %963 = vmatprep.subr.mxu0 %v563
      %964 = vmatpush1.msra.mxu0 %v562
      %965 = vmatprep.subr.mxu0 %v528
      %966 = vmatpush1.msra.mxu0 %v527
      %967 = vmatprep.subr.mxu0 %v493
      %968 = vmatpush1.msra.mxu0 %v492
      %969 = vmatprep.subr.mxu0 %v458
      %970 = vmatpush1.msra.mxu0 %v457
      %971 = vmatprep.subr.mxu0 %v423
      %972 = vmatpush1.msra.mxu0 %v422
      %973 = vmatprep.subr.mxu0 %v388
      %974 = vmatpush1.msra.mxu0 %v387
      %975 = vmatprep.subr.mxu0 %v353
      %976 = vmatpush1.msra.mxu0 %v352
      %977 = vmatprep.subr.mxu0 %v318
      %978 = vmatpush1.msra.mxu0 %v317
      %979 = vmatprep.subr.mxu0 %v283
      %980 = vmatpush1.msra.mxu0 %v282
      %981 = vmatprep.subr.mxu0 %v248
      %982 = vmatpush1.msra.mxu0 %v247
      %983 = vmatprep.subr.mxu0 %v213
      %984 = vmatpush1.msra.mxu0 %v212
      %985 = vmatprep.subr.mxu0 %v178
      %986 = vmatpush1.msra.mxu0 %v177
      %987 = vmatprep.subr.mxu0 0.0
      %988 = vmatpush2.msra.mxu0 0.0
      %989 = vmatprep.subr.mxu0 0.0
      %990 = vmatpush2.msra.mxu0 0.0
      %991 = vmatprep.subr.mxu0 0.0
      %992 = vmatpush2.msra.mxu0 0.0
      %993 = vmatprep.subr.mxu0 0.0
      %994 = vmatpush2.msra.mxu0 0.0
      %995 = vmatprep.subr.mxu0 0.0
      %996 = vmatpush2.msra.mxu0 0.0
      %997 = vmatprep.subr.mxu0 0.0
      %998 = vmatpush2.msra.mxu0 0.0
      %999 = vmatprep.subr.mxu0 0.0
      %1000 = vmatpush2.msra.mxu0 0.0
      %1001 = vmatprep.subr.mxu0 0.0
      %1002 = vmatpush2.msra.mxu0 0.0
      %1003 = vmatprep.subr.mxu0 0.0
      %1004 = vmatpush2.msra.mxu0 0.0
      %1005 = vmatprep.subr.mxu0 0.0
      %1006 = vmatpush2.msra.mxu0 0.0
      %1007 = vmatprep.subr.mxu0 0.0
      %1008 = vmatpush2.msra.mxu0 0.0
      %1009 = vmatprep.subr.mxu0 0.0
      %1010 = vmatpush2.msra.mxu0 0.0
      %1011 = vmatprep.subr.mxu0 0.0
      %1012 = vmatpush2.msra.mxu0 0.0
      %1013 = vmatprep.subr.mxu0 0.0
      %1014 = vmatpush2.msra.mxu0 0.0
      %1015 = vmatprep.subr.mxu0 %v773
      %1016 = vmatpush2.msra.mxu0 %v772
      %1017 = vmatprep.subr.mxu0 %v738
      %1018 = vmatpush2.msra.mxu0 %v737
      %1019 = vmatprep.mubr.f32.mxu0 %v811
      %1020 = vmatmul.mubr.f32.gmra.mxu0 %v171
      %v1021 = vpop.f32.mrf.mxu0
      %v1022 = vadd.f32 %v807, %v1021
      %v1023 = vpop.f32.mrf.mxu0
      %v1024 = vadd.f32 %v807, %v1023
      %1025 = vdwg.mxu0
      %1026 = vmatprep.subr.mxu0 %v705
      %1027 = vmatpush1.msra.mxu0 %v704
      %1028 = vmatprep.subr.mxu0 %v670
      %1029 = vmatpush1.msra.mxu0 %v669
      %1030 = vmatprep.subr.mxu0 %v635
      %1031 = vmatpush1.msra.mxu0 %v634
      %1032 = vmatprep.subr.mxu0 %v600
      %1033 = vmatpush1.msra.mxu0 %v599
      %1034 = vmatprep.subr.mxu0 %v565
      %1035 = vmatpush1.msra.mxu0 %v564
      %1036 = vmatprep.subr.mxu0 %v530
      %1037 = vmatpush1.msra.mxu0 %v529
      %1038 = vmatprep.subr.mxu0 %v495
      %1039 = vmatpush1.msra.mxu0 %v494
      %1040 = vmatprep.subr.mxu0 %v460
      %1041 = vmatpush1.msra.mxu0 %v459
      %1042 = vmatprep.subr.mxu0 %v425
      %1043 = vmatpush1.msra.mxu0 %v424
      %1044 = vmatprep.subr.mxu0 %v390
      %1045 = vmatpush1.msra.mxu0 %v389
      %1046 = vmatprep.subr.mxu0 %v355
      %1047 = vmatpush1.msra.mxu0 %v354
      %1048 = vmatprep.subr.mxu0 %v320
      %1049 = vmatpush1.msra.mxu0 %v319
      %1050 = vmatprep.subr.mxu0 %v285
      %1051 = vmatpush1.msra.mxu0 %v284
      %1052 = vmatprep.subr.mxu0 %v250
      %1053 = vmatpush1.msra.mxu0 %v249
      %1054 = vmatprep.subr.mxu0 %v215
      %1055 = vmatpush1.msra.mxu0 %v214
      %1056 = vmatprep.subr.mxu0 %v180
      %1057 = vmatpush1.msra.mxu0 %v179
      %1058 = vmatprep.subr.mxu0 0.0
      %1059 = vmatpush2.msra.mxu0 0.0
      %1060 = vmatprep.subr.mxu0 0.0
      %1061 = vmatpush2.msra.mxu0 0.0
      %1062 = vmatprep.subr.mxu0 0.0
      %1063 = vmatpush2.msra.mxu0 0.0
      %1064 = vmatprep.subr.mxu0 0.0
      %1065 = vmatpush2.msra.mxu0 0.0
      %1066 = vmatprep.subr.mxu0 0.0
      %1067 = vmatpush2.msra.mxu0 0.0
      %1068 = vmatprep.subr.mxu0 0.0
      %1069 = vmatpush2.msra.mxu0 0.0
      %1070 = vmatprep.subr.mxu0 0.0
      %1071 = vmatpush2.msra.mxu0 0.0
      %1072 = vmatprep.subr.mxu0 0.0
      %1073 = vmatpush2.msra.mxu0 0.0
      %1074 = vmatprep.subr.mxu0 0.0
      %1075 = vmatpush2.msra.mxu0 0.0
      %1076 = vmatprep.subr.mxu0 0.0
      %1077 = vmatpush2.msra.mxu0 0.0
      %1078 = vmatprep.subr.mxu0 0.0
      %1079 = vmatpush2.msra.mxu0 0.0
      %1080 = vmatprep.subr.mxu0 0.0
      %1081 = vmatpush2.msra.mxu0 0.0
      %1082 = vmatprep.subr.mxu0 0.0
      %1083 = vmatpush2.msra.mxu0 0.0
      %1084 = vmatprep.subr.mxu0 0.0
      %1085 = vmatpush2.msra.mxu0 0.0
      %1086 = vmatprep.subr.mxu0 %v775
      %1087 = vmatpush2.msra.mxu0 %v774
      %1088 = vmatprep.subr.mxu0 %v740
      %1089 = vmatpush2.msra.mxu0 %v739
      %1090 = vmatprep.mubr.f32.mxu0 %v811
      %1091 = vmatmul.mubr.f32.gmra.mxu0 %v171
      %v1092 = vpop.f32.mrf.mxu0
      %v1093 = vadd.f32 %v807, %v1092
      %v1094 = vpop.f32.mrf.mxu0
      %v1095 = vadd.f32 %v807, %v1094
      %1096 = vdwg.mxu0
      %1097 = vmatprep.subr.mxu0 %v707
      %1098 = vmatpush1.msra.mxu0 %v706
      %1099 = vmatprep.subr.mxu0 %v672
      %1100 = vmatpush1.msra.mxu0 %v671
      %1101 = vmatprep.subr.mxu0 %v637
      %1102 = vmatpush1.msra.mxu0 %v636
      %1103 = vmatprep.subr.mxu0 %v602
      %1104 = vmatpush1.msra.mxu0 %v601
      %1105 = vmatprep.subr.mxu0 %v567
      %1106 = vmatpush1.msra.mxu0 %v566
      %1107 = vmatprep.subr.mxu0 %v532
      %1108 = vmatpush1.msra.mxu0 %v531
      %1109 = vmatprep.subr.mxu0 %v497
      %1110 = vmatpush1.msra.mxu0 %v496
      %1111 = vmatprep.subr.mxu0 %v462
      %1112 = vmatpush1.msra.mxu0 %v461
      %1113 = vmatprep.subr.mxu0 %v427
      %1114 = vmatpush1.msra.mxu0 %v426
      %1115 = vmatprep.subr.mxu0 %v392
      %1116 = vmatpush1.msra.mxu0 %v391
      %1117 = vmatprep.subr.mxu0 %v357
      %1118 = vmatpush1.msra.mxu0 %v356
      %1119 = vmatprep.subr.mxu0 %v322
      %1120 = vmatpush1.msra.mxu0 %v321
      %1121 = vmatprep.subr.mxu0 %v287
      %1122 = vmatpush1.msra.mxu0 %v286
      %1123 = vmatprep.subr.mxu0 %v252
      %1124 = vmatpush1.msra.mxu0 %v251
      %1125 = vmatprep.subr.mxu0 %v217
      %1126 = vmatpush1.msra.mxu0 %v216
      %1127 = vmatprep.subr.mxu0 %v182
      %1128 = vmatpush1.msra.mxu0 %v181
      %1129 = vmatprep.subr.mxu0 0.0
      %1130 = vmatpush2.msra.mxu0 0.0
      %1131 = vmatprep.subr.mxu0 0.0
      %1132 = vmatpush2.msra.mxu0 0.0
      %1133 = vmatprep.subr.mxu0 0.0
      %1134 = vmatpush2.msra.mxu0 0.0
      %1135 = vmatprep.subr.mxu0 0.0
      %1136 = vmatpush2.msra.mxu0 0.0
      %1137 = vmatprep.subr.mxu0 0.0
      %1138 = vmatpush2.msra.mxu0 0.0
      %1139 = vmatprep.subr.mxu0 0.0
      %1140 = vmatpush2.msra.mxu0 0.0
      %1141 = vmatprep.subr.mxu0 0.0
      %1142 = vmatpush2.msra.mxu0 0.0
      %1143 = vmatprep.subr.mxu0 0.0
      %1144 = vmatpush2.msra.mxu0 0.0
      %1145 = vmatprep.subr.mxu0 0.0
      %1146 = vmatpush2.msra.mxu0 0.0
      %1147 = vmatprep.subr.mxu0 0.0
      %1148 = vmatpush2.msra.mxu0 0.0
      %1149 = vmatprep.subr.mxu0 0.0
      %1150 = vmatpush2.msra.mxu0 0.0
      %1151 = vmatprep.subr.mxu0 0.0
      %1152 = vmatpush2.msra.mxu0 0.0
      %1153 = vmatprep.subr.mxu0 0.0
      %1154 = vmatpush2.msra.mxu0 0.0
      %1155 = vmatprep.subr.mxu0 0.0
      %1156 = vmatpush2.msra.mxu0 0.0
      %1157 = vmatprep.subr.mxu0 %v777
      %1158 = vmatpush2.msra.mxu0 %v776
      %1159 = vmatprep.subr.mxu0 %v742
      %1160 = vmatpush2.msra.mxu0 %v741
      %1161 = vmatprep.mubr.f32.mxu0 %v811
      %1162 = vmatmul.mubr.f32.gmra.mxu0 %v171
      %v1163 = vpop.f32.mrf.mxu0
      %v1164 = vadd.f32 %v807, %v1163
      %v1165 = vpop.f32.mrf.mxu0
      %v1166 = vadd.f32 %v807, %v1165
      %1167 = vdwg.mxu0
      %1168 = vmatprep.subr.mxu0 %v709
      %1169 = vmatpush1.msra.mxu0 %v708
      %1170 = vmatprep.subr.mxu0 %v674
      %1171 = vmatpush1.msra.mxu0 %v673
      %1172 = vmatprep.subr.mxu0 %v639
      %1173 = vmatpush1.msra.mxu0 %v638
      %1174 = vmatprep.subr.mxu0 %v604
      %1175 = vmatpush1.msra.mxu0 %v603
      %1176 = vmatprep.subr.mxu0 %v569
      %1177 = vmatpush1.msra.mxu0 %v568
      %1178 = vmatprep.subr.mxu0 %v534
      %1179 = vmatpush1.msra.mxu0 %v533
      %1180 = vmatprep.subr.mxu0 %v499
      %1181 = vmatpush1.msra.mxu0 %v498
      %1182 = vmatprep.subr.mxu0 %v464
      %1183 = vmatpush1.msra.mxu0 %v463
      %1184 = vmatprep.subr.mxu0 %v429
      %1185 = vmatpush1.msra.mxu0 %v428
      %1186 = vmatprep.subr.mxu0 %v394
      %1187 = vmatpush1.msra.mxu0 %v393
      %1188 = vmatprep.subr.mxu0 %v359
      %1189 = vmatpush1.msra.mxu0 %v358
      %1190 = vmatprep.subr.mxu0 %v324
      %1191 = vmatpush1.msra.mxu0 %v323
      %1192 = vmatprep.subr.mxu0 %v289
      %1193 = vmatpush1.msra.mxu0 %v288
      %1194 = vmatprep.subr.mxu0 %v254
      %1195 = vmatpush1.msra.mxu0 %v253
      %1196 = vmatprep.subr.mxu0 %v219
      %1197 = vmatpush1.msra.mxu0 %v218
      %1198 = vmatprep.subr.mxu0 %v184
      %1199 = vmatpush1.msra.mxu0 %v183
      %1200 = vmatprep.subr.mxu0 0.0
      %1201 = vmatpush2.msra.mxu0 0.0
      %1202 = vmatprep.subr.mxu0 0.0
      %1203 = vmatpush2.msra.mxu0 0.0
      %1204 = vmatprep.subr.mxu0 0.0
      %1205 = vmatpush2.msra.mxu0 0.0
      %1206 = vmatprep.subr.mxu0 0.0
      %1207 = vmatpush2.msra.mxu0 0.0
      %1208 = vmatprep.subr.mxu0 0.0
      %1209 = vmatpush2.msra.mxu0 0.0
      %1210 = vmatprep.subr.mxu0 0.0
      %1211 = vmatpush2.msra.mxu0 0.0
      %1212 = vmatprep.subr.mxu0 0.0
      %1213 = vmatpush2.msra.mxu0 0.0
      %1214 = vmatprep.subr.mxu0 0.0
      %1215 = vmatpush2.msra.mxu0 0.0
      %1216 = vmatprep.subr.mxu0 0.0
      %1217 = vmatpush2.msra.mxu0 0.0
      %1218 = vmatprep.subr.mxu0 0.0
      %1219 = vmatpush2.msra.mxu0 0.0
      %1220 = vmatprep.subr.mxu0 0.0
      %1221 = vmatpush2.msra.mxu0 0.0
      %1222 = vmatprep.subr.mxu0 0.0
      %1223 = vmatpush2.msra.mxu0 0.0
      %1224 = vmatprep.subr.mxu0 0.0
      %1225 = vmatpush2.msra.mxu0 0.0
      %1226 = vmatprep.subr.mxu0 0.0
      %1227 = vmatpush2.msra.mxu0 0.0
      %1228 = vmatprep.subr.mxu0 %v779
      %1229 = vmatpush2.msra.mxu0 %v778
      %1230 = vmatprep.subr.mxu0 %v744
      %1231 = vmatpush2.msra.mxu0 %v743
      %1232 = vmatprep.mubr.f32.mxu0 %v811
      %1233 = vmatmul.mubr.f32.gmra.mxu0 %v171
      %v1234 = vpop.f32.mrf.mxu0
      %v1235 = vadd.f32 %v807, %v1234
      %v1236 = vpop.f32.mrf.mxu0
      %v1237 = vadd.f32 %v807, %v1236
      %1238 = vdwg.mxu0
      %1239 = vmatprep.subr.mxu0 %v711
      %1240 = vmatpush1.msra.mxu0 %v710
      %1241 = vmatprep.subr.mxu0 %v676
      %1242 = vmatpush1.msra.mxu0 %v675
      %1243 = vmatprep.subr.mxu0 %v641
      %1244 = vmatpush1.msra.mxu0 %v640
      %1245 = vmatprep.subr.mxu0 %v606
      %1246 = vmatpush1.msra.mxu0 %v605
      %1247 = vmatprep.subr.mxu0 %v571
      %1248 = vmatpush1.msra.mxu0 %v570
      %1249 = vmatprep.subr.mxu0 %v536
      %1250 = vmatpush1.msra.mxu0 %v535
      %1251 = vmatprep.subr.mxu0 %v501
      %1252 = vmatpush1.msra.mxu0 %v500
      %1253 = vmatprep.subr.mxu0 %v466
      %1254 = vmatpush1.msra.mxu0 %v465
      %1255 = vmatprep.subr.mxu0 %v431
      %1256 = vmatpush1.msra.mxu0 %v430
      %1257 = vmatprep.subr.mxu0 %v396
      %1258 = vmatpush1.msra.mxu0 %v395
      %1259 = vmatprep.subr.mxu0 %v361
      %1260 = vmatpush1.msra.mxu0 %v360
      %1261 = vmatprep.subr.mxu0 %v326
      %1262 = vmatpush1.msra.mxu0 %v325
      %1263 = vmatprep.subr.mxu0 %v291
      %1264 = vmatpush1.msra.mxu0 %v290
      %1265 = vmatprep.subr.mxu0 %v256
      %1266 = vmatpush1.msra.mxu0 %v255
      %1267 = vmatprep.subr.mxu0 %v221
      %1268 = vmatpush1.msra.mxu0 %v220
      %1269 = vmatprep.subr.mxu0 %v186
      %1270 = vmatpush1.msra.mxu0 %v185
      %1271 = vmatprep.subr.mxu0 0.0
      %1272 = vmatpush2.msra.mxu0 0.0
      %1273 = vmatprep.subr.mxu0 0.0
      %1274 = vmatpush2.msra.mxu0 0.0
      %1275 = vmatprep.subr.mxu0 0.0
      %1276 = vmatpush2.msra.mxu0 0.0
      %1277 = vmatprep.subr.mxu0 0.0
      %1278 = vmatpush2.msra.mxu0 0.0
      %1279 = vmatprep.subr.mxu0 0.0
      %1280 = vmatpush2.msra.mxu0 0.0
      %1281 = vmatprep.subr.mxu0 0.0
      %1282 = vmatpush2.msra.mxu0 0.0
      %1283 = vmatprep.subr.mxu0 0.0
      %1284 = vmatpush2.msra.mxu0 0.0
      %1285 = vmatprep.subr.mxu0 0.0
      %1286 = vmatpush2.msra.mxu0 0.0
      %1287 = vmatprep.subr.mxu0 0.0
      %1288 = vmatpush2.msra.mxu0 0.0
      %1289 = vmatprep.subr.mxu0 0.0
      %1290 = vmatpush2.msra.mxu0 0.0
      %1291 = vmatprep.subr.mxu0 0.0
      %1292 = vmatpush2.msra.mxu0 0.0
      %1293 = vmatprep.subr.mxu0 0.0
      %1294 = vmatpush2.msra.mxu0 0.0
      %1295 = vmatprep.subr.mxu0 0.0
      %1296 = vmatpush2.msra.mxu0 0.0
      %1297 = vmatprep.subr.mxu0 0.0
      %1298 = vmatpush2.msra.mxu0 0.0
      %1299 = vmatprep.subr.mxu0 %v781
      %1300 = vmatpush2.msra.mxu0 %v780
      %1301 = vmatprep.subr.mxu0 %v746
      %1302 = vmatpush2.msra.mxu0 %v745
      %1303 = vmatprep.mubr.f32.mxu0 %v811
      %1304 = vmatmul.mubr.f32.gmra.mxu0 %v171
      %v1305 = vpop.f32.mrf.mxu0
      %v1306 = vadd.f32 %v807, %v1305
      %v1307 = vpop.f32.mrf.mxu0
      %v1308 = vadd.f32 %v807, %v1307
      %1309 = vdwg.mxu0
      %1310 = vmatprep.subr.mxu0 %v713
      %1311 = vmatpush1.msra.mxu0 %v712
      %1312 = vmatprep.subr.mxu0 %v678
      %1313 = vmatpush1.msra.mxu0 %v677
      %1314 = vmatprep.subr.mxu0 %v643
      %1315 = vmatpush1.msra.mxu0 %v642
      %1316 = vmatprep.subr.mxu0 %v608
      %1317 = vmatpush1.msra.mxu0 %v607
      %1318 = vmatprep.subr.mxu0 %v573
      %1319 = vmatpush1.msra.mxu0 %v572
      %1320 = vmatprep.subr.mxu0 %v538
      %1321 = vmatpush1.msra.mxu0 %v537
      %1322 = vmatprep.subr.mxu0 %v503
      %1323 = vmatpush1.msra.mxu0 %v502
      %1324 = vmatprep.subr.mxu0 %v468
      %1325 = vmatpush1.msra.mxu0 %v467
      %1326 = vmatprep.subr.mxu0 %v433
      %1327 = vmatpush1.msra.mxu0 %v432
      %1328 = vmatprep.subr.mxu0 %v398
      %1329 = vmatpush1.msra.mxu0 %v397
      %1330 = vmatprep.subr.mxu0 %v363
      %1331 = vmatpush1.msra.mxu0 %v362
      %1332 = vmatprep.subr.mxu0 %v328
      %1333 = vmatpush1.msra.mxu0 %v327
      %1334 = vmatprep.subr.mxu0 %v293
      %1335 = vmatpush1.msra.mxu0 %v292
      %1336 = vmatprep.subr.mxu0 %v258
      %1337 = vmatpush1.msra.mxu0 %v257
      %1338 = vmatprep.subr.mxu0 %v223
      %1339 = vmatpush1.msra.mxu0 %v222
      %1340 = vmatprep.subr.mxu0 %v188
      %1341 = vmatpush1.msra.mxu0 %v187
      %1342 = vmatprep.subr.mxu0 0.0
      %1343 = vmatpush2.msra.mxu0 0.0
      %1344 = vmatprep.subr.mxu0 0.0
      %1345 = vmatpush2.msra.mxu0 0.0
      %1346 = vmatprep.subr.mxu0 0.0
      %1347 = vmatpush2.msra.mxu0 0.0
      %1348 = vmatprep.subr.mxu0 0.0
      %1349 = vmatpush2.msra.mxu0 0.0
      %1350 = vmatprep.subr.mxu0 0.0
      %1351 = vmatpush2.msra.mxu0 0.0
      %1352 = vmatprep.subr.mxu0 0.0
      %1353 = vmatpush2.msra.mxu0 0.0
      %1354 = vmatprep.subr.mxu0 0.0
      %1355 = vmatpush2.msra.mxu0 0.0
      %1356 = vmatprep.subr.mxu0 0.0
      %1357 = vmatpush2.msra.mxu0 0.0
      %1358 = vmatprep.subr.mxu0 0.0
      %1359 = vmatpush2.msra.mxu0 0.0
      %1360 = vmatprep.subr.mxu0 0.0
      %1361 = vmatpush2.msra.mxu0 0.0
      %1362 = vmatprep.subr.mxu0 0.0
      %1363 = vmatpush2.msra.mxu0 0.0
      %1364 = vmatprep.subr.mxu0 0.0
      %1365 = vmatpush2.msra.mxu0 0.0
      %1366 = vmatprep.subr.mxu0 0.0
      %1367 = vmatpush2.msra.mxu0 0.0
      %1368 = vmatprep.subr.mxu0 0.0
      %1369 = vmatpush2.msra.mxu0 0.0
      %1370 = vmatprep.subr.mxu0 %v783
      %1371 = vmatpush2.msra.mxu0 %v782
      %1372 = vmatprep.subr.mxu0 %v748
      %1373 = vmatpush2.msra.mxu0 %v747
      %1374 = vmatprep.mubr.f32.mxu0 %v811
      %1375 = vmatmul.mubr.f32.gmra.mxu0 %v171
      %v1376 = vpop.f32.mrf.mxu0
      %v1377 = vadd.f32 %v807, %v1376
      %v1378 = vpop.f32.mrf.mxu0
      %v1379 = vadd.f32 %v807, %v1378
      %1380 = vdwg.mxu0
      %1381 = vmatprep.subr.mxu0 %v715
      %1382 = vmatpush1.msra.mxu0 %v714
      %1383 = vmatprep.subr.mxu0 %v680
      %1384 = vmatpush1.msra.mxu0 %v679
      %1385 = vmatprep.subr.mxu0 %v645
      %1386 = vmatpush1.msra.mxu0 %v644
      %1387 = vmatprep.subr.mxu0 %v610
      %1388 = vmatpush1.msra.mxu0 %v609
      %1389 = vmatprep.subr.mxu0 %v575
      %1390 = vmatpush1.msra.mxu0 %v574
      %1391 = vmatprep.subr.mxu0 %v540
      %1392 = vmatpush1.msra.mxu0 %v539
      %1393 = vmatprep.subr.mxu0 %v505
      %1394 = vmatpush1.msra.mxu0 %v504
      %1395 = vmatprep.subr.mxu0 %v470
      %1396 = vmatpush1.msra.mxu0 %v469
      %1397 = vmatprep.subr.mxu0 %v435
      %1398 = vmatpush1.msra.mxu0 %v434
      %1399 = vmatprep.subr.mxu0 %v400
      %1400 = vmatpush1.msra.mxu0 %v399
      %1401 = vmatprep.subr.mxu0 %v365
      %1402 = vmatpush1.msra.mxu0 %v364
      %1403 = vmatprep.subr.mxu0 %v330
      %1404 = vmatpush1.msra.mxu0 %v329
      %1405 = vmatprep.subr.mxu0 %v295
      %1406 = vmatpush1.msra.mxu0 %v294
      %1407 = vmatprep.subr.mxu0 %v260
      %1408 = vmatpush1.msra.mxu0 %v259
      %1409 = vmatprep.subr.mxu0 %v225
      %1410 = vmatpush1.msra.mxu0 %v224
      %1411 = vmatprep.subr.mxu0 %v190
      %1412 = vmatpush1.msra.mxu0 %v189
      %1413 = vmatprep.subr.mxu0 0.0
      %1414 = vmatpush2.msra.mxu0 0.0
      %1415 = vmatprep.subr.mxu0 0.0
      %1416 = vmatpush2.msra.mxu0 0.0
      %1417 = vmatprep.subr.mxu0 0.0
      %1418 = vmatpush2.msra.mxu0 0.0
      %1419 = vmatprep.subr.mxu0 0.0
      %1420 = vmatpush2.msra.mxu0 0.0
      %1421 = vmatprep.subr.mxu0 0.0
      %1422 = vmatpush2.msra.mxu0 0.0
      %1423 = vmatprep.subr.mxu0 0.0
      %1424 = vmatpush2.msra.mxu0 0.0
      %1425 = vmatprep.subr.mxu0 0.0
      %1426 = vmatpush2.msra.mxu0 0.0
      %1427 = vmatprep.subr.mxu0 0.0
      %1428 = vmatpush2.msra.mxu0 0.0
      %1429 = vmatprep.subr.mxu0 0.0
      %1430 = vmatpush2.msra.mxu0 0.0
      %1431 = vmatprep.subr.mxu0 0.0
      %1432 = vmatpush2.msra.mxu0 0.0
      %1433 = vmatprep.subr.mxu0 0.0
      %1434 = vmatpush2.msra.mxu0 0.0
      %1435 = vmatprep.subr.mxu0 0.0
      %1436 = vmatpush2.msra.mxu0 0.0
      %1437 = vmatprep.subr.mxu0 0.0
      %1438 = vmatpush2.msra.mxu0 0.0
      %1439 = vmatprep.subr.mxu0 0.0
      %1440 = vmatpush2.msra.mxu0 0.0
      %1441 = vmatprep.subr.mxu0 %v785
      %1442 = vmatpush2.msra.mxu0 %v784
      %1443 = vmatprep.subr.mxu0 %v750
      %1444 = vmatpush2.msra.mxu0 %v749
      %1445 = vmatprep.mubr.f32.mxu0 %v811
      %1446 = vmatmul.mubr.f32.gmra.mxu0 %v171
      %v1447 = vpop.f32.mrf.mxu0
      %v1448 = vadd.f32 %v807, %v1447
      %v1449 = vpop.f32.mrf.mxu0
      %v1450 = vadd.f32 %v807, %v1449
      %1451 = vdwg.mxu0
      %1452 = vmatprep.subr.mxu0 %v717
      %1453 = vmatpush1.msra.mxu0 %v716
      %1454 = vmatprep.subr.mxu0 %v682
      %1455 = vmatpush1.msra.mxu0 %v681
      %1456 = vmatprep.subr.mxu0 %v647
      %1457 = vmatpush1.msra.mxu0 %v646
      %1458 = vmatprep.subr.mxu0 %v612
      %1459 = vmatpush1.msra.mxu0 %v611
      %1460 = vmatprep.subr.mxu0 %v577
      %1461 = vmatpush1.msra.mxu0 %v576
      %1462 = vmatprep.subr.mxu0 %v542
      %1463 = vmatpush1.msra.mxu0 %v541
      %1464 = vmatprep.subr.mxu0 %v507
      %1465 = vmatpush1.msra.mxu0 %v506
      %1466 = vmatprep.subr.mxu0 %v472
      %1467 = vmatpush1.msra.mxu0 %v471
      %1468 = vmatprep.subr.mxu0 %v437
      %1469 = vmatpush1.msra.mxu0 %v436
      %1470 = vmatprep.subr.mxu0 %v402
      %1471 = vmatpush1.msra.mxu0 %v401
      %1472 = vmatprep.subr.mxu0 %v367
      %1473 = vmatpush1.msra.mxu0 %v366
      %1474 = vmatprep.subr.mxu0 %v332
      %1475 = vmatpush1.msra.mxu0 %v331
      %1476 = vmatprep.subr.mxu0 %v297
      %1477 = vmatpush1.msra.mxu0 %v296
      %1478 = vmatprep.subr.mxu0 %v262
      %1479 = vmatpush1.msra.mxu0 %v261
      %1480 = vmatprep.subr.mxu0 %v227
      %1481 = vmatpush1.msra.mxu0 %v226
      %1482 = vmatprep.subr.mxu0 %v192
      %1483 = vmatpush1.msra.mxu0 %v191
      %1484 = vmatprep.subr.mxu0 0.0
      %1485 = vmatpush2.msra.mxu0 0.0
      %1486 = vmatprep.subr.mxu0 0.0
      %1487 = vmatpush2.msra.mxu0 0.0
      %1488 = vmatprep.subr.mxu0 0.0
      %1489 = vmatpush2.msra.mxu0 0.0
      %1490 = vmatprep.subr.mxu0 0.0
      %1491 = vmatpush2.msra.mxu0 0.0
      %1492 = vmatprep.subr.mxu0 0.0
      %1493 = vmatpush2.msra.mxu0 0.0
      %1494 = vmatprep.subr.mxu0 0.0
      %1495 = vmatpush2.msra.mxu0 0.0
      %1496 = vmatprep.subr.mxu0 0.0
      %1497 = vmatpush2.msra.mxu0 0.0
      %1498 = vmatprep.subr.mxu0 0.0
      %1499 = vmatpush2.msra.mxu0 0.0
      %1500 = vmatprep.subr.mxu0 0.0
      %1501 = vmatpush2.msra.mxu0 0.0
      %1502 = vmatprep.subr.mxu0 0.0
      %1503 = vmatpush2.msra.mxu0 0.0
      %1504 = vmatprep.subr.mxu0 0.0
      %1505 = vmatpush2.msra.mxu0 0.0
      %1506 = vmatprep.subr.mxu0 0.0
      %1507 = vmatpush2.msra.mxu0 0.0
      %1508 = vmatprep.subr.mxu0 0.0
      %1509 = vmatpush2.msra.mxu0 0.0
      %1510 = vmatprep.subr.mxu0 0.0
      %1511 = vmatpush2.msra.mxu0 0.0
      %1512 = vmatprep.subr.mxu0 %v787
      %1513 = vmatpush2.msra.mxu0 %v786
      %1514 = vmatprep.subr.mxu0 %v752
      %1515 = vmatpush2.msra.mxu0 %v751
      %1516 = vmatprep.mubr.f32.mxu0 %v811
      %1517 = vmatmul.mubr.f32.gmra.mxu0 %v171
      %v1518 = vpop.f32.mrf.mxu0
      %v1519 = vadd.f32 %v807, %v1518
      %v1520 = vpop.f32.mrf.mxu0
      %v1521 = vadd.f32 %v807, %v1520
      %1522 = vdwg.mxu0
      %1523 = vmatprep.subr.mxu0 %v719
      %1524 = vmatpush1.msra.mxu0 %v718
      %1525 = vmatprep.subr.mxu0 %v684
      %1526 = vmatpush1.msra.mxu0 %v683
      %1527 = vmatprep.subr.mxu0 %v649
      %1528 = vmatpush1.msra.mxu0 %v648
      %1529 = vmatprep.subr.mxu0 %v614
      %1530 = vmatpush1.msra.mxu0 %v613
      %1531 = vmatprep.subr.mxu0 %v579
      %1532 = vmatpush1.msra.mxu0 %v578
      %1533 = vmatprep.subr.mxu0 %v544
      %1534 = vmatpush1.msra.mxu0 %v543
      %1535 = vmatprep.subr.mxu0 %v509
      %1536 = vmatpush1.msra.mxu0 %v508
      %1537 = vmatprep.subr.mxu0 %v474
      %1538 = vmatpush1.msra.mxu0 %v473
      %1539 = vmatprep.subr.mxu0 %v439
      %1540 = vmatpush1.msra.mxu0 %v438
      %1541 = vmatprep.subr.mxu0 %v404
      %1542 = vmatpush1.msra.mxu0 %v403
      %1543 = vmatprep.subr.mxu0 %v369
      %1544 = vmatpush1.msra.mxu0 %v368
      %1545 = vmatprep.subr.mxu0 %v334
      %1546 = vmatpush1.msra.mxu0 %v333
      %1547 = vmatprep.subr.mxu0 %v299
      %1548 = vmatpush1.msra.mxu0 %v298
      %1549 = vmatprep.subr.mxu0 %v264
      %1550 = vmatpush1.msra.mxu0 %v263
      %1551 = vmatprep.subr.mxu0 %v229
      %1552 = vmatpush1.msra.mxu0 %v228
      %1553 = vmatprep.subr.mxu0 %v194
      %1554 = vmatpush1.msra.mxu0 %v193
      %1555 = vmatprep.subr.mxu0 0.0
      %1556 = vmatpush2.msra.mxu0 0.0
      %1557 = vmatprep.subr.mxu0 0.0
      %1558 = vmatpush2.msra.mxu0 0.0
      %1559 = vmatprep.subr.mxu0 0.0
      %1560 = vmatpush2.msra.mxu0 0.0
      %1561 = vmatprep.subr.mxu0 0.0
      %1562 = vmatpush2.msra.mxu0 0.0
      %1563 = vmatprep.subr.mxu0 0.0
      %1564 = vmatpush2.msra.mxu0 0.0
      %1565 = vmatprep.subr.mxu0 0.0
      %1566 = vmatpush2.msra.mxu0 0.0
      %1567 = vmatprep.subr.mxu0 0.0
      %1568 = vmatpush2.msra.mxu0 0.0
      %1569 = vmatprep.subr.mxu0 0.0
      %1570 = vmatpush2.msra.mxu0 0.0
      %1571 = vmatprep.subr.mxu0 0.0
      %1572 = vmatpush2.msra.mxu0 0.0
      %1573 = vmatprep.subr.mxu0 0.0
      %1574 = vmatpush2.msra.mxu0 0.0
      %1575 = vmatprep.subr.mxu0 0.0
      %1576 = vmatpush2.msra.mxu0 0.0
      %1577 = vmatprep.subr.mxu0 0.0
      %1578 = vmatpush2.msra.mxu0 0.0
      %1579 = vmatprep.subr.mxu0 0.0
      %1580 = vmatpush2.msra.mxu0 0.0
      %1581 = vmatprep.subr.mxu0 0.0
      %1582 = vmatpush2.msra.mxu0 0.0
      %1583 = vmatprep.subr.mxu0 %v789
      %1584 = vmatpush2.msra.mxu0 %v788
      %1585 = vmatprep.subr.mxu0 %v754
      %1586 = vmatpush2.msra.mxu0 %v753
      %1587 = vmatprep.mubr.f32.mxu0 %v811
      %1588 = vmatmul.mubr.f32.gmra.mxu0 %v171
      %v1589 = vpop.f32.mrf.mxu0
      %v1590 = vadd.f32 %v807, %v1589
      %v1591 = vpop.f32.mrf.mxu0
      %v1592 = vadd.f32 %v807, %v1591
      %1593 = vdwg.mxu0
      %1594 = vmatprep.subr.mxu0 %v721
      %1595 = vmatpush1.msra.mxu0 %v720
      %1596 = vmatprep.subr.mxu0 %v686
      %1597 = vmatpush1.msra.mxu0 %v685
      %1598 = vmatprep.subr.mxu0 %v651
      %1599 = vmatpush1.msra.mxu0 %v650
      %1600 = vmatprep.subr.mxu0 %v616
      %1601 = vmatpush1.msra.mxu0 %v615
      %1602 = vmatprep.subr.mxu0 %v581
      %1603 = vmatpush1.msra.mxu0 %v580
      %1604 = vmatprep.subr.mxu0 %v546
      %1605 = vmatpush1.msra.mxu0 %v545
      %1606 = vmatprep.subr.mxu0 %v511
      %1607 = vmatpush1.msra.mxu0 %v510
      %1608 = vmatprep.subr.mxu0 %v476
      %1609 = vmatpush1.msra.mxu0 %v475
      %1610 = vmatprep.subr.mxu0 %v441
      %1611 = vmatpush1.msra.mxu0 %v440
      %1612 = vmatprep.subr.mxu0 %v406
      %1613 = vmatpush1.msra.mxu0 %v405
      %1614 = vmatprep.subr.mxu0 %v371
      %1615 = vmatpush1.msra.mxu0 %v370
      %1616 = vmatprep.subr.mxu0 %v336
      %1617 = vmatpush1.msra.mxu0 %v335
      %1618 = vmatprep.subr.mxu0 %v301
      %1619 = vmatpush1.msra.mxu0 %v300
      %1620 = vmatprep.subr.mxu0 %v266
      %1621 = vmatpush1.msra.mxu0 %v265
      %1622 = vmatprep.subr.mxu0 %v231
      %1623 = vmatpush1.msra.mxu0 %v230
      %1624 = vmatprep.subr.mxu0 %v196
      %1625 = vmatpush1.msra.mxu0 %v195
      %1626 = vmatprep.subr.mxu0 0.0
      %1627 = vmatpush2.msra.mxu0 0.0
      %1628 = vmatprep.subr.mxu0 0.0
      %1629 = vmatpush2.msra.mxu0 0.0
      %1630 = vmatprep.subr.mxu0 0.0
      %1631 = vmatpush2.msra.mxu0 0.0
      %1632 = vmatprep.subr.mxu0 0.0
      %1633 = vmatpush2.msra.mxu0 0.0
      %1634 = vmatprep.subr.mxu0 0.0
      %1635 = vmatpush2.msra.mxu0 0.0
      %1636 = vmatprep.subr.mxu0 0.0
      %1637 = vmatpush2.msra.mxu0 0.0
      %1638 = vmatprep.subr.mxu0 0.0
      %1639 = vmatpush2.msra.mxu0 0.0
      %1640 = vmatprep.subr.mxu0 0.0
      %1641 = vmatpush2.msra.mxu0 0.0
      %1642 = vmatprep.subr.mxu0 0.0
      %1643 = vmatpush2.msra.mxu0 0.0
      %1644 = vmatprep.subr.mxu0 0.0
      %1645 = vmatpush2.msra.mxu0 0.0
      %1646 = vmatprep.subr.mxu0 0.0
      %1647 = vmatpush2.msra.mxu0 0.0
      %1648 = vmatprep.subr.mxu0 0.0
      %1649 = vmatpush2.msra.mxu0 0.0
      %1650 = vmatprep.subr.mxu0 0.0
      %1651 = vmatpush2.msra.mxu0 0.0
      %1652 = vmatprep.subr.mxu0 0.0
      %1653 = vmatpush2.msra.mxu0 0.0
      %1654 = vmatprep.subr.mxu0 %v791
      %1655 = vmatpush2.msra.mxu0 %v790
      %1656 = vmatprep.subr.mxu0 %v756
      %1657 = vmatpush2.msra.mxu0 %v755
      %1658 = vmatprep.mubr.f32.mxu0 %v811
      %1659 = vmatmul.mubr.f32.gmra.mxu0 %v171
      %v1660 = vpop.f32.mrf.mxu0
      %v1661 = vadd.f32 %v807, %v1660
      %v1662 = vpop.f32.mrf.mxu0
      %v1663 = vadd.f32 %v807, %v1662
      %1664 = vdwg.mxu0
      %1665 = vmatprep.subr.mxu0 %v723
      %1666 = vmatpush1.msra.mxu0 %v722
      %1667 = vmatprep.subr.mxu0 %v688
      %1668 = vmatpush1.msra.mxu0 %v687
      %1669 = vmatprep.subr.mxu0 %v653
      %1670 = vmatpush1.msra.mxu0 %v652
      %1671 = vmatprep.subr.mxu0 %v618
      %1672 = vmatpush1.msra.mxu0 %v617
      %1673 = vmatprep.subr.mxu0 %v583
      %1674 = vmatpush1.msra.mxu0 %v582
      %1675 = vmatprep.subr.mxu0 %v548
      %1676 = vmatpush1.msra.mxu0 %v547
      %1677 = vmatprep.subr.mxu0 %v513
      %1678 = vmatpush1.msra.mxu0 %v512
      %1679 = vmatprep.subr.mxu0 %v478
      %1680 = vmatpush1.msra.mxu0 %v477
      %1681 = vmatprep.subr.mxu0 %v443
      %1682 = vmatpush1.msra.mxu0 %v442
      %1683 = vmatprep.subr.mxu0 %v408
      %1684 = vmatpush1.msra.mxu0 %v407
      %1685 = vmatprep.subr.mxu0 %v373
      %1686 = vmatpush1.msra.mxu0 %v372
      %1687 = vmatprep.subr.mxu0 %v338
      %1688 = vmatpush1.msra.mxu0 %v337
      %1689 = vmatprep.subr.mxu0 %v303
      %1690 = vmatpush1.msra.mxu0 %v302
      %1691 = vmatprep.subr.mxu0 %v268
      %1692 = vmatpush1.msra.mxu0 %v267
      %1693 = vmatprep.subr.mxu0 %v233
      %1694 = vmatpush1.msra.mxu0 %v232
      %1695 = vmatprep.subr.mxu0 %v198
      %1696 = vmatpush1.msra.mxu0 %v197
      %1697 = vmatprep.subr.mxu0 0.0
      %1698 = vmatpush2.msra.mxu0 0.0
      %1699 = vmatprep.subr.mxu0 0.0
      %1700 = vmatpush2.msra.mxu0 0.0
      %1701 = vmatprep.subr.mxu0 0.0
      %1702 = vmatpush2.msra.mxu0 0.0
      %1703 = vmatprep.subr.mxu0 0.0
      %1704 = vmatpush2.msra.mxu0 0.0
      %1705 = vmatprep.subr.mxu0 0.0
      %1706 = vmatpush2.msra.mxu0 0.0
      %1707 = vmatprep.subr.mxu0 0.0
      %1708 = vmatpush2.msra.mxu0 0.0
      %1709 = vmatprep.subr.mxu0 0.0
      %1710 = vmatpush2.msra.mxu0 0.0
      %1711 = vmatprep.subr.mxu0 0.0
      %1712 = vmatpush2.msra.mxu0 0.0
      %1713 = vmatprep.subr.mxu0 0.0
      %1714 = vmatpush2.msra.mxu0 0.0
      %1715 = vmatprep.subr.mxu0 0.0
      %1716 = vmatpush2.msra.mxu0 0.0
      %1717 = vmatprep.subr.mxu0 0.0
      %1718 = vmatpush2.msra.mxu0 0.0
      %1719 = vmatprep.subr.mxu0 0.0
      %1720 = vmatpush2.msra.mxu0 0.0
      %1721 = vmatprep.subr.mxu0 0.0
      %1722 = vmatpush2.msra.mxu0 0.0
      %1723 = vmatprep.subr.mxu0 0.0
      %1724 = vmatpush2.msra.mxu0 0.0
      %1725 = vmatprep.subr.mxu0 %v793
      %1726 = vmatpush2.msra.mxu0 %v792
      %1727 = vmatprep.subr.mxu0 %v758
      %1728 = vmatpush2.msra.mxu0 %v757
      %1729 = vmatprep.mubr.f32.mxu0 %v811
      %1730 = vmatmul.mubr.f32.gmra.mxu0 %v171
      %v1731 = vpop.f32.mrf.mxu0
      %v1732 = vadd.f32 %v807, %v1731
      %v1733 = vpop.f32.mrf.mxu0
      %v1734 = vadd.f32 %v807, %v1733
      %1735 = vdwg.mxu0
      %1736 = vmatprep.subr.mxu0 %v725
      %1737 = vmatpush1.msra.mxu0 %v724
      %1738 = vmatprep.subr.mxu0 %v690
      %1739 = vmatpush1.msra.mxu0 %v689
      %1740 = vmatprep.subr.mxu0 %v655
      %1741 = vmatpush1.msra.mxu0 %v654
      %1742 = vmatprep.subr.mxu0 %v620
      %1743 = vmatpush1.msra.mxu0 %v619
      %1744 = vmatprep.subr.mxu0 %v585
      %1745 = vmatpush1.msra.mxu0 %v584
      %1746 = vmatprep.subr.mxu0 %v550
      %1747 = vmatpush1.msra.mxu0 %v549
      %1748 = vmatprep.subr.mxu0 %v515
      %1749 = vmatpush1.msra.mxu0 %v514
      %1750 = vmatprep.subr.mxu0 %v480
      %1751 = vmatpush1.msra.mxu0 %v479
      %1752 = vmatprep.subr.mxu0 %v445
      %1753 = vmatpush1.msra.mxu0 %v444
      %1754 = vmatprep.subr.mxu0 %v410
      %1755 = vmatpush1.msra.mxu0 %v409
      %1756 = vmatprep.subr.mxu0 %v375
      %1757 = vmatpush1.msra.mxu0 %v374
      %1758 = vmatprep.subr.mxu0 %v340
      %1759 = vmatpush1.msra.mxu0 %v339
      %1760 = vmatprep.subr.mxu0 %v305
      %1761 = vmatpush1.msra.mxu0 %v304
      %1762 = vmatprep.subr.mxu0 %v270
      %1763 = vmatpush1.msra.mxu0 %v269
      %1764 = vmatprep.subr.mxu0 %v235
      %1765 = vmatpush1.msra.mxu0 %v234
      %1766 = vmatprep.subr.mxu0 %v200
      %1767 = vmatpush1.msra.mxu0 %v199
      %1768 = vmatprep.subr.mxu0 0.0
      %1769 = vmatpush2.msra.mxu0 0.0
      %1770 = vmatprep.subr.mxu0 0.0
      %1771 = vmatpush2.msra.mxu0 0.0
      %1772 = vmatprep.subr.mxu0 0.0
      %1773 = vmatpush2.msra.mxu0 0.0
      %1774 = vmatprep.subr.mxu0 0.0
      %1775 = vmatpush2.msra.mxu0 0.0
      %1776 = vmatprep.subr.mxu0 0.0
      %1777 = vmatpush2.msra.mxu0 0.0
      %1778 = vmatprep.subr.mxu0 0.0
      %1779 = vmatpush2.msra.mxu0 0.0
      %1780 = vmatprep.subr.mxu0 0.0
      %1781 = vmatpush2.msra.mxu0 0.0
      %1782 = vmatprep.subr.mxu0 0.0
      %1783 = vmatpush2.msra.mxu0 0.0
      %1784 = vmatprep.subr.mxu0 0.0
      %1785 = vmatpush2.msra.mxu0 0.0
      %1786 = vmatprep.subr.mxu0 0.0
      %1787 = vmatpush2.msra.mxu0 0.0
      %1788 = vmatprep.subr.mxu0 0.0
      %1789 = vmatpush2.msra.mxu0 0.0
      %1790 = vmatprep.subr.mxu0 0.0
      %1791 = vmatpush2.msra.mxu0 0.0
      %1792 = vmatprep.subr.mxu0 0.0
      %1793 = vmatpush2.msra.mxu0 0.0
      %1794 = vmatprep.subr.mxu0 0.0
      %1795 = vmatpush2.msra.mxu0 0.0
      %1796 = vmatprep.subr.mxu0 %v795
      %1797 = vmatpush2.msra.mxu0 %v794
      %1798 = vmatprep.subr.mxu0 %v760
      %1799 = vmatpush2.msra.mxu0 %v759
      %1800 = vmatprep.mubr.f32.mxu0 %v811
      %1801 = vmatmul.mubr.f32.gmra.mxu0 %v171
      %v1802 = vpop.f32.mrf.mxu0
      %v1803 = vadd.f32 %v807, %v1802
      %v1804 = vpop.f32.mrf.mxu0
      %v1805 = vadd.f32 %v807, %v1804
      %1806 = vdwg.mxu0
      %1807 = vmatprep.subr.mxu0 %v727
      %1808 = vmatpush1.msra.mxu0 %v726
      %1809 = vmatprep.subr.mxu0 %v692
      %1810 = vmatpush1.msra.mxu0 %v691
      %1811 = vmatprep.subr.mxu0 %v657
      %1812 = vmatpush1.msra.mxu0 %v656
      %1813 = vmatprep.subr.mxu0 %v622
      %1814 = vmatpush1.msra.mxu0 %v621
      %1815 = vmatprep.subr.mxu0 %v587
      %1816 = vmatpush1.msra.mxu0 %v586
      %1817 = vmatprep.subr.mxu0 %v552
      %1818 = vmatpush1.msra.mxu0 %v551
      %1819 = vmatprep.subr.mxu0 %v517
      %1820 = vmatpush1.msra.mxu0 %v516
      %1821 = vmatprep.subr.mxu0 %v482
      %1822 = vmatpush1.msra.mxu0 %v481
      %1823 = vmatprep.subr.mxu0 %v447
      %1824 = vmatpush1.msra.mxu0 %v446
      %1825 = vmatprep.subr.mxu0 %v412
      %1826 = vmatpush1.msra.mxu0 %v411
      %1827 = vmatprep.subr.mxu0 %v377
      %1828 = vmatpush1.msra.mxu0 %v376
      %1829 = vmatprep.subr.mxu0 %v342
      %1830 = vmatpush1.msra.mxu0 %v341
      %1831 = vmatprep.subr.mxu0 %v307
      %1832 = vmatpush1.msra.mxu0 %v306
      %1833 = vmatprep.subr.mxu0 %v272
      %1834 = vmatpush1.msra.mxu0 %v271
      %1835 = vmatprep.subr.mxu0 %v237
      %1836 = vmatpush1.msra.mxu0 %v236
      %1837 = vmatprep.subr.mxu0 %v202
      %1838 = vmatpush1.msra.mxu0 %v201
      %1839 = vmatprep.subr.mxu0 0.0
      %1840 = vmatpush2.msra.mxu0 0.0
      %1841 = vmatprep.subr.mxu0 0.0
      %1842 = vmatpush2.msra.mxu0 0.0
      %1843 = vmatprep.subr.mxu0 0.0
      %1844 = vmatpush2.msra.mxu0 0.0
      %1845 = vmatprep.subr.mxu0 0.0
      %1846 = vmatpush2.msra.mxu0 0.0
      %1847 = vmatprep.subr.mxu0 0.0
      %1848 = vmatpush2.msra.mxu0 0.0
      %1849 = vmatprep.subr.mxu0 0.0
      %1850 = vmatpush2.msra.mxu0 0.0
      %1851 = vmatprep.subr.mxu0 0.0
      %1852 = vmatpush2.msra.mxu0 0.0
      %1853 = vmatprep.subr.mxu0 0.0
      %1854 = vmatpush2.msra.mxu0 0.0
      %1855 = vmatprep.subr.mxu0 0.0
      %1856 = vmatpush2.msra.mxu0 0.0
      %1857 = vmatprep.subr.mxu0 0.0
      %1858 = vmatpush2.msra.mxu0 0.0
      %1859 = vmatprep.subr.mxu0 0.0
      %1860 = vmatpush2.msra.mxu0 0.0
      %1861 = vmatprep.subr.mxu0 0.0
      %1862 = vmatpush2.msra.mxu0 0.0
      %1863 = vmatprep.subr.mxu0 0.0
      %1864 = vmatpush2.msra.mxu0 0.0
      %1865 = vmatprep.subr.mxu0 0.0
      %1866 = vmatpush2.msra.mxu0 0.0
      %1867 = vmatprep.subr.mxu0 %v797
      %1868 = vmatpush2.msra.mxu0 %v796
      %1869 = vmatprep.subr.mxu0 %v762
      %1870 = vmatpush2.msra.mxu0 %v761
      %1871 = vmatprep.mubr.f32.mxu0 %v811
      %1872 = vmatmul.mubr.f32.gmra.mxu0 %v171
      %v1873 = vpop.f32.mrf.mxu0
      %v1874 = vadd.f32 %v807, %v1873
      %v1875 = vpop.f32.mrf.mxu0
      %v1876 = vadd.f32 %v807, %v1875
      %1877 = vdwg.mxu0
      %1878 = vmatprep.subr.mxu0 %v729
      %1879 = vmatpush1.msra.mxu0 %v728
      %1880 = vmatprep.subr.mxu0 %v694
      %1881 = vmatpush1.msra.mxu0 %v693
      %1882 = vmatprep.subr.mxu0 %v659
      %1883 = vmatpush1.msra.mxu0 %v658
      %1884 = vmatprep.subr.mxu0 %v624
      %1885 = vmatpush1.msra.mxu0 %v623
      %1886 = vmatprep.subr.mxu0 %v589
      %1887 = vmatpush1.msra.mxu0 %v588
      %1888 = vmatprep.subr.mxu0 %v554
      %1889 = vmatpush1.msra.mxu0 %v553
      %1890 = vmatprep.subr.mxu0 %v519
      %1891 = vmatpush1.msra.mxu0 %v518
      %1892 = vmatprep.subr.mxu0 %v484
      %1893 = vmatpush1.msra.mxu0 %v483
      %1894 = vmatprep.subr.mxu0 %v449
      %1895 = vmatpush1.msra.mxu0 %v448
      %1896 = vmatprep.subr.mxu0 %v414
      %1897 = vmatpush1.msra.mxu0 %v413
      %1898 = vmatprep.subr.mxu0 %v379
      %1899 = vmatpush1.msra.mxu0 %v378
      %1900 = vmatprep.subr.mxu0 %v344
      %1901 = vmatpush1.msra.mxu0 %v343
      %1902 = vmatprep.subr.mxu0 %v309
      %1903 = vmatpush1.msra.mxu0 %v308
      %1904 = vmatprep.subr.mxu0 %v274
      %1905 = vmatpush1.msra.mxu0 %v273
      %1906 = vmatprep.subr.mxu0 %v239
      %1907 = vmatpush1.msra.mxu0 %v238
      %1908 = vmatprep.subr.mxu0 %v204
      %1909 = vmatpush1.msra.mxu0 %v203
      %1910 = vmatprep.subr.mxu0 0.0
      %1911 = vmatpush2.msra.mxu0 0.0
      %1912 = vmatprep.subr.mxu0 0.0
      %1913 = vmatpush2.msra.mxu0 0.0
      %1914 = vmatprep.subr.mxu0 0.0
      %1915 = vmatpush2.msra.mxu0 0.0
      %1916 = vmatprep.subr.mxu0 0.0
      %1917 = vmatpush2.msra.mxu0 0.0
      %1918 = vmatprep.subr.mxu0 0.0
      %1919 = vmatpush2.msra.mxu0 0.0
      %1920 = vmatprep.subr.mxu0 0.0
      %1921 = vmatpush2.msra.mxu0 0.0
      %1922 = vmatprep.subr.mxu0 0.0
      %1923 = vmatpush2.msra.mxu0 0.0
      %1924 = vmatprep.subr.mxu0 0.0
      %1925 = vmatpush2.msra.mxu0 0.0
      %1926 = vmatprep.subr.mxu0 0.0
      %1927 = vmatpush2.msra.mxu0 0.0
      %1928 = vmatprep.subr.mxu0 0.0
      %1929 = vmatpush2.msra.mxu0 0.0
      %1930 = vmatprep.subr.mxu0 0.0
      %1931 = vmatpush2.msra.mxu0 0.0
      %1932 = vmatprep.subr.mxu0 0.0
      %1933 = vmatpush2.msra.mxu0 0.0
      %1934 = vmatprep.subr.mxu0 0.0
      %1935 = vmatpush2.msra.mxu0 0.0
      %1936 = vmatprep.subr.mxu0 0.0
      %1937 = vmatpush2.msra.mxu0 0.0
      %1938 = vmatprep.subr.mxu0 %v799
      %1939 = vmatpush2.msra.mxu0 %v798
      %1940 = vmatprep.subr.mxu0 %v764
      %1941 = vmatpush2.msra.mxu0 %v763
      %1942 = vmatprep.mubr.f32.mxu0 %v811
      %1943 = vmatmul.mubr.f32.gmra.mxu0 %v171
      %v1944 = vpop.f32.mrf.mxu0
      %v1945 = vadd.f32 %v807, %v1944
      %v1946 = vpop.f32.mrf.mxu0
      %v1947 = vadd.f32 %v807, %v1946
      %1948 = vdwg.mxu0
      %1949 = vmatprep.subr.mxu0 %v731
      %1950 = vmatpush1.msra.mxu0 %v730
      %1951 = vmatprep.subr.mxu0 %v696
      %1952 = vmatpush1.msra.mxu0 %v695
      %1953 = vmatprep.subr.mxu0 %v661
      %1954 = vmatpush1.msra.mxu0 %v660
      %1955 = vmatprep.subr.mxu0 %v626
      %1956 = vmatpush1.msra.mxu0 %v625
      %1957 = vmatprep.subr.mxu0 %v591
      %1958 = vmatpush1.msra.mxu0 %v590
      %1959 = vmatprep.subr.mxu0 %v556
      %1960 = vmatpush1.msra.mxu0 %v555
      %1961 = vmatprep.subr.mxu0 %v521
      %1962 = vmatpush1.msra.mxu0 %v520
      %1963 = vmatprep.subr.mxu0 %v486
      %1964 = vmatpush1.msra.mxu0 %v485
      %1965 = vmatprep.subr.mxu0 %v451
      %1966 = vmatpush1.msra.mxu0 %v450
      %1967 = vmatprep.subr.mxu0 %v416
      %1968 = vmatpush1.msra.mxu0 %v415
      %1969 = vmatprep.subr.mxu0 %v381
      %1970 = vmatpush1.msra.mxu0 %v380
      %1971 = vmatprep.subr.mxu0 %v346
      %1972 = vmatpush1.msra.mxu0 %v345
      %1973 = vmatprep.subr.mxu0 %v311
      %1974 = vmatpush1.msra.mxu0 %v310
      %1975 = vmatprep.subr.mxu0 %v276
      %1976 = vmatpush1.msra.mxu0 %v275
      %1977 = vmatprep.subr.mxu0 %v241
      %1978 = vmatpush1.msra.mxu0 %v240
      %1979 = vmatprep.subr.mxu0 %v206
      %1980 = vmatpush1.msra.mxu0 %v205
      %1981 = vmatprep.subr.mxu0 0.0
      %1982 = vmatpush2.msra.mxu0 0.0
      %1983 = vmatprep.subr.mxu0 0.0
      %1984 = vmatpush2.msra.mxu0 0.0
      %1985 = vmatprep.subr.mxu0 0.0
      %1986 = vmatpush2.msra.mxu0 0.0
      %1987 = vmatprep.subr.mxu0 0.0
      %1988 = vmatpush2.msra.mxu0 0.0
      %1989 = vmatprep.subr.mxu0 0.0
      %1990 = vmatpush2.msra.mxu0 0.0
      %1991 = vmatprep.subr.mxu0 0.0
      %1992 = vmatpush2.msra.mxu0 0.0
      %1993 = vmatprep.subr.mxu0 0.0
      %1994 = vmatpush2.msra.mxu0 0.0
      %1995 = vmatprep.subr.mxu0 0.0
      %1996 = vmatpush2.msra.mxu0 0.0
      %1997 = vmatprep.subr.mxu0 0.0
      %1998 = vmatpush2.msra.mxu0 0.0
      %1999 = vmatprep.subr.mxu0 0.0
      %2000 = vmatpush2.msra.mxu0 0.0
      %2001 = vmatprep.subr.mxu0 0.0
      %2002 = vmatpush2.msra.mxu0 0.0
      %2003 = vmatprep.subr.mxu0 0.0
      %2004 = vmatpush2.msra.mxu0 0.0
      %2005 = vmatprep.subr.mxu0 0.0
      %2006 = vmatpush2.msra.mxu0 0.0
      %2007 = vmatprep.subr.mxu0 0.0
      %2008 = vmatpush2.msra.mxu0 0.0
      %2009 = vmatprep.subr.mxu0 %v801
      %2010 = vmatpush2.msra.mxu0 %v800
      %2011 = vmatprep.subr.mxu0 %v766
      %2012 = vmatpush2.msra.mxu0 %v765
      %2013 = vmatprep.mubr.f32.mxu0 %v811
      %2014 = vmatmul.mubr.f32.gmra.mxu0 %v171
      %v2015 = vpop.f32.mrf.mxu0
      %v2016 = vadd.f32 %v807, %v2015
      %v2017 = vpop.f32.mrf.mxu0
      %v2018 = vadd.f32 %v807, %v2017
      %2019 = vdwg.mxu0
      %2020 = vmatprep.subr.mxu0 0.0
      %2021 = vmatpush1.msra.mxu0 %v732
      %2022 = vmatprep.subr.mxu0 0.0
      %2023 = vmatpush1.msra.mxu0 %v697
      %2024 = vmatprep.subr.mxu0 0.0
      %2025 = vmatpush1.msra.mxu0 %v662
      %2026 = vmatprep.subr.mxu0 0.0
      %2027 = vmatpush1.msra.mxu0 %v627
      %2028 = vmatprep.subr.mxu0 0.0
      %2029 = vmatpush1.msra.mxu0 %v592
      %2030 = vmatprep.subr.mxu0 0.0
      %2031 = vmatpush1.msra.mxu0 %v557
      %2032 = vmatprep.subr.mxu0 0.0
      %2033 = vmatpush1.msra.mxu0 %v522
      %2034 = vmatprep.subr.mxu0 0.0
      %2035 = vmatpush1.msra.mxu0 %v487
      %2036 = vmatprep.subr.mxu0 0.0
      %2037 = vmatpush1.msra.mxu0 %v452
      %2038 = vmatprep.subr.mxu0 0.0
      %2039 = vmatpush1.msra.mxu0 %v417
      %2040 = vmatprep.subr.mxu0 0.0
      %2041 = vmatpush1.msra.mxu0 %v382
      %2042 = vmatprep.subr.mxu0 0.0
      %2043 = vmatpush1.msra.mxu0 %v347
      %2044 = vmatprep.subr.mxu0 0.0
      %2045 = vmatpush1.msra.mxu0 %v312
      %2046 = vmatprep.subr.mxu0 0.0
      %2047 = vmatpush1.msra.mxu0 %v277
      %2048 = vmatprep.subr.mxu0 0.0
      %2049 = vmatpush1.msra.mxu0 %v242
      %2050 = vmatprep.subr.mxu0 0.0
      %2051 = vmatpush1.msra.mxu0 %v207
      %2052 = vmatprep.subr.mxu0 0.0
      %2053 = vmatpush2.msra.mxu0 0.0
      %2054 = vmatprep.subr.mxu0 0.0
      %2055 = vmatpush2.msra.mxu0 0.0
      %2056 = vmatprep.subr.mxu0 0.0
      %2057 = vmatpush2.msra.mxu0 0.0
      %2058 = vmatprep.subr.mxu0 0.0
      %2059 = vmatpush2.msra.mxu0 0.0
      %2060 = vmatprep.subr.mxu0 0.0
      %2061 = vmatpush2.msra.mxu0 0.0
      %2062 = vmatprep.subr.mxu0 0.0
      %2063 = vmatpush2.msra.mxu0 0.0
      %2064 = vmatprep.subr.mxu0 0.0
      %2065 = vmatpush2.msra.mxu0 0.0
      %2066 = vmatprep.subr.mxu0 0.0
      %2067 = vmatpush2.msra.mxu0 0.0
      %2068 = vmatprep.subr.mxu0 0.0
      %2069 = vmatpush2.msra.mxu0 0.0
      %2070 = vmatprep.subr.mxu0 0.0
      %2071 = vmatpush2.msra.mxu0 0.0
      %2072 = vmatprep.subr.mxu0 0.0
      %2073 = vmatpush2.msra.mxu0 0.0
      %2074 = vmatprep.subr.mxu0 0.0
      %2075 = vmatpush2.msra.mxu0 0.0
      %2076 = vmatprep.subr.mxu0 0.0
      %2077 = vmatpush2.msra.mxu0 0.0
      %2078 = vmatprep.subr.mxu0 0.0
      %2079 = vmatpush2.msra.mxu0 0.0
      %2080 = vmatprep.subr.mxu0 0.0
      %2081 = vmatpush2.msra.mxu0 %v802
      %2082 = vmatprep.subr.mxu0 0.0
      %2083 = vmatpush2.msra.mxu0 %v767
      %2084 = vmatprep.mubr.f32.mxu0 %v811
      %2085 = vmatmul.mubr.f32.gmra.mxu0 %v171
      %v2086 = vpop.f32.mrf.mxu0
      %v2087 = vadd.f32 %v807, %v2086
      %v2088 = vpop.f32.mrf.mxu0
      %2089 = vdwg.mxu0
      %v2090 = vmax.f32 %v880, 0.0
      %v2091 = vmax.f32 %v882, 0.0
      %v2092 = vmax.f32 %v951, 0.0
      %v2093 = vmax.f32 %v953, 0.0
      %v2094 = vmax.f32 %v1022, 0.0
      %v2095 = vmax.f32 %v1024, 0.0
      %v2096 = vmax.f32 %v1093, 0.0
      %v2097 = vmax.f32 %v1095, 0.0
      %v2098 = vmax.f32 %v1164, 0.0
      %v2099 = vmax.f32 %v1166, 0.0
      %v2100 = vmax.f32 %v1235, 0.0
      %v2101 = vmax.f32 %v1237, 0.0
      %v2102 = vmax.f32 %v1306, 0.0
      %v2103 = vmax.f32 %v1308, 0.0
      %v2104 = vmax.f32 %v1377, 0.0
      %v2105 = vmax.f32 %v1379, 0.0
      %v2106 = vmax.f32 %v1448, 0.0
      %v2107 = vmax.f32 %v1450, 0.0
      %v2108 = vmax.f32 %v1519, 0.0
      %v2109 = vmax.f32 %v1521, 0.0
      %v2110 = vmax.f32 %v1590, 0.0
      %v2111 = vmax.f32 %v1592, 0.0
      %v2112 = vmax.f32 %v1661, 0.0
      %v2113 = vmax.f32 %v1663, 0.0
      %v2114 = vmax.f32 %v1732, 0.0
      %v2115 = vmax.f32 %v1734, 0.0
      %v2116 = vmax.f32 %v1803, 0.0
      %v2117 = vmax.f32 %v1805, 0.0
      %v2118 = vmax.f32 %v1874, 0.0
      %v2119 = vmax.f32 %v1876, 0.0
      %v2120 = vmax.f32 %v1945, 0.0
      %v2121 = vmax.f32 %v1947, 0.0
      %v2122 = vmax.f32 %v2016, 0.0
      %v2123 = vmax.f32 %v2018, 0.0
      %v2124 = vmax.f32 %v2087, 0.0
      %2125 = vst [vmem:[%s170] sm:$0xff] %v2090
      %2126 = vst [vmem:[%s170 + $0x8] sm:$0xff] %v2091
      %2127 = vst [vmem:[%s170 + $0x10] sm:$0xff] %v2092
      %2128 = vst [vmem:[%s170 + $0x18] sm:$0xff] %v2093
      %2129 = vst [vmem:[%s170 + $0x20] sm:$0xff] %v2094
      %2130 = vst [vmem:[%s170 + $0x28] sm:$0xff] %v2095
      %2131 = vst [vmem:[%s170 + $0x30] sm:$0xff] %v2096
      %2132 = vst [vmem:[%s170 + $0x38] sm:$0xff] %v2097
      %2133 = vst [vmem:[%s170 + $0x40] sm:$0xff] %v2098
      %2134 = vst [vmem:[%s170 + $0x48] sm:$0xff] %v2099
      %2135 = vst [vmem:[%s170 + $0x50] sm:$0xff] %v2100
      %2136 = vst [vmem:[%s170 + $0x58] sm:$0xff] %v2101
      %2137 = vst [vmem:[%s170 + $0x60] sm:$0xff] %v2102
      %2138 = vst [vmem:[%s170 + $0x68] sm:$0xff] %v2103
      %2139 = vst [vmem:[%s170 + $0x70] sm:$0xff] %v2104
      %2140 = vst [vmem:[%s170 + $0x78] sm:$0xff] %v2105
      %2141 = vst [vmem:[%s170 + $0x80] sm:$0xff] %v2106
      %2142 = vst [vmem:[%s170 + $0x88] sm:$0xff] %v2107
      %2143 = vst [vmem:[%s170 + $0x90] sm:$0xff] %v2108
      %2144 = vst [vmem:[%s170 + $0x98] sm:$0xff] %v2109
      %2145 = vst [vmem:[%s170 + $0xa0] sm:$0xff] %v2110
      %2146 = vst [vmem:[%s170 + $0xa8] sm:$0xff] %v2111
      %2147 = vst [vmem:[%s170 + $0xb0] sm:$0xff] %v2112
      %2148 = vst [vmem:[%s170 + $0xb8] sm:$0xff] %v2113
      %2149 = vst [vmem:[%s170 + $0xc0] sm:$0xff] %v2114
      %2150 = vst [vmem:[%s170 + $0xc8] sm:$0xff] %v2115
      %2151 = vst [vmem:[%s170 + $0xd0] sm:$0xff] %v2116
      %2152 = vst [vmem:[%s170 + $0xd8] sm:$0xff] %v2117
      %2153 = vst [vmem:[%s170 + $0xe0] sm:$0xff] %v2118
      %2154 = vst [vmem:[%s170 + $0xe8] sm:$0xff] %v2119
      %2155 = vst [vmem:[%s170 + $0xf0] sm:$0xff] %v2120
      %2156 = vst [vmem:[%s170 + $0xf8] sm:$0xff] %v2121
      %2157 = vst [vmem:[%s170 + $0x100] sm:$0xff] %v2122
      %2158 = vst [vmem:[%s170 + $0x108] sm:$0xff] %v2123
      %vm2159 = vcmask 31744
      %2160 = vst.msk [vmem:[%s170 + $0x110] sm:$0xff] %vm2159, %v2124
      %p2161 = scmp.lt.s32.totalorder %s14, 1
      %s2162 = scalar_select %p2161, %s14, 1
      %s2163 = smul.addr %s2162, 35
      %s2164 = smul.addr %s2163, 8
      %s2165 = scalar_lea.vmem %s3, %s2164
      // Predicated region
      $region33: #{ev_imgs_forward.3} parent=31 // pred_check
        %p2166 = pneg %p100
      $region34: #{ev_imgs_forward.3} parent=31 // pred_check_branch
        %2168 = sbr.rel (%p2166) target = $region36
      $region35: #{ev_imgs_forward.3} parent=31 // pred_region
        _
      $region36: #{ev_imgs_forward.3} parent=31 // pred_fallthru
        _
    $region32: #{ev_imgs_forward.3} parent=5 // pred_fallthru
      _
    %p2169 = scmp.le.s32.totalorder 2, %s9
    // Predicated region
    $region37: #{ev_imgs_forward.3} parent=5 // pred_check
      %p2170 = pneg %p2169
    $region38: #{ev_imgs_forward.3} parent=5 // pred_check_branch
      %2172 = sbr.rel (%p2170) target = $region40
    $region39: #{ev_imgs_forward.3} parent=5 // pred_region
      %s2173 = ssub.s32 %s9, 2
      // Predicated region
      $region41: #{ev_imgs_forward.3} parent=39 // pred_check
        %p2174 = pneg %p106
      $region42: #{ev_imgs_forward.3} parent=39 // pred_check_branch
        %2176 = sbr.rel (%p2174) target = $region44
      $region43: #{ev_imgs_forward.3} parent=39 // pred_region
        %p2177 = scmp.lt.s32.totalorder %s15, 1
        %s2178 = scalar_select %p2177, %s15, 1
        %s2179 = smul.addr %s2178, 35
        %s2180 = smul.addr %s2179, 8
        %s2181 = scalar_lea.vmem %s3, %s2180
      $region44: #{ev_imgs_forward.3} parent=39 // pred_fallthru
        _
    $region40: #{ev_imgs_forward.3} parent=5 // pred_fallthru
      _
  $region6: #{ev_imgs_forward.3} parent=0 // loop_footer
    %s13 = sadd.s32 1, %s9
  $region7: #{ev_imgs_forward.3} parent=0 // loop_footer_branch
    %8 = sbr.rel target = $region3
  $region8: #{ev_imgs_forward.3} parent=0 // loop_exit
    _

// kernel: ev_imgs_forward.4
$region0: #{ev_imgs_forward.4}
  #allocation0 [shape = 'u32[]', space=smem, size = 0x4, offset = 0x4, fixed_abs, tag = 'smem constant byte address 0x4 - core index']
  #allocation1 [shape = 'u32[144,128]{1,0:T(1,128)}', space=vmem, size = 0x12000, scoped, tag = 'internal scratch']
  %s0 = inlined_call_operand.vmem [shape: f32[2,288,441], index: 0, kind: input, shape index: {}]
  %s1 = inlined_call_operand.vmem [shape: f32[4,288], index: 1, kind: input, shape index: {}]
  %s2 = inlined_call_operand.vmem [shape: f32[4,1], index: 2, kind: input, shape index: {}]
  %s3 = inlined_call_operand.vmem [shape: f32[2,4,441], index: 3, kind: output, shape index: {}]
  %s4 = sld [smem:[#allocation0]]
  $region45: #{ev_imgs_forward.4} parent=0
    _
  %s6 = ssub.s32 1, %s4
  %s7 = scalar_select 0, %s6, %s4
  loop: start=0, step=1, limit=4
  $region2: #{ev_imgs_forward.4} parent=0 // loop_pre_header
    _
  $region3: #{ev_imgs_forward.4} parent=0 // loop_header
    %s9 = sphi 0, %s13
    %p10 = scmp.ge.s32.totalorder %s9, 4
    %s19 = sphi 0, %s21
    %s22 = sphi 0, %s19
    %s23 = sphi 0, %s22
    %s39 = sphi 0, %s23
    %s43 = sphi 0, %s43
    %s45 = sphi 0, %s43
    %s46 = sphi 0, %s45
    %s60 = sphi 0, %s46
    %s64 = sphi 0, %s64
    %s66 = sphi 0, %s64
    %s67 = sphi 0, %s66
    %s81 = sphi 0, %s67
    %s87 = sphi 0, %s89
    %s90 = sphi 0, %s87
    %s91 = sphi 0, %s90
    %s107 = sphi 0, %s91
  $region4: #{ev_imgs_forward.4} parent=0 // loop_header_branch
    %12 = sbr.rel (%p10) target = $region8
  $region5: #{ev_imgs_forward.4} parent=0 // loop_body
    %s14 = ssub.s32 %s9, 1
    %s15 = ssub.s32 %s9, 2
    %s16 = sadd.s32 %s9, 1
    %s17 = ssub.s32 %s9, %s16
    %p18 = scmp.eq.s32.totalorder %s17, 0
    %s20 = sadd.s32 %s19, 1
    %s21 = scalar_select %p18, %s19, %s20
    %p24 = pneg %p18
    %p25 = scmp.eq.s32.totalorder %s9, 1
    %p26 = por %p24, %p25
    %p27 = scmp.ne.s32.totalorder %s19, %s22
    %p28 = scmp.eq.s32.totalorder %s9, 0
    %p29 = por %p27, %p28
    %p30 = scmp.ne.s32.totalorder %s19, %s22
    %p31 = scmp.eq.s32.totalorder %s14, 1
    %p32 = por %p30, %p31
    %p33 = scmp.ne.s32.totalorder %s22, %s23
    %p34 = scmp.eq.s32.totalorder %s14, 0
    %p35 = por %p33, %p34
    %p36 = scmp.ne.s32.totalorder %s22, %s23
    %p37 = scmp.eq.s32.totalorder %s15, 1
    %p38 = por %p36, %p37
    %p40 = scmp.ne.s32.totalorder %s23, %s39
    %p41 = scmp.eq.s32.totalorder %s15, 0
    %p42 = por %p40, %p41
    %s44 = sadd.s32 %s43, 1
    %p47 = scmp.eq.s32.totalorder %s9, 1
    %p48 = scmp.ne.s32.totalorder %s43, %s45
    %p49 = scmp.eq.s32.totalorder %s9, 0
    %p50 = por %p48, %p49
    %p51 = scmp.ne.s32.totalorder %s43, %s45
    %p52 = scmp.eq.s32.totalorder %s14, 1
    %p53 = por %p51, %p52
    %p54 = scmp.ne.s32.totalorder %s45, %s46
    %p55 = scmp.eq.s32.totalorder %s14, 0
    %p56 = por %p54, %p55
    %p57 = scmp.ne.s32.totalorder %s45, %s46
    %p58 = scmp.eq.s32.totalorder %s15, 1
    %p59 = por %p57, %p58
    %p61 = scmp.ne.s32.totalorder %s46, %s60
    %p62 = scmp.eq.s32.totalorder %s15, 0
    %p63 = por %p61, %p62
    %s65 = sadd.s32 %s64, 1
    %p68 = scmp.eq.s32.totalorder %s9, 1
    %p69 = scmp.ne.s32.totalorder %s64, %s66
    %p70 = scmp.eq.s32.totalorder %s9, 0
    %p71 = por %p69, %p70
    %p72 = scmp.ne.s32.totalorder %s64, %s66
    %p73 = scmp.eq.s32.totalorder %s14, 1
    %p74 = por %p72, %p73
    %p75 = scmp.ne.s32.totalorder %s66, %s67
    %p76 = scmp.eq.s32.totalorder %s14, 0
    %p77 = por %p75, %p76
    %p78 = scmp.ne.s32.totalorder %s66, %s67
    %p79 = scmp.eq.s32.totalorder %s15, 1
    %p80 = por %p78, %p79
    %p82 = scmp.ne.s32.totalorder %s67, %s81
    %p83 = scmp.eq.s32.totalorder %s15, 0
    %p84 = por %p82, %p83
    %s85 = ssub.s32 %s9, %s16
    %p86 = scmp.eq.s32.totalorder %s85, 0
    %s88 = sadd.s32 %s87, 1
    %s89 = scalar_select %p86, %s87, %s88
    %p92 = pneg %p86
    %p93 = scmp.eq.s32.totalorder %s9, 1
    %p94 = por %p92, %p93
    %p95 = scmp.ne.s32.totalorder %s87, %s90
    %p96 = scmp.eq.s32.totalorder %s9, 0
    %p97 = por %p95, %p96
    %p98 = scmp.ne.s32.totalorder %s87, %s90
    %p99 = scmp.eq.s32.totalorder %s14, 1
    %p100 = por %p98, %p99
    %p101 = scmp.ne.s32.totalorder %s90, %s91
    %p102 = scmp.eq.s32.totalorder %s14, 0
    %p103 = por %p101, %p102
    %p104 = scmp.ne.s32.totalorder %s90, %s91
    %p105 = scmp.eq.s32.totalorder %s15, 1
    %p106 = por %p104, %p105
    %p108 = scmp.ne.s32.totalorder %s91, %s107
    %p109 = scmp.eq.s32.totalorder %s15, 0
    %p110 = por %p108, %p109
    %p111 = scmp.le.s32.totalorder 1, %s9
    %p112 = scmp.lt.s32.totalorder %s9, 3
    %p113 = pnand %p111, %p112
    %p114 = pneg %p113
    // Predicated region
    $region9: #{ev_imgs_forward.4} parent=5 // pred_check
      _
    $region10: #{ev_imgs_forward.4} parent=5 // pred_check_branch
      %116 = sbr.rel (%p113) target = $region12
    $region11: #{ev_imgs_forward.4} parent=5 // pred_region
      %s117 = ssub.s32 %s9, 1
      // Predicated region
      $region13: #{ev_imgs_forward.4} parent=11 // pred_check
        %p118 = pneg %p56
      $region14: #{ev_imgs_forward.4} parent=11 // pred_check_branch
        %120 = sbr.rel (%p118) target = $region16
      $region15: #{ev_imgs_forward.4} parent=11 // pred_region
        _
      $region16: #{ev_imgs_forward.4} parent=11 // pred_fallthru
        _
      // Predicated region
      $region17: #{ev_imgs_forward.4} parent=11 // pred_check
        %p121 = pneg %p77
      $region18: #{ev_imgs_forward.4} parent=11 // pred_check_branch
        %123 = sbr.rel (%p121) target = $region20
      $region19: #{ev_imgs_forward.4} parent=11 // pred_region
        _
      $region20: #{ev_imgs_forward.4} parent=11 // pred_fallthru
        _
    $region12: #{ev_imgs_forward.4} parent=5 // pred_fallthru
      _
    %p124 = scmp.lt.s32.totalorder %s9, 2
    // Predicated region
    $region21: #{ev_imgs_forward.4} parent=5 // pred_check
      %p125 = pneg %p124
    $region22: #{ev_imgs_forward.4} parent=5 // pred_check_branch
      %127 = sbr.rel (%p125) target = $region24
    $region23: #{ev_imgs_forward.4} parent=5 // pred_region
      // Predicated region
      $region25: #{ev_imgs_forward.4} parent=23 // pred_check
        %p128 = pneg %p29
      $region26: #{ev_imgs_forward.4} parent=23 // pred_check_branch
        %130 = sbr.rel (%p128) target = $region28
      $region27: #{ev_imgs_forward.4} parent=23 // pred_region
        %p131 = scmp.lt.s32.totalorder %s9, 1
        %s132 = scalar_select %p131, %s9, 1
        %s133 = smul.addr %s132, 144
        %s134 = smul.addr %s133, 8
        %s135 = scalar_lea.vmem %s0, %s134
      $region28: #{ev_imgs_forward.4} parent=23 // pred_fallthru
        _
    $region24: #{ev_imgs_forward.4} parent=5 // pred_fallthru
      _
    %p136 = scmp.le.s32.totalorder 1, %s9
    %p137 = scmp.lt.s32.totalorder %s9, 3
    %p138 = pnand %p136, %p137
    %p139 = pneg %p138
    // Predicated region
    $region29: #{ev_imgs_forward.4} parent=5 // pred_check
      _
    $region30: #{ev_imgs_forward.4} parent=5 // pred_check_branch
      %141 = sbr.rel (%p138) target = $region32
    $region31: #{ev_imgs_forward.4} parent=5 // pred_region
      %s142 = ssub.s32 %s9, 1
      %p143 = scmp.lt.s32.totalorder %s14, 1
      %s144 = scalar_select %p143, %s14, 1
      %s145 = smul.addr %s144, 144
      %s146 = smul.addr %s145, 8
      %s147 = scalar_lea.vmem %s0, %s146
      %p148 = pneg %p35
      %p149 = pneg %p32
      %p150 = pneg %p56
      %p151 = pneg %p53
      %p152 = pneg %p77
      %p153 = pneg %p74
      %p154 = pneg %p103
      %p155 = pneg %p100
      %p156 = scmp.lt.s32.totalorder %s14, 1
      %s157 = scalar_select %p156, %s14, 1
      %s158 = smul.addr %s157, 4
      %s159 = smul.addr %s158, 4
      %s160 = scalar_lea.vmem %s3, %s159
      %p161 = scmp.lt.s32.totalorder %s14, 1
      %s162 = scalar_select %p161, %s14, 1
      %s163 = smul.addr %s162, 144
      %s164 = smul.addr %s163, 8
      %s165 = scalar_lea.vmem %s0, %s164
      %p166 = scmp.lt.s32.totalorder %s14, 1
      %s167 = scalar_select %p166, %s14, 1
      %s168 = smul.addr %s167, 4
      %s169 = smul.addr %s168, 4
      %s170 = scalar_lea.vmem %s3, %s169
      %v171 = vld [vmem:[%s1] sm:$0xff]
      %v172 = vld [vmem:[%s1 + $0x8] sm:$0xf]
      %v173 = vld [vmem:[%s165] sm:$0xff]
      %v174 = vld [vmem:[%s165 + $0x8] sm:$0xff]
      %v175 = vld [vmem:[%s165 + $0x10] sm:$0xff]
      %v176 = vld [vmem:[%s165 + $0x18] sm:$0xff]
      %v177 = vld [vmem:[%s165 + $0x20] sm:$0xff]
      %v178 = vld [vmem:[%s165 + $0x28] sm:$0xff]
      %v179 = vld [vmem:[%s165 + $0x30] sm:$0xff]
      %v180 = vld [vmem:[%s165 + $0x38] sm:$0xff]
      %v181 = vld [vmem:[%s165 + $0x40] sm:$0xff]
      %v182 = vld [vmem:[%s165 + $0x48] sm:$0xff]
      %v183 = vld [vmem:[%s165 + $0x50] sm:$0xff]
      %v184 = vld [vmem:[%s165 + $0x58] sm:$0xff]
      %v185 = vld [vmem:[%s165 + $0x60] sm:$0xff]
      %v186 = vld [vmem:[%s165 + $0x68] sm:$0xff]
      %v187 = vld [vmem:[%s165 + $0x70] sm:$0xff]
      %v188 = vld [vmem:[%s165 + $0x78] sm:$0xff]
      %v189 = vld [vmem:[%s165 + $0x80] sm:$0xff]
      %v190 = vld [vmem:[%s165 + $0x88] sm:$0xff]
      %v191 = vld [vmem:[%s165 + $0x90] sm:$0xff]
      %v192 = vld [vmem:[%s165 + $0x98] sm:$0xff]
      %v193 = vld [vmem:[%s165 + $0xa0] sm:$0xff]
      %v194 = vld [vmem:[%s165 + $0xa8] sm:$0xff]
      %v195 = vld [vmem:[%s165 + $0xb0] sm:$0xff]
      %v196 = vld [vmem:[%s165 + $0xb8] sm:$0xff]
      %v197 = vld [vmem:[%s165 + $0xc0] sm:$0xff]
      %v198 = vld [vmem:[%s165 + $0xc8] sm:$0xff]
      %v199 = vld [vmem:[%s165 + $0xd0] sm:$0xff]
      %v200 = vld [vmem:[%s165 + $0xd8] sm:$0xff]
      %v201 = vld [vmem:[%s165 + $0xe0] sm:$0xff]
      %v202 = vld [vmem:[%s165 + $0xe8] sm:$0xff]
      %v203 = vld [vmem:[%s165 + $0xf0] sm:$0xff]
      %v204 = vld [vmem:[%s165 + $0xf8] sm:$0xff]
      %v205 = vld [vmem:[%s165 + $0x100] sm:$0xff]
      %v206 = vld [vmem:[%s165 + $0x108] sm:$0xff]
      %v207 = vld [vmem:[%s165 + $0x110] sm:$0xff]
      %v208 = vld [vmem:[%s165 + $0x118] sm:$0xff]
      %v209 = vld [vmem:[%s165 + $0x120] sm:$0xff]
      %v210 = vld [vmem:[%s165 + $0x128] sm:$0xff]
      %v211 = vld [vmem:[%s165 + $0x130] sm:$0xff]
      %v212 = vld [vmem:[%s165 + $0x138] sm:$0xff]
      %v213 = vld [vmem:[%s165 + $0x140] sm:$0xff]
      %v214 = vld [vmem:[%s165 + $0x148] sm:$0xff]
      %v215 = vld [vmem:[%s165 + $0x150] sm:$0xff]
      %v216 = vld [vmem:[%s165 + $0x158] sm:$0xff]
      %v217 = vld [vmem:[%s165 + $0x160] sm:$0xff]
      %v218 = vld [vmem:[%s165 + $0x168] sm:$0xff]
      %v219 = vld [vmem:[%s165 + $0x170] sm:$0xff]
      %v220 = vld [vmem:[%s165 + $0x178] sm:$0xff]
      %v221 = vld [vmem:[%s165 + $0x180] sm:$0xff]
      %v222 = vld [vmem:[%s165 + $0x188] sm:$0xff]
      %v223 = vld [vmem:[%s165 + $0x190] sm:$0xff]
      %v224 = vld [vmem:[%s165 + $0x198] sm:$0xff]
      %v225 = vld [vmem:[%s165 + $0x1a0] sm:$0xff]
      %v226 = vld [vmem:[%s165 + $0x1a8] sm:$0xff]
      %v227 = vld [vmem:[%s165 + $0x1b0] sm:$0xff]
      %v228 = vld [vmem:[%s165 + $0x1b8] sm:$0xff]
      %v229 = vld [vmem:[%s165 + $0x1c0] sm:$0xff]
      %v230 = vld [vmem:[%s165 + $0x1c8] sm:$0xff]
      %v231 = vld [vmem:[%s165 + $0x1d0] sm:$0xff]
      %v232 = vld [vmem:[%s165 + $0x1d8] sm:$0xff]
      %v233 = vld [vmem:[%s165 + $0x1e0] sm:$0xff]
      %v234 = vld [vmem:[%s165 + $0x1e8] sm:$0xff]
      %v235 = vld [vmem:[%s165 + $0x1f0] sm:$0xff]
      %v236 = vld [vmem:[%s165 + $0x1f8] sm:$0xff]
      %v237 = vld [vmem:[%s165 + $0x200] sm:$0xff]
      %v238 = vld [vmem:[%s165 + $0x208] sm:$0xff]
      %v239 = vld [vmem:[%s165 + $0x210] sm:$0xff]
      %v240 = vld [vmem:[%s165 + $0x218] sm:$0xff]
      %v241 = vld [vmem:[%s165 + $0x220] sm:$0xff]
      %v242 = vld [vmem:[%s165 + $0x228] sm:$0xff]
      %v243 = vld [vmem:[%s165 + $0x230] sm:$0xff]
      %v244 = vld [vmem:[%s165 + $0x238] sm:$0xff]
      %v245 = vld [vmem:[%s165 + $0x240] sm:$0xff]
      %v246 = vld [vmem:[%s165 + $0x248] sm:$0xff]
      %v247 = vld [vmem:[%s165 + $0x250] sm:$0xff]
      %v248 = vld [vmem:[%s165 + $0x258] sm:$0xff]
      %v249 = vld [vmem:[%s165 + $0x260] sm:$0xff]
      %v250 = vld [vmem:[%s165 + $0x268] sm:$0xff]
      %v251 = vld [vmem:[%s165 + $0x270] sm:$0xff]
      %v252 = vld [vmem:[%s165 + $0x278] sm:$0xff]
      %v253 = vld [vmem:[%s165 + $0x280] sm:$0xff]
      %v254 = vld [vmem:[%s165 + $0x288] sm:$0xff]
      %v255 = vld [vmem:[%s165 + $0x290] sm:$0xff]
      %v256 = vld [vmem:[%s165 + $0x298] sm:$0xff]
      %v257 = vld [vmem:[%s165 + $0x2a0] sm:$0xff]
      %v258 = vld [vmem:[%s165 + $0x2a8] sm:$0xff]
      %v259 = vld [vmem:[%s165 + $0x2b0] sm:$0xff]
      %v260 = vld [vmem:[%s165 + $0x2b8] sm:$0xff]
      %v261 = vld [vmem:[%s165 + $0x2c0] sm:$0xff]
      %v262 = vld [vmem:[%s165 + $0x2c8] sm:$0xff]
      %v263 = vld [vmem:[%s165 + $0x2d0] sm:$0xff]
      %v264 = vld [vmem:[%s165 + $0x2d8] sm:$0xff]
      %v265 = vld [vmem:[%s165 + $0x2e0] sm:$0xff]
      %v266 = vld [vmem:[%s165 + $0x2e8] sm:$0xff]
      %v267 = vld [vmem:[%s165 + $0x2f0] sm:$0xff]
      %v268 = vld [vmem:[%s165 + $0x2f8] sm:$0xff]
      %v269 = vld [vmem:[%s165 + $0x300] sm:$0xff]
      %v270 = vld [vmem:[%s165 + $0x308] sm:$0xff]
      %v271 = vld [vmem:[%s165 + $0x310] sm:$0xff]
      %v272 = vld [vmem:[%s165 + $0x318] sm:$0xff]
      %v273 = vld [vmem:[%s165 + $0x320] sm:$0xff]
      %v274 = vld [vmem:[%s165 + $0x328] sm:$0xff]
      %v275 = vld [vmem:[%s165 + $0x330] sm:$0xff]
      %v276 = vld [vmem:[%s165 + $0x338] sm:$0xff]
      %v277 = vld [vmem:[%s165 + $0x340] sm:$0xff]
      %v278 = vld [vmem:[%s165 + $0x348] sm:$0xff]
      %v279 = vld [vmem:[%s165 + $0x350] sm:$0xff]
      %v280 = vld [vmem:[%s165 + $0x358] sm:$0xff]
      %v281 = vld [vmem:[%s165 + $0x360] sm:$0xff]
      %v282 = vld [vmem:[%s165 + $0x368] sm:$0xff]
      %v283 = vld [vmem:[%s165 + $0x370] sm:$0xff]
      %v284 = vld [vmem:[%s165 + $0x378] sm:$0xff]
      %v285 = vld [vmem:[%s165 + $0x380] sm:$0xff]
      %v286 = vld [vmem:[%s165 + $0x388] sm:$0xff]
      %v287 = vld [vmem:[%s165 + $0x390] sm:$0xff]
      %v288 = vld [vmem:[%s165 + $0x398] sm:$0xff]
      %v289 = vld [vmem:[%s165 + $0x3a0] sm:$0xff]
      %v290 = vld [vmem:[%s165 + $0x3a8] sm:$0xff]
      %v291 = vld [vmem:[%s165 + $0x3b0] sm:$0xff]
      %v292 = vld [vmem:[%s165 + $0x3b8] sm:$0xff]
      %v293 = vld [vmem:[%s165 + $0x3c0] sm:$0xff]
      %v294 = vld [vmem:[%s165 + $0x3c8] sm:$0xff]
      %v295 = vld [vmem:[%s165 + $0x3d0] sm:$0xff]
      %v296 = vld [vmem:[%s165 + $0x3d8] sm:$0xff]
      %v297 = vld [vmem:[%s165 + $0x3e0] sm:$0xff]
      %v298 = vld [vmem:[%s165 + $0x3e8] sm:$0xff]
      %v299 = vld [vmem:[%s165 + $0x3f0] sm:$0xff]
      %v300 = vld [vmem:[%s165 + $0x3f8] sm:$0xff]
      %v301 = vld [vmem:[%s165 + $0x400] sm:$0xff]
      %v302 = vld [vmem:[%s165 + $0x408] sm:$0xff]
      %v303 = vld [vmem:[%s165 + $0x410] sm:$0xff]
      %v304 = vld [vmem:[%s165 + $0x418] sm:$0xff]
      %v305 = vld [vmem:[%s165 + $0x420] sm:$0xff]
      %v306 = vld [vmem:[%s165 + $0x428] sm:$0xff]
      %v307 = vld [vmem:[%s165 + $0x430] sm:$0xff]
      %v308 = vld [vmem:[%s165 + $0x438] sm:$0xff]
      %v309 = vld [vmem:[%s165 + $0x440] sm:$0xff]
      %v310 = vld [vmem:[%s165 + $0x448] sm:$0xff]
      %v311 = vld [vmem:[%s165 + $0x450] sm:$0xff]
      %v312 = vld [vmem:[%s165 + $0x458] sm:$0xff]
      %v313 = vld [vmem:[%s165 + $0x460] sm:$0xff]
      %v314 = vld [vmem:[%s165 + $0x468] sm:$0xff]
      %v315 = vld [vmem:[%s165 + $0x470] sm:$0xff]
      %v316 = vld [vmem:[%s165 + $0x478] sm:$0xff]
      %v317 = vld [vmem:[%s2] sm:$0xf]
      %319 = vset.pattern.permute.xlu0 0
      %320 = vperm.xlu0 %319, %v317
      %v321 = vpop.permute.xlu0 %320
      %v325 = vcombine.high %v171, %v171
      %vm327 = vcmask 261120
      %v328 = vsel %vm327, %v172, 0
      %330 = vmatprep.subr.mxu0 %v234
      %331 = vmatpush1.msra.mxu0 %v233
      %332 = vmatprep.subr.mxu0 %v230
      %333 = vmatpush1.msra.mxu0 %v229
      %334 = vmatprep.subr.mxu0 %v226
      %335 = vmatpush1.msra.mxu0 %v225
      %336 = vmatprep.subr.mxu0 %v222
      %337 = vmatpush1.msra.mxu0 %v221
      %338 = vmatprep.subr.mxu0 %v218
      %339 = vmatpush1.msra.mxu0 %v217
      %340 = vmatprep.subr.mxu0 %v214
      %341 = vmatpush1.msra.mxu0 %v213
      %342 = vmatprep.subr.mxu0 %v210
      %343 = vmatpush1.msra.mxu0 %v209
      %344 = vmatprep.subr.mxu0 %v206
      %345 = vmatpush1.msra.mxu0 %v205
      %346 = vmatprep.subr.mxu0 %v202
      %347 = vmatpush1.msra.mxu0 %v201
      %348 = vmatprep.subr.mxu0 %v198
      %349 = vmatpush1.msra.mxu0 %v197
      %350 = vmatprep.subr.mxu0 %v194
      %351 = vmatpush1.msra.mxu0 %v193
      %352 = vmatprep.subr.mxu0 %v190
      %353 = vmatpush1.msra.mxu0 %v189
      %354 = vmatprep.subr.mxu0 %v186
      %355 = vmatpush1.msra.mxu0 %v185
      %356 = vmatprep.subr.mxu0 %v182
      %357 = vmatpush1.msra.mxu0 %v181
      %358 = vmatprep.subr.mxu0 %v178
      %359 = vmatpush1.msra.mxu0 %v177
      %360 = vmatprep.subr.mxu0 %v174
      %361 = vmatpush1.msra.mxu0 %v173
      %362 = vmatprep.subr.mxu0 %v298
      %363 = vmatpush2.msra.mxu0 %v297
      %364 = vmatprep.subr.mxu0 %v294
      %365 = vmatpush2.msra.mxu0 %v293
      %366 = vmatprep.subr.mxu0 %v290
      %367 = vmatpush2.msra.mxu0 %v289
      %368 = vmatprep.subr.mxu0 %v286
      %369 = vmatpush2.msra.mxu0 %v285
      %370 = vmatprep.subr.mxu0 %v282
      %371 = vmatpush2.msra.mxu0 %v281
      %372 = vmatprep.subr.mxu0 %v278
      %373 = vmatpush2.msra.mxu0 %v277
      %374 = vmatprep.subr.mxu0 %v274
      %375 = vmatpush2.msra.mxu0 %v273
      %376 = vmatprep.subr.mxu0 %v270
      %377 = vmatpush2.msra.mxu0 %v269
      %378 = vmatprep.subr.mxu0 %v266
      %379 = vmatpush2.msra.mxu0 %v265
      %380 = vmatprep.subr.mxu0 %v262
      %381 = vmatpush2.msra.mxu0 %v261
      %382 = vmatprep.subr.mxu0 %v258
      %383 = vmatpush2.msra.mxu0 %v257
      %384 = vmatprep.subr.mxu0 %v254
      %385 = vmatpush2.msra.mxu0 %v253
      %386 = vmatprep.subr.mxu0 %v250
      %387 = vmatpush2.msra.mxu0 %v249
      %388 = vmatprep.subr.mxu0 %v246
      %389 = vmatpush2.msra.mxu0 %v245
      %390 = vmatprep.subr.mxu0 %v242
      %391 = vmatpush2.msra.mxu0 %v241
      %392 = vmatprep.subr.mxu0 %v238
      %393 = vmatpush2.msra.mxu0 %v237
      %394 = vmatprep.mubr.f32.mxu0 %v325
      %395 = vmatmul.mubr.f32.gmra.mxu0 %v171
      %v396 = vpop.f32.mrf.mxu0
      %v397 = vadd.f32 %v321, %v396
      %v398 = vpop.f32.mrf.mxu0
      %v399 = vadd.f32 %v321, %v398
      %400 = vdwg.mxu0
      %401 = vmatprep.subr.mxu0 0.0
      %402 = vmatpush1.msra.mxu0 0.0
      %403 = vmatprep.subr.mxu0 0.0
      %404 = vmatpush1.msra.mxu0 0.0
      %405 = vmatprep.subr.mxu0 0.0
      %406 = vmatpush1.msra.mxu0 0.0
      %407 = vmatprep.subr.mxu0 0.0
      %408 = vmatpush1.msra.mxu0 0.0
      %409 = vmatprep.subr.mxu0 0.0
      %410 = vmatpush1.msra.mxu0 0.0
      %411 = vmatprep.subr.mxu0 0.0
      %412 = vmatpush1.msra.mxu0 0.0
      %413 = vmatprep.subr.mxu0 0.0
      %414 = vmatpush1.msra.mxu0 0.0
      %415 = vmatprep.subr.mxu0 0.0
      %416 = vmatpush1.msra.mxu0 0.0
      %417 = vmatprep.subr.mxu0 0.0
      %418 = vmatpush1.msra.mxu0 0.0
      %419 = vmatprep.subr.mxu0 0.0
      %420 = vmatpush1.msra.mxu0 0.0
      %421 = vmatprep.subr.mxu0 0.0
      %422 = vmatpush1.msra.mxu0 0.0
      %423 = vmatprep.subr.mxu0 0.0
      %424 = vmatpush1.msra.mxu0 0.0
      %425 = vmatprep.subr.mxu0 %v314
      %426 = vmatpush1.msra.mxu0 %v313
      %427 = vmatprep.subr.mxu0 %v310
      %428 = vmatpush1.msra.mxu0 %v309
      %429 = vmatprep.subr.mxu0 %v306
      %430 = vmatpush1.msra.mxu0 %v305
      %431 = vmatprep.subr.mxu0 %v302
      %432 = vmatpush1.msra.mxu0 %v301
      %433 = vmatprep.subr.mxu0 0.0
      %434 = vmatpush2.msra.mxu0 0.0
      %435 = vmatprep.subr.mxu0 0.0
      %436 = vmatpush2.msra.mxu0 0.0
      %437 = vmatprep.subr.mxu0 0.0
      %438 = vmatpush2.msra.mxu0 0.0
      %439 = vmatprep.subr.mxu0 0.0
      %440 = vmatpush2.msra.mxu0 0.0
      %441 = vmatprep.subr.mxu0 0.0
      %442 = vmatpush2.msra.mxu0 0.0
      %443 = vmatprep.subr.mxu0 0.0
      %444 = vmatpush2.msra.mxu0 0.0
      %445 = vmatprep.subr.mxu0 0.0
      %446 = vmatpush2.msra.mxu0 0.0
      %447 = vmatprep.subr.mxu0 0.0
      %448 = vmatpush2.msra.mxu0 0.0
      %449 = vmatprep.subr.mxu0 0.0
      %450 = vmatpush2.msra.mxu0 0.0
      %451 = vmatprep.subr.mxu0 0.0
      %452 = vmatpush2.msra.mxu0 0.0
      %453 = vmatprep.subr.mxu0 0.0
      %454 = vmatpush2.msra.mxu0 0.0
      %455 = vmatprep.subr.mxu0 0.0
      %456 = vmatpush2.msra.mxu0 0.0
      %457 = vmatprep.subr.mxu0 0.0
      %458 = vmatpush2.msra.mxu0 0.0
      %459 = vmatprep.subr.mxu0 0.0
      %460 = vmatpush2.msra.mxu0 0.0
      %461 = vmatprep.subr.mxu0 0.0
      %462 = vmatpush2.msra.mxu0 0.0
      %463 = vmatprep.subr.mxu0 0.0
      %464 = vmatpush2.msra.mxu0 0.0
      %465 = vmatprep.mubr.f32.mxu0 0.0
      %466 = vmatmul.mubr.f32.gmra.mxu0 %v328
      %v467 = vpop.f32.mrf.mxu0
      %v468 = vadd.f32 %v397, %v467
      %v469 = vpop.f32.mrf.mxu0
      %v470 = vadd.f32 %v399, %v469
      %471 = vdwg.mxu0
      %472 = vmatprep.subr.mxu0 %v236
      %473 = vmatpush1.msra.mxu0 %v235
      %474 = vmatprep.subr.mxu0 %v232
      %475 = vmatpush1.msra.mxu0 %v231
      %476 = vmatprep.subr.mxu0 %v228
      %477 = vmatpush1.msra.mxu0 %v227
      %478 = vmatprep.subr.mxu0 %v224
      %479 = vmatpush1.msra.mxu0 %v223
      %480 = vmatprep.subr.mxu0 %v220
      %481 = vmatpush1.msra.mxu0 %v219
      %482 = vmatprep.subr.mxu0 %v216
      %483 = vmatpush1.msra.mxu0 %v215
      %484 = vmatprep.subr.mxu0 %v212
      %485 = vmatpush1.msra.mxu0 %v211
      %486 = vmatprep.subr.mxu0 %v208
      %487 = vmatpush1.msra.mxu0 %v207
      %488 = vmatprep.subr.mxu0 %v204
      %489 = vmatpush1.msra.mxu0 %v203
      %490 = vmatprep.subr.mxu0 %v200
      %491 = vmatpush1.msra.mxu0 %v199
      %492 = vmatprep.subr.mxu0 %v196
      %493 = vmatpush1.msra.mxu0 %v195
      %494 = vmatprep.subr.mxu0 %v192
      %495 = vmatpush1.msra.mxu0 %v191
      %496 = vmatprep.subr.mxu0 %v188
      %497 = vmatpush1.msra.mxu0 %v187
      %498 = vmatprep.subr.mxu0 %v184
      %499 = vmatpush1.msra.mxu0 %v183
      %500 = vmatprep.subr.mxu0 %v180
      %501 = vmatpush1.msra.mxu0 %v179
      %502 = vmatprep.subr.mxu0 %v176
      %503 = vmatpush1.msra.mxu0 %v175
      %504 = vmatprep.subr.mxu0 %v300
      %505 = vmatpush2.msra.mxu0 %v299
      %506 = vmatprep.subr.mxu0 %v296
      %507 = vmatpush2.msra.mxu0 %v295
      %508 = vmatprep.subr.mxu0 %v292
      %509 = vmatpush2.msra.mxu0 %v291
      %510 = vmatprep.subr.mxu0 %v288
      %511 = vmatpush2.msra.mxu0 %v287
      %512 = vmatprep.subr.mxu0 %v284
      %513 = vmatpush2.msra.mxu0 %v283
      %514 = vmatprep.subr.mxu0 %v280
      %515 = vmatpush2.msra.mxu0 %v279
      %516 = vmatprep.subr.mxu0 %v276
      %517 = vmatpush2.msra.mxu0 %v275
      %518 = vmatprep.subr.mxu0 %v272
      %519 = vmatpush2.msra.mxu0 %v271
      %520 = vmatprep.subr.mxu0 %v268
      %521 = vmatpush2.msra.mxu0 %v267
      %522 = vmatprep.subr.mxu0 %v264
      %523 = vmatpush2.msra.mxu0 %v263
      %524 = vmatprep.subr.mxu0 %v260
      %525 = vmatpush2.msra.mxu0 %v259
      %526 = vmatprep.subr.mxu0 %v256
      %527 = vmatpush2.msra.mxu0 %v255
      %528 = vmatprep.subr.mxu0 %v252
      %529 = vmatpush2.msra.mxu0 %v251
      %530 = vmatprep.subr.mxu0 %v248
      %531 = vmatpush2.msra.mxu0 %v247
      %532 = vmatprep.subr.mxu0 %v244
      %533 = vmatpush2.msra.mxu0 %v243
      %534 = vmatprep.subr.mxu0 %v240
      %535 = vmatpush2.msra.mxu0 %v239
      %536 = vmatprep.mubr.f32.mxu0 %v325
      %537 = vmatmul.mubr.f32.gmra.mxu0 %v171
      %v538 = vpop.f32.mrf.mxu0
      %v539 = vadd.f32 %v321, %v538
      %v540 = vpop.f32.mrf.mxu0
      %v541 = vadd.f32 %v321, %v540
      %542 = vdwg.mxu0
      %543 = vmatprep.subr.mxu0 0.0
      %544 = vmatpush1.msra.mxu0 0.0
      %545 = vmatprep.subr.mxu0 0.0
      %546 = vmatpush1.msra.mxu0 0.0
      %547 = vmatprep.subr.mxu0 0.0
      %548 = vmatpush1.msra.mxu0 0.0
      %549 = vmatprep.subr.mxu0 0.0
      %550 = vmatpush1.msra.mxu0 0.0
      %551 = vmatprep.subr.mxu0 0.0
      %552 = vmatpush1.msra.mxu0 0.0
      %553 = vmatprep.subr.mxu0 0.0
      %554 = vmatpush1.msra.mxu0 0.0
      %555 = vmatprep.subr.mxu0 0.0
      %556 = vmatpush1.msra.mxu0 0.0
      %557 = vmatprep.subr.mxu0 0.0
      %558 = vmatpush1.msra.mxu0 0.0
      %559 = vmatprep.subr.mxu0 0.0
      %560 = vmatpush1.msra.mxu0 0.0
      %561 = vmatprep.subr.mxu0 0.0
      %562 = vmatpush1.msra.mxu0 0.0
      %563 = vmatprep.subr.mxu0 0.0
      %564 = vmatpush1.msra.mxu0 0.0
      %565 = vmatprep.subr.mxu0 0.0
      %566 = vmatpush1.msra.mxu0 0.0
      %567 = vmatprep.subr.mxu0 %v316
      %568 = vmatpush1.msra.mxu0 %v315
      %569 = vmatprep.subr.mxu0 %v312
      %570 = vmatpush1.msra.mxu0 %v311
      %571 = vmatprep.subr.mxu0 %v308
      %572 = vmatpush1.msra.mxu0 %v307
      %573 = vmatprep.subr.mxu0 %v304
      %574 = vmatpush1.msra.mxu0 %v303
      %575 = vmatprep.subr.mxu0 0.0
      %576 = vmatpush2.msra.mxu0 0.0
      %577 = vmatprep.subr.mxu0 0.0
      %578 = vmatpush2.msra.mxu0 0.0
      %579 = vmatprep.subr.mxu0 0.0
      %580 = vmatpush2.msra.mxu0 0.0
      %581 = vmatprep.subr.mxu0 0.0
      %582 = vmatpush2.msra.mxu0 0.0
      %583 = vmatprep.subr.mxu0 0.0
      %584 = vmatpush2.msra.mxu0 0.0
      %585 = vmatprep.subr.mxu0 0.0
      %586 = vmatpush2.msra.mxu0 0.0
      %587 = vmatprep.subr.mxu0 0.0
      %588 = vmatpush2.msra.mxu0 0.0
      %589 = vmatprep.subr.mxu0 0.0
      %590 = vmatpush2.msra.mxu0 0.0
      %591 = vmatprep.subr.mxu0 0.0
      %592 = vmatpush2.msra.mxu0 0.0
      %593 = vmatprep.subr.mxu0 0.0
      %594 = vmatpush2.msra.mxu0 0.0
      %595 = vmatprep.subr.mxu0 0.0
      %596 = vmatpush2.msra.mxu0 0.0
      %597 = vmatprep.subr.mxu0 0.0
      %598 = vmatpush2.msra.mxu0 0.0
      %599 = vmatprep.subr.mxu0 0.0
      %600 = vmatpush2.msra.mxu0 0.0
      %601 = vmatprep.subr.mxu0 0.0
      %602 = vmatpush2.msra.mxu0 0.0
      %603 = vmatprep.subr.mxu0 0.0
      %604 = vmatpush2.msra.mxu0 0.0
      %605 = vmatprep.subr.mxu0 0.0
      %606 = vmatpush2.msra.mxu0 0.0
      %607 = vmatprep.mubr.f32.mxu0 0.0
      %608 = vmatmul.mubr.f32.gmra.mxu0 %v328
      %v609 = vpop.f32.mrf.mxu0
      %v610 = vadd.f32 %v539, %v609
      %v611 = vpop.f32.mrf.mxu0
      %v612 = vadd.f32 %v541, %v611
      %613 = vdwg.mxu0
      %v614 = vmax.f32 %v468, 0.0
      %v615 = vmax.f32 %v470, 0.0
      %v616 = vmax.f32 %v610, 0.0
      %v617 = vmax.f32 %v612, 0.0
      %v622 = vcombine.low %v614, %v615
      %v623 = vcombine.low %v616, %v617
      %626 = vst [vmem:[%s170] sm:$0xff] %v622
      %vm627 = vcmask 1043456
      %vm628 = vcmask 465924
      %vm629 = vmor %vm628, %vm627
      %630 = vst.msk [vmem:[%s170 + $0x8] sm:$0xff] %vm629, %v623
      %p631 = scmp.lt.s32.totalorder %s14, 1
      %s632 = scalar_select %p631, %s14, 1
      %s633 = smul.addr %s632, 4
      %s634 = smul.addr %s633, 4
      %s635 = scalar_lea.vmem %s3, %s634
      // Predicated region
      $region33: #{ev_imgs_forward.4} parent=31 // pred_check
        %p636 = pneg %p100
      $region34: #{ev_imgs_forward.4} parent=31 // pred_check_branch
        %638 = sbr.rel (%p636) target = $region36
      $region35: #{ev_imgs_forward.4} parent=31 // pred_region
        _
      $region36: #{ev_imgs_forward.4} parent=31 // pred_fallthru
        _
    $region32: #{ev_imgs_forward.4} parent=5 // pred_fallthru
      _
    %p639 = scmp.le.s32.totalorder 2, %s9
    // Predicated region
    $region37: #{ev_imgs_forward.4} parent=5 // pred_check
      %p640 = pneg %p639
    $region38: #{ev_imgs_forward.4} parent=5 // pred_check_branch
      %642 = sbr.rel (%p640) target = $region40
    $region39: #{ev_imgs_forward.4} parent=5 // pred_region
      %s643 = ssub.s32 %s9, 2
      // Predicated region
      $region41: #{ev_imgs_forward.4} parent=39 // pred_check
        %p644 = pneg %p106
      $region42: #{ev_imgs_forward.4} parent=39 // pred_check_branch
        %646 = sbr.rel (%p644) target = $region44
      $region43: #{ev_imgs_forward.4} parent=39 // pred_region
        %p647 = scmp.lt.s32.totalorder %s15, 1
        %s648 = scalar_select %p647, %s15, 1
        %s649 = smul.addr %s648, 4
        %s650 = smul.addr %s649, 4
        %s651 = scalar_lea.vmem %s3, %s650
      $region44: #{ev_imgs_forward.4} parent=39 // pred_fallthru
        _
    $region40: #{ev_imgs_forward.4} parent=5 // pred_fallthru
      _
  $region6: #{ev_imgs_forward.4} parent=0 // loop_footer
    %s13 = sadd.s32 1, %s9
  $region7: #{ev_imgs_forward.4} parent=0 // loop_footer_branch
    %8 = sbr.rel target = $region3
  $region8: #{ev_imgs_forward.4} parent=0 // loop_exit
    _

// kernel: ev_imgs_forward.5
$region0: #{ev_imgs_forward.5}
  #allocation0 [shape = 'u32[]', space=smem, size = 0x4, offset = 0x4, fixed_abs, tag = 'smem constant byte address 0x4 - core index']
  #allocation1 [shape = 'u32[144,128]{1,0:T(1,128)}', space=vmem, size = 0x12000, scoped, tag = 'internal scratch']
  #allocation2 [shape = 'f32[1,1]{1,0:T(1,128)S(1)}', space=vmem, size = 0x200, scoped, tag = 'scoped memory for ev_imgs_forward.5']
  %s0 = inlined_call_operand.vmem [shape: f32[2,144,36], index: 0, kind: input, shape index: {}]
  %s1 = inlined_call_operand.vmem [shape: f32[2,144], index: 1, kind: input, shape index: {}]
  %s2 = inlined_call_operand.vmem [shape: f32[2,1], index: 2, kind: input, shape index: {}]
  %s3 = inlined_call_operand.vmem [shape: f32[2,36], index: 3, kind: input, shape index: {}]
  %s4 = inlined_call_operand.<no memory space> [shape: f32[1,1], index: 4, kind: input, shape index: {}]
  %s5 = inlined_call_operand.vmem [shape: f32[2,1,1], index: 5, kind: output, shape index: {}]
  %s6 = sld [smem:[#allocation0]]
  $region53: #{ev_imgs_forward.5} parent=0
    _
  %s8 = ssub.s32 1, %s6
  %s9 = scalar_select 0, %s8, %s6
  %v10 = vstv %s4
  %11 = vst [vmem:[#allocation2] sm:$0x1] %v10
  loop: start=0, step=1, limit=4
  $region2: #{ev_imgs_forward.5} parent=0 // loop_pre_header
    _
  $region3: #{ev_imgs_forward.5} parent=0 // loop_header
    %s13 = sphi 0, %s17
    %p14 = scmp.ge.s32.totalorder %s13, 4
    %s23 = sphi 0, %s25
    %s26 = sphi 0, %s23
    %s27 = sphi 0, %s26
    %s43 = sphi 0, %s27
    %s47 = sphi 0, %s47
    %s49 = sphi 0, %s47
    %s50 = sphi 0, %s49
    %s64 = sphi 0, %s50
    %s68 = sphi 0, %s68
    %s70 = sphi 0, %s68
    %s71 = sphi 0, %s70
    %s85 = sphi 0, %s71
    %s89 = sphi 0, %s89
    %s91 = sphi 0, %s89
    %s92 = sphi 0, %s91
    %s106 = sphi 0, %s92
    %s110 = sphi 0, %s110
    %s112 = sphi 0, %s110
    %s113 = sphi 0, %s112
    %s127 = sphi 0, %s113
    %s133 = sphi 0, %s135
    %s136 = sphi 0, %s133
    %s137 = sphi 0, %s136
    %s153 = sphi 0, %s137
  $region4: #{ev_imgs_forward.5} parent=0 // loop_header_branch
    %16 = sbr.rel (%p14) target = $region8
  $region5: #{ev_imgs_forward.5} parent=0 // loop_body
    %s18 = ssub.s32 %s13, 1
    %s19 = ssub.s32 %s13, 2
    %s20 = sadd.s32 %s13, 1
    %s21 = ssub.s32 %s13, %s20
    %p22 = scmp.eq.s32.totalorder %s21, 0
    %s24 = sadd.s32 %s23, 1
    %s25 = scalar_select %p22, %s23, %s24
    %p28 = pneg %p22
    %p29 = scmp.eq.s32.totalorder %s13, 1
    %p30 = por %p28, %p29
    %p31 = scmp.ne.s32.totalorder %s23, %s26
    %p32 = scmp.eq.s32.totalorder %s13, 0
    %p33 = por %p31, %p32
    %p34 = scmp.ne.s32.totalorder %s23, %s26
    %p35 = scmp.eq.s32.totalorder %s18, 1
    %p36 = por %p34, %p35
    %p37 = scmp.ne.s32.totalorder %s26, %s27
    %p38 = scmp.eq.s32.totalorder %s18, 0
    %p39 = por %p37, %p38
    %p40 = scmp.ne.s32.totalorder %s26, %s27
    %p41 = scmp.eq.s32.totalorder %s19, 1
    %p42 = por %p40, %p41
    %p44 = scmp.ne.s32.totalorder %s27, %s43
    %p45 = scmp.eq.s32.totalorder %s19, 0
    %p46 = por %p44, %p45
    %s48 = sadd.s32 %s47, 1
    %p51 = scmp.eq.s32.totalorder %s13, 1
    %p52 = scmp.ne.s32.totalorder %s47, %s49
    %p53 = scmp.eq.s32.totalorder %s13, 0
    %p54 = por %p52, %p53
    %p55 = scmp.ne.s32.totalorder %s47, %s49
    %p56 = scmp.eq.s32.totalorder %s18, 1
    %p57 = por %p55, %p56
    %p58 = scmp.ne.s32.totalorder %s49, %s50
    %p59 = scmp.eq.s32.totalorder %s18, 0
    %p60 = por %p58, %p59
    %p61 = scmp.ne.s32.totalorder %s49, %s50
    %p62 = scmp.eq.s32.totalorder %s19, 1
    %p63 = por %p61, %p62
    %p65 = scmp.ne.s32.totalorder %s50, %s64
    %p66 = scmp.eq.s32.totalorder %s19, 0
    %p67 = por %p65, %p66
    %s69 = sadd.s32 %s68, 1
    %p72 = scmp.eq.s32.totalorder %s13, 1
    %p73 = scmp.ne.s32.totalorder %s68, %s70
    %p74 = scmp.eq.s32.totalorder %s13, 0
    %p75 = por %p73, %p74
    %p76 = scmp.ne.s32.totalorder %s68, %s70
    %p77 = scmp.eq.s32.totalorder %s18, 1
    %p78 = por %p76, %p77
    %p79 = scmp.ne.s32.totalorder %s70, %s71
    %p80 = scmp.eq.s32.totalorder %s18, 0
    %p81 = por %p79, %p80
    %p82 = scmp.ne.s32.totalorder %s70, %s71
    %p83 = scmp.eq.s32.totalorder %s19, 1
    %p84 = por %p82, %p83
    %p86 = scmp.ne.s32.totalorder %s71, %s85
    %p87 = scmp.eq.s32.totalorder %s19, 0
    %p88 = por %p86, %p87
    %s90 = sadd.s32 %s89, 1
    %p93 = scmp.eq.s32.totalorder %s13, 1
    %p94 = scmp.ne.s32.totalorder %s89, %s91
    %p95 = scmp.eq.s32.totalorder %s13, 0
    %p96 = por %p94, %p95
    %p97 = scmp.ne.s32.totalorder %s89, %s91
    %p98 = scmp.eq.s32.totalorder %s18, 1
    %p99 = por %p97, %p98
    %p100 = scmp.ne.s32.totalorder %s91, %s92
    %p101 = scmp.eq.s32.totalorder %s18, 0
    %p102 = por %p100, %p101
    %p103 = scmp.ne.s32.totalorder %s91, %s92
    %p104 = scmp.eq.s32.totalorder %s19, 1
    %p105 = por %p103, %p104
    %p107 = scmp.ne.s32.totalorder %s92, %s106
    %p108 = scmp.eq.s32.totalorder %s19, 0
    %p109 = por %p107, %p108
    %s111 = sadd.s32 %s110, 1
    %p114 = scmp.eq.s32.totalorder %s13, 1
    %p115 = scmp.ne.s32.totalorder %s110, %s112
    %p116 = scmp.eq.s32.totalorder %s13, 0
    %p117 = por %p115, %p116
    %p118 = scmp.ne.s32.totalorder %s110, %s112
    %p119 = scmp.eq.s32.totalorder %s18, 1
    %p120 = por %p118, %p119
    %p121 = scmp.ne.s32.totalorder %s112, %s113
    %p122 = scmp.eq.s32.totalorder %s18, 0
    %p123 = por %p121, %p122
    %p124 = scmp.ne.s32.totalorder %s112, %s113
    %p125 = scmp.eq.s32.totalorder %s19, 1
    %p126 = por %p124, %p125
    %p128 = scmp.ne.s32.totalorder %s113, %s127
    %p129 = scmp.eq.s32.totalorder %s19, 0
    %p130 = por %p128, %p129
    %s131 = ssub.s32 %s13, %s20
    %p132 = scmp.eq.s32.totalorder %s131, 0
    %s134 = sadd.s32 %s133, 1
    %s135 = scalar_select %p132, %s133, %s134
    %p138 = pneg %p132
    %p139 = scmp.eq.s32.totalorder %s13, 1
    %p140 = por %p138, %p139
    %p141 = scmp.ne.s32.totalorder %s133, %s136
    %p142 = scmp.eq.s32.totalorder %s13, 0
    %p143 = por %p141, %p142
    %p144 = scmp.ne.s32.totalorder %s133, %s136
    %p145 = scmp.eq.s32.totalorder %s18, 1
    %p146 = por %p144, %p145
    %p147 = scmp.ne.s32.totalorder %s136, %s137
    %p148 = scmp.eq.s32.totalorder %s18, 0
    %p149 = por %p147, %p148
    %p150 = scmp.ne.s32.totalorder %s136, %s137
    %p151 = scmp.eq.s32.totalorder %s19, 1
    %p152 = por %p150, %p151
    %p154 = scmp.ne.s32.totalorder %s137, %s153
    %p155 = scmp.eq.s32.totalorder %s19, 0
    %p156 = por %p154, %p155
    %p157 = scmp.le.s32.totalorder 1, %s13
    %p158 = scmp.lt.s32.totalorder %s13, 3
    %p159 = pnand %p157, %p158
    %p160 = pneg %p159
    // Predicated region
    $region9: #{ev_imgs_forward.5} parent=5 // pred_check
      _
    $region10: #{ev_imgs_forward.5} parent=5 // pred_check_branch
      %162 = sbr.rel (%p159) target = $region12
    $region11: #{ev_imgs_forward.5} parent=5 // pred_region
      %s163 = ssub.s32 %s13, 1
      // Predicated region
      $region13: #{ev_imgs_forward.5} parent=11 // pred_check
        %p164 = pneg %p60
      $region14: #{ev_imgs_forward.5} parent=11 // pred_check_branch
        %166 = sbr.rel (%p164) target = $region16
      $region15: #{ev_imgs_forward.5} parent=11 // pred_region
        _
      $region16: #{ev_imgs_forward.5} parent=11 // pred_fallthru
        _
      // Predicated region
      $region17: #{ev_imgs_forward.5} parent=11 // pred_check
        %p167 = pneg %p81
      $region18: #{ev_imgs_forward.5} parent=11 // pred_check_branch
        %169 = sbr.rel (%p167) target = $region20
      $region19: #{ev_imgs_forward.5} parent=11 // pred_region
        _
      $region20: #{ev_imgs_forward.5} parent=11 // pred_fallthru
        _
      // Predicated region
      $region21: #{ev_imgs_forward.5} parent=11 // pred_check
        %p170 = pneg %p102
      $region22: #{ev_imgs_forward.5} parent=11 // pred_check_branch
        %172 = sbr.rel (%p170) target = $region24
      $region23: #{ev_imgs_forward.5} parent=11 // pred_region
        _
      $region24: #{ev_imgs_forward.5} parent=11 // pred_fallthru
        _
      // Predicated region
      $region25: #{ev_imgs_forward.5} parent=11 // pred_check
        %p173 = pneg %p123
      $region26: #{ev_imgs_forward.5} parent=11 // pred_check_branch
        %175 = sbr.rel (%p173) target = $region28
      $region27: #{ev_imgs_forward.5} parent=11 // pred_region
        _
      $region28: #{ev_imgs_forward.5} parent=11 // pred_fallthru
        _
    $region12: #{ev_imgs_forward.5} parent=5 // pred_fallthru
      _
    %p176 = scmp.lt.s32.totalorder %s13, 2
    // Predicated region
    $region29: #{ev_imgs_forward.5} parent=5 // pred_check
      %p177 = pneg %p176
    $region30: #{ev_imgs_forward.5} parent=5 // pred_check_branch
      %179 = sbr.rel (%p177) target = $region32
    $region31: #{ev_imgs_forward.5} parent=5 // pred_region
      // Predicated region
      $region33: #{ev_imgs_forward.5} parent=31 // pred_check
        %p180 = pneg %p33
      $region34: #{ev_imgs_forward.5} parent=31 // pred_check_branch
        %182 = sbr.rel (%p180) target = $region36
      $region35: #{ev_imgs_forward.5} parent=31 // pred_region
        %p183 = scmp.lt.s32.totalorder %s13, 1
        %s184 = scalar_select %p183, %s13, 1
        %s185 = smul.addr %s184, 18
        %s186 = smul.addr %s185, 8
        %s187 = scalar_lea.vmem %s0, %s186
      $region36: #{ev_imgs_forward.5} parent=31 // pred_fallthru
        _
    $region32: #{ev_imgs_forward.5} parent=5 // pred_fallthru
      _
    %p188 = scmp.le.s32.totalorder 1, %s13
    %p189 = scmp.lt.s32.totalorder %s13, 3
    %p190 = pnand %p188, %p189
    %p191 = pneg %p190
    // Predicated region
    $region37: #{ev_imgs_forward.5} parent=5 // pred_check
      _
    $region38: #{ev_imgs_forward.5} parent=5 // pred_check_branch
      %193 = sbr.rel (%p190) target = $region40
    $region39: #{ev_imgs_forward.5} parent=5 // pred_region
      %s194 = ssub.s32 %s13, 1
      %p195 = scmp.lt.s32.totalorder %s18, 1
      %s196 = scalar_select %p195, %s18, 1
      %s197 = smul.addr %s196, 18
      %s198 = smul.addr %s197, 8
      %s199 = scalar_lea.vmem %s0, %s198
      %p200 = pneg %p39
      %p201 = pneg %p36
      %p202 = pneg %p60
      %p203 = pneg %p57
      %p204 = pneg %p81
      %p205 = pneg %p78
      %p206 = pneg %p102
      %p207 = pneg %p99
      %p208 = pneg %p123
      %p209 = pneg %p120
      %p210 = pneg %p149
      %p211 = pneg %p146
      %p212 = scmp.lt.s32.totalorder %s18, 1
      %s213 = scalar_select %p212, %s18, 1
      %s214 = scalar_lea.vmem %s5, %s213
      %p215 = scmp.lt.s32.totalorder %s18, 1
      %s216 = scalar_select %p215, %s18, 1
      %s217 = smul.addr %s216, 18
      %s218 = smul.addr %s217, 8
      %s219 = scalar_lea.vmem %s0, %s218
      %p220 = scmp.lt.s32.totalorder %s18, 1
      %s221 = scalar_select %p220, %s18, 1
      %s222 = scalar_lea.vmem %s5, %s221
      %v223 = vld [vmem:[%s1] sm:$0xf]
      %v224 = vld [vmem:[%s219] sm:$0xff]
      %v225 = vld [vmem:[%s219 + $0x8] sm:$0xff]
      %v226 = vld [vmem:[%s219 + $0x10] sm:$0xff]
      %v227 = vld [vmem:[%s219 + $0x18] sm:$0xff]
      %v228 = vld [vmem:[%s219 + $0x20] sm:$0xff]
      %v229 = vld [vmem:[%s219 + $0x28] sm:$0xff]
      %v230 = vld [vmem:[%s219 + $0x30] sm:$0xff]
      %v231 = vld [vmem:[%s219 + $0x38] sm:$0xff]
      %v232 = vld [vmem:[%s219 + $0x40] sm:$0xff]
      %v233 = vld [vmem:[%s219 + $0x48] sm:$0xff]
      %v234 = vld [vmem:[%s219 + $0x50] sm:$0xff]
      %v235 = vld [vmem:[%s219 + $0x58] sm:$0xff]
      %v236 = vld [vmem:[%s219 + $0x60] sm:$0xff]
      %v237 = vld [vmem:[%s219 + $0x68] sm:$0xff]
      %v238 = vld [vmem:[%s219 + $0x70] sm:$0xff]
      %v239 = vld [vmem:[%s219 + $0x78] sm:$0xff]
      %v240 = vld [vmem:[%s219 + $0x80] sm:$0xff]
      %v241 = vld [vmem:[%s219 + $0x88] sm:$0xff]
      %v242 = vld [vmem:[%s2] sm:$0x3]
      %244 = vset.pattern.permute.xlu0 0
      %245 = vperm.xlu0 %244, %v242
      %v246 = vpop.permute.xlu0 %245
      %v250 = vunpack.c.l.s4 1983009808
      %v251 = vunpack.c.0.s8 %v250
      %v252 = vlaneseq
      %v253 = vshrl.u32 %v252, 7
      %v254 = vsub.s32 %v251, %v253
      %v255 = vrot.slane %v223, %v254
      %v256 = vcombine.high %v255, %v255
      %vm258 = vcmask 130048
      %v259 = vsel %vm258, %v256, 0
      %261 = vmatprep.subr.mxu0 0.0
      %262 = vmatpush1.msra.mxu0 %v239
      %263 = vmatprep.subr.mxu0 0.0
      %264 = vmatpush1.msra.mxu0 %v238
      %265 = vmatprep.subr.mxu0 0.0
      %266 = vmatpush1.msra.mxu0 %v237
      %267 = vmatprep.subr.mxu0 0.0
      %268 = vmatpush1.msra.mxu0 %v236
      %269 = vmatprep.subr.mxu0 0.0
      %270 = vmatpush1.msra.mxu0 %v235
      %271 = vmatprep.subr.mxu0 0.0
      %272 = vmatpush1.msra.mxu0 %v234
      %273 = vmatprep.subr.mxu0 0.0
      %274 = vmatpush1.msra.mxu0 %v233
      %275 = vmatprep.subr.mxu0 0.0
      %276 = vmatpush1.msra.mxu0 %v232
      %277 = vmatprep.subr.mxu0 0.0
      %278 = vmatpush1.msra.mxu0 %v231
      %279 = vmatprep.subr.mxu0 0.0
      %280 = vmatpush1.msra.mxu0 %v230
      %281 = vmatprep.subr.mxu0 0.0
      %282 = vmatpush1.msra.mxu0 %v229
      %283 = vmatprep.subr.mxu0 0.0
      %284 = vmatpush1.msra.mxu0 %v228
      %285 = vmatprep.subr.mxu0 0.0
      %286 = vmatpush1.msra.mxu0 %v227
      %287 = vmatprep.subr.mxu0 0.0
      %288 = vmatpush1.msra.mxu0 %v226
      %289 = vmatprep.subr.mxu0 0.0
      %290 = vmatpush1.msra.mxu0 %v225
      %291 = vmatprep.subr.mxu0 0.0
      %292 = vmatpush1.msra.mxu0 %v224
      %293 = vmatprep.subr.mxu0 0.0
      %294 = vmatpush2.msra.mxu0 0.0
      %295 = vmatprep.subr.mxu0 0.0
      %296 = vmatpush2.msra.mxu0 0.0
      %297 = vmatprep.subr.mxu0 0.0
      %298 = vmatpush2.msra.mxu0 0.0
      %299 = vmatprep.subr.mxu0 0.0
      %300 = vmatpush2.msra.mxu0 0.0
      %301 = vmatprep.subr.mxu0 0.0
      %302 = vmatpush2.msra.mxu0 0.0
      %303 = vmatprep.subr.mxu0 0.0
      %304 = vmatpush2.msra.mxu0 0.0
      %305 = vmatprep.subr.mxu0 0.0
      %306 = vmatpush2.msra.mxu0 0.0
      %307 = vmatprep.subr.mxu0 0.0
      %308 = vmatpush2.msra.mxu0 0.0
      %309 = vmatprep.subr.mxu0 0.0
      %310 = vmatpush2.msra.mxu0 0.0
      %311 = vmatprep.subr.mxu0 0.0
      %312 = vmatpush2.msra.mxu0 0.0
      %313 = vmatprep.subr.mxu0 0.0
      %314 = vmatpush2.msra.mxu0 0.0
      %315 = vmatprep.subr.mxu0 0.0
      %316 = vmatpush2.msra.mxu0 0.0
      %317 = vmatprep.subr.mxu0 0.0
      %318 = vmatpush2.msra.mxu0 0.0
      %319 = vmatprep.subr.mxu0 0.0
      %320 = vmatpush2.msra.mxu0 0.0
      %321 = vmatprep.subr.mxu0 0.0
      %322 = vmatpush2.msra.mxu0 %v241
      %323 = vmatprep.subr.mxu0 0.0
      %324 = vmatpush2.msra.mxu0 %v240
      %325 = vmatprep.mubr.f32.mxu0 %v259
      %326 = vmatmul.mubr.f32.gmra.mxu0 %v255
      %v327 = vpop.f32.mrf.mxu0
      %v328 = vadd.f32 %v246, %v327
      %v329 = vpop.f32.mrf.mxu0
      %330 = vdwg.mxu0
      %v331 = vmax.f32 %v328, 0.0
      %v332 = vld [vmem:[%s3] sm:$0x3]
      %v333 = vmul.f32 %v332, %v331
      %vm334 = vcmask 287744
      %v335 = vsel %vm334, %v333, 0.0
      %336 = vadd.xlane.f32.xlu0 %v335
      %v337 = vpop.xlane.xlu0 %336
      %v338 = vrot.slane %v337, 4
      %v339 = vadd.f32 %v337, %v338
      %v340 = vrot.slane %v339, 2
      %v341 = vadd.f32 %v339, %v340
      %v342 = vrot.slane %v341, 1
      %v343 = vadd.f32 %v341, %v342
      %s344 = vtos %v343
      %v345 = vstv %s344
      %v346 = vld [vmem:[#allocation2] sm:$0x1]
      %v347 = vadd.f32 %v345, %v346
      %v348 = vxor.u32 %v347, 2147483648
      %v349 = vmul.f32 %v348, 1.442695
      %v350 = vpow.pop %v349
      %v351 = vadd.f32 %v350, 1.0
      %v352 = vrcp.pop %v351
      %v353 = vmul.f32 1.0, %v352
      %v354 = vmul.f32 %v353, 400000.0
      %vm355 = vcmask 0
      %356 = vst.msk [vmem:[%s222] sm:$0x1] %vm355, %v354
      %p357 = scmp.lt.s32.totalorder %s18, 1
      %s358 = scalar_select %p357, %s18, 1
      %s359 = scalar_lea.vmem %s5, %s358
      // Predicated region
      $region41: #{ev_imgs_forward.5} parent=39 // pred_check
        %p360 = pneg %p146
      $region42: #{ev_imgs_forward.5} parent=39 // pred_check_branch
        %362 = sbr.rel (%p360) target = $region44
      $region43: #{ev_imgs_forward.5} parent=39 // pred_region
        _
      $region44: #{ev_imgs_forward.5} parent=39 // pred_fallthru
        _
    $region40: #{ev_imgs_forward.5} parent=5 // pred_fallthru
      _
    %p363 = scmp.le.s32.totalorder 2, %s13
    // Predicated region
    $region45: #{ev_imgs_forward.5} parent=5 // pred_check
      %p364 = pneg %p363
    $region46: #{ev_imgs_forward.5} parent=5 // pred_check_branch
      %366 = sbr.rel (%p364) target = $region48
    $region47: #{ev_imgs_forward.5} parent=5 // pred_region
      %s367 = ssub.s32 %s13, 2
      // Predicated region
      $region49: #{ev_imgs_forward.5} parent=47 // pred_check
        %p368 = pneg %p152
      $region50: #{ev_imgs_forward.5} parent=47 // pred_check_branch
        %370 = sbr.rel (%p368) target = $region52
      $region51: #{ev_imgs_forward.5} parent=47 // pred_region
        %p371 = scmp.lt.s32.totalorder %s19, 1
        %s372 = scalar_select %p371, %s19, 1
        %s373 = scalar_lea.vmem %s5, %s372
      $region52: #{ev_imgs_forward.5} parent=47 // pred_fallthru
        _
    $region48: #{ev_imgs_forward.5} parent=5 // pred_fallthru
      _
  $region6: #{ev_imgs_forward.5} parent=0 // loop_footer
    %s17 = sadd.s32 1, %s13
  $region7: #{ev_imgs_forward.5} parent=0 // loop_footer_branch
    %12 = sbr.rel target = $region3
  $region8: #{ev_imgs_forward.5} parent=0 // loop_exit
    _

</llo_original>
